<compile_context>
chip_gen: v5e
topology: v5e:2x2
jax: 0.10.0
libtpu: 0.0.40
codegen_flags: <defaults>
</compile_context>

<pallas_src>
import functools
import math

import jax
import jax.numpy as jnp
from jax.experimental import pallas as pl
from jax.experimental.pallas import tpu as pltpu


# ----------------------------------------------------------------------------
# In-kernel helpers (pure values, static shapes)
# ----------------------------------------------------------------------------
def _silu(x):
    return x * jax.nn.sigmoid(x)


def _group_norm(x, gamma, beta, mask, *, num_groups, count, eps):
    """One-pass masked GroupNorm on the padded-flat (C, L) layout (single sample).

    Stats are accumulated in f32 (sum and sum-of-squares); only interior lanes
    (mask == 1) contribute. Non-interior output lanes are garbage and must be
    re-masked by the caller before any convolution.
    """
    c = x.shape[0]
    cg = c // num_groups
    inv_count = 1.0 / count
    outs = []
    for g in range(num_groups):
        xg = x[g * cg:(g + 1) * cg, :]                                    # (cg, L)
        xm = xg * mask
        s1 = jnp.sum(jnp.sum(xm, axis=1, keepdims=True),
                     axis=0, keepdims=True) * inv_count                   # mean (1,1)
        s2 = jnp.sum(jnp.sum(xm * xg, axis=1, keepdims=True),
                     axis=0, keepdims=True) * inv_count                   # E[x^2] (1,1)
        var = s2 - s1 * s1
        inv = jax.lax.rsqrt(var + eps)
        outs.append((xg - s1) * inv)
    y = outs[0] if num_groups == 1 else jnp.concatenate(outs, axis=0)
    return y * gamma + beta


def _conv3x3(x, w9, b, *, out_len, offsets):
    """'Same' 3x3 conv on the padded-flat layout.

    One (9*Cout, Cin) x (Cin, L_in) matmul (single MXU push chain), then the 9
    tap-row blocks are combined with lane-shifted adds. Sublane row slices are
    Cout-aligned (free); lane shifts are cheap XLU moves.
    x:  (Cin, L_in) with exact zeros at padding positions.
    w9: (9*Cout, Cin); rows [o*Cout:(o+1)*Cout] hold W[:, :, kh, kw], o = kh*3+kw.
    """
    cout = b.shape[0]
    taps = jax.lax.dot_general(w9, x, (((1,), (0,)), ((), ())),
                               preferred_element_type=jnp.float32)        # (9*Cout, L_in)
    acc = None
    for idx, off in enumerate(offsets):
        blk = taps[idx * cout:(idx + 1) * cout, off:off + out_len]
        acc = blk if acc is None else acc + blk
    return acc + b


# ----------------------------------------------------------------------------
# The fused per-sample kernel body
# ----------------------------------------------------------------------------
def _unet_block_kernel(*refs, num_heads, g_in, g_out, hw, eps, skip_scale,
                       offsets, attn_dtype):
    (x_ref, emb_ref, m0_ref, m1_ref, m2_ref,
     g0_ref, b0_ref, w0_ref, c0_ref,
     wa_ref, ba_ref,
     g1_ref, b1_ref, w1_ref, c1_ref,
     wsk_ref, bsk_ref) = refs[:17]
    o_ref = refs[-1]

    x0 = x_ref[...]                      # (Cin, L0) zero-padded flat image + margins
    mask0 = m0_ref[...]                  # (1, L0) interior-pixel mask
    mask1 = m1_ref[...]                  # (1, L1)
    mask2 = m2_ref[...]                  # (1, L2)
    cin, l0 = x0.shape
    l1 = mask1.shape[1]
    l2 = mask2.shape[1]
    span = l0 - l1                       # lanes consumed by one 3x3 conv (38 for W=16)

    # ---- h = conv0(silu(norm0(x))) ------------------------------------------
    h = _group_norm(x0, g0_ref[...], b0_ref[...], mask0,
                    num_groups=g_in, count=float(cin // g_in * hw), eps=eps)
    h = _silu(h) * mask0
    h = _conv3x3(h, w0_ref[...], c0_ref[...], out_len=l1, offsets=offsets)   # (Cout, L1)
    cout = h.shape[0]

    # ---- scale, shift = chunk(affine(emb), 2)  (per-sample, no broadcast loop)
    afft = jax.lax.dot_general(wa_ref[...], emb_ref[...],
                               (((1,), (0,)), ((), ())),
                               preferred_element_type=jnp.float32) + ba_ref[...]  # (2*Cout, 1)
    scale = afft[:cout, :]
    shift = afft[cout:, :]

    # ---- h = conv1(silu(addcmul(shift, norm1(h), scale + 1)))  [dropout p=0] --
    h = _group_norm(h, g1_ref[...], b1_ref[...], mask1,
                    num_groups=g_out, count=float(cout // g_out * hw), eps=eps)
    h = _silu(shift + h * (scale + 1.0)) * mask1
    h = _conv3x3(h, w1_ref[...], c1_ref[...], out_len=l2, offsets=offsets)   # (Cout, L2)

    # ---- x = (h + skip(orig)) * skip_scale   (1x1 skip conv, fused epilogue) --
    x_orig = x0[:, span:span + l2]                                           # (Cin, L2)
    skip = jax.lax.dot_general(wsk_ref[...], x_orig, (((1,), (0,)), ((), ())),
                               preferred_element_type=jnp.float32) + bsk_ref[...]
    x2 = (h + skip) * skip_scale                                             # (Cout, L2)

    if num_heads:
        g2_ref, b2_ref, wqkv_ref, bqkv_ref, wpr_ref, bpr_ref = refs[17:23]
        # ---- qkv = 1x1 conv of norm2(x); head channels pre-grouped on the host
        y = _group_norm(x2, g2_ref[...], b2_ref[...], mask2,
                        num_groups=g_out, count=float(cout // g_out * hw),
                        eps=eps) * mask2
        qkv = jax.lax.dot_general(wqkv_ref[...], y, (((1,), (0,)), ((), ())),
                                  preferred_element_type=jnp.float32) + bqkv_ref[...]
        ch = cout // num_heads
        inv_sqrt = 1.0 / math.sqrt(ch)
        # Additive pad-key mask. Scores are always f32 (preferred_element_type),
        # so -1e30 cannot overflow even when q/k/v are cast to bf16.
        neg = (mask2 - 1.0) * 1e30                                           # (1, L2)
        ones_row = jnp.ones((1, l2), jnp.float32)
        heads = []
        for hd in range(num_heads):
            base = hd * 3 * ch
            q = qkv[base:base + ch, :].astype(attn_dtype)
            k = qkv[base + ch:base + 2 * ch, :].astype(attn_dtype)
            v = qkv[base + 2 * ch:base + 3 * ch, :]
            s = jax.lax.dot_general(q, k, (((0,), (0,)), ((), ())),
                                    preferred_element_type=jnp.float32)      # (L2, L2)
            s = s * inv_sqrt + neg
            m = jnp.max(s, axis=-1, keepdims=True)
            p = jnp.exp(s - m)                                               # f32
            # Append a ones-row to V: one matmul yields the unnormalized output
            # AND the softmax denominator per query, already on the lane axis.
            # No (L,L) normalized-weight matrix is ever materialized.
            v_ext = jnp.concatenate([v, ones_row], axis=0).astype(attn_dtype)
            a_ext = jax.lax.dot_general(v_ext, p.astype(attn_dtype),
                                        (((1,), (1,)), ((), ())),
                                        preferred_element_type=jnp.float32)  # (ch+1, L2)
            denom = a_ext[ch:ch + 1, :]
            heads.append(a_ext[:ch, :] * pl.reciprocal(denom, approx=True))
        a_all = jnp.concatenate(heads, axis=0)                               # (Cout, L2)
        # Single merged projection over all heads (K = Cout instead of num_heads x K=ch).
        proj = jax.lax.dot_general(wpr_ref[...], a_all, (((1,), (0,)), ((), ())),
                                   preferred_element_type=jnp.float32) + bpr_ref[...]
        # ---- x = (proj(a) + x) * skip_scale  (fused epilogue) -----------------
        x2 = (proj + x2) * skip_scale

    # Non-interior lanes hold garbage (incl. pad-query attention rows); the host
    # wrapper crops them and they are never consumed downstream.
    o_ref[...] = x2


# ----------------------------------------------------------------------------
# Host wrapper: layout plumbing only, one pallas_call with grid=(N,)
# ----------------------------------------------------------------------------
def unet_block_forward(params, x, emb, *, num_heads, skip_scale=1.0, eps=1e-5,
                       attn_dtype=jnp.float32):
    # attn_dtype: keep f32 on v5e; jnp.bfloat16 is recommended on v6e/v7x (scores
    # and softmax remain f32 inside the kernel either way).
    f32 = jnp.float32
    n, cin, hh, ww = x.shape
    emb_ch = emb.shape[1]
    cout = params["conv0_w"].shape[0]
    hp, wp = hh + 2, ww + 2
    ls = hp * wp                    # padded-flat length per sample (324)
    span = 2 * wp + 2               # margin consumed per 3x3 conv (38)
    half = wp + 1                   # per-conv alignment shift (19)
    l1 = ls + span                  # length after conv0 (362)
    l0 = ls + 2 * span              # kernel input length (400)
    g_in = max(1, min(32, cin // 4))
    g_out = max(1, min(32, cout // 4))
    offsets = tuple(kh * wp + kw for kh in range(3) for kw in range(3))

    # Per-sample lane-dense padded-flat activations (N, C, L0).
    xp = jnp.pad(x.astype(f32), ((0, 0), (0, 0), (1, 1), (1, 1)))   # (N, Cin, 18, 18)
    x_flat = jnp.pad(xp.reshape(n, cin, ls), ((0, 0), (0, 0), (span, span)))
    embT = emb.astype(f32).reshape(n, emb_ch, 1)

    # Constant interior masks, pre-sliced on the host for each conv stage.
    interior = jnp.pad(jnp.ones((hh, ww), f32), ((1, 1), (1, 1))).reshape(1, ls)
    mask2 = interior                                                  # (1, 324)
    mask1 = jnp.pad(interior, ((0, 0), (half, half)))                 # (1, 362)
    mask0 = jnp.pad(interior, ((0, 0), (span, span)))                 # (1, 400)

    # Conv weights reordered for the in-kernel merged-tap matmul.
    w0 = params["conv0_w"].astype(f32).transpose(2, 3, 0, 1).reshape(9 * cout, cin)
    w1 = params["conv1_w"].astype(f32).transpose(2, 3, 0, 1).reshape(9 * cout, cout)

    args, in_specs = [], []

    def add_per_sample(a):                      # (N, d0, d1): one block per grid step
        args.append(a)
        in_specs.append(pl.BlockSpec((None,) + a.shape[1:], lambda i: (i, 0, 0)))

    def add_const(a):                           # full 2-D array, same block every step
        assert a.ndim == 2
        args.append(a)
        in_specs.append(pl.BlockSpec(a.shape, lambda i: (0, 0)))

    add_per_sample(x_flat)
    add_per_sample(embT)
    for a in (mask0, mask1, mask2,
              params["norm0_g"].reshape(cin, 1), params["norm0_b"].reshape(cin, 1),
              w0, params["conv0_b"].reshape(cout, 1),
              params["affine_w"], params["affine_b"].reshape(2 * cout, 1),
              params["norm1_g"].reshape(cout, 1), params["norm1_b"].reshape(cout, 1),
              w1, params["conv1_b"].reshape(cout, 1),
              params["skip_w"].reshape(cout, cin), params["skip_b"].reshape(cout, 1)):
        add_const(a)

    if num_heads:
        ch = cout // num_heads
        # Regroup qkv output channels to [head][q|k|v][ch] so the kernel takes
        # contiguous sublane slices per head (matches torch's reshape/unbind order).
        wqkv = (params["qkv_w"].reshape(3 * cout, cout)
                .reshape(num_heads, ch, 3, cout).transpose(0, 2, 1, 3)
                .reshape(3 * cout, cout))
        bqkv = (params["qkv_b"].reshape(num_heads, ch, 3).transpose(0, 2, 1)
                .reshape(3 * cout, 1))
        for a in (params["norm2_g"].reshape(cout, 1), params["norm2_b"].reshape(cout, 1),
                  wqkv, bqkv,
                  params["proj_w"].reshape(cout, cout), params["proj_b"].reshape(cout, 1)):
            add_const(a)

    kern = functools.partial(
        _unet_block_kernel, num_heads=num_heads, g_in=g_in, g_out=g_out,
        hw=hh * ww, eps=eps, skip_scale=skip_scale, offsets=offsets,
        attn_dtype=attn_dtype)

    out = pl.pallas_call(
        kern,
        out_shape=jax.ShapeDtypeStruct((n, cout, ls), f32),
        grid_spec=pltpu.PrefetchScalarGridSpec(
            num_scalar_prefetch=0,
            grid=(n,),
            in_specs=in_specs,
            out_specs=pl.BlockSpec((None, cout, ls), lambda i: (i, 0, 0))),
        compiler_params=pltpu.CompilerParams(
            dimension_semantics=("parallel",),        # both TCs on v7x; no-op on 1-TC chips
            vmem_limit_bytes=16 * 1024 * 1024),        # per-step peak is ~2-3 MiB
    )(*args)

    # (N, Cout, 18*18) -> crop the padding ring -> NCHW
    y = out.reshape(n, cout, hp, wp)[:, :, 1:hh + 1, 1:ww + 1]
    return y


# ----------------------------------------------------------------------------
# Deterministic parameter init + driver
# ----------------------------------------------------------------------------
def init_params(key, in_ch, out_ch, emb_ch, num_heads):
    ks = jax.random.split(key, 16)
    r = lambda k, s: 0.1 * jax.random.normal(k, s, jnp.float32)
    p = {
        "norm0_g": 1.0 + r(ks[0], (in_ch,)),
        "norm0_b": r(ks[1], (in_ch,)),
        "conv0_w": r(ks[2], (out_ch, in_ch, 3, 3)),
        "conv0_b": r(ks[3], (out_ch,)),
        "affine_w": r(ks[4], (2 * out_ch, emb_ch)),
        "affine_b": r(ks[5], (2 * out_ch,)),
        "norm1_g": 1.0 + r(ks[6], (out_ch,)),
        "norm1_b": r(ks[7], (out_ch,)),
        "conv1_w": r(ks[8], (out_ch, out_ch, 3, 3)),   # module uses init_zero; random here
        "conv1_b": r(ks[9], (out_ch,)),
        "skip_w": r(ks[10], (out_ch, in_ch, 1, 1)),
        "skip_b": r(ks[11], (out_ch,)),
    }
    if num_heads:
        p.update({
            "norm2_g": 1.0 + r(ks[12], (out_ch,)),
            "norm2_b": r(ks[13], (out_ch,)),
            "qkv_w": r(ks[14], (3 * out_ch, out_ch, 1, 1)),
            "qkv_b": jnp.zeros((3 * out_ch,), jnp.float32),
            "proj_w": r(ks[15], (out_ch, out_ch, 1, 1)),  # module uses init_zero
            "proj_b": jnp.zeros((out_ch,), jnp.float32),
        })
    return p


if __name__ == "__main__":
    IN_CH, OUT_CH, EMB_CH = 4, 8, 32
    NUM_HEADS = 2
    N, H, W = 2, 16, 16

    key = jax.random.PRNGKey(0)
    kx, ke, kp = jax.random.split(key, 3)
    x = jax.random.normal(kx, (N, IN_CH, H, W), jnp.float32)
    emb = jax.random.normal(ke, (N, EMB_CH), jnp.float32)
    params = init_params(kp, IN_CH, OUT_CH, EMB_CH, NUM_HEADS)

    fwd = jax.jit(functools.partial(unet_block_forward,
                                    num_heads=NUM_HEADS, skip_scale=1.0, eps=1e-5))
    out = fwd(params, x, emb)
    jax.block_until_ready(out)
    assert out.shape == (N, OUT_CH, H, W) and out.dtype == jnp.float32
    assert bool(jnp.isfinite(out).all())
    print("KERNEL_OK")
</pallas_src>

<mosaic_0001>
module attributes {stable_mosaic.version = 11 : i64} {
  func.func @_unet_block_kernel(%arg0: i32, %arg1: memref<1x4x400xf32, #tpu.memory_space<vmem>>, %arg2: memref<1x32x1xf32, #tpu.memory_space<vmem>>, %arg3: memref<1x400xf32, #tpu.memory_space<vmem>>, %arg4: memref<1x362xf32, #tpu.memory_space<vmem>>, %arg5: memref<1x324xf32, #tpu.memory_space<vmem>>, %arg6: memref<4x1xf32, #tpu.memory_space<vmem>>, %arg7: memref<4x1xf32, #tpu.memory_space<vmem>>, %arg8: memref<72x4xf32, #tpu.memory_space<vmem>>, %arg9: memref<8x1xf32, #tpu.memory_space<vmem>>, %arg10: memref<16x32xf32, #tpu.memory_space<vmem>>, %arg11: memref<16x1xf32, #tpu.memory_space<vmem>>, %arg12: memref<8x1xf32, #tpu.memory_space<vmem>>, %arg13: memref<8x1xf32, #tpu.memory_space<vmem>>, %arg14: memref<72x8xf32, #tpu.memory_space<vmem>>, %arg15: memref<8x1xf32, #tpu.memory_space<vmem>>, %arg16: memref<8x4xf32, #tpu.memory_space<vmem>>, %arg17: memref<8x1xf32, #tpu.memory_space<vmem>>, %arg18: memref<8x1xf32, #tpu.memory_space<vmem>>, %arg19: memref<8x1xf32, #tpu.memory_space<vmem>>, %arg20: memref<24x8xf32, #tpu.memory_space<vmem>>, %arg21: memref<24x1xf32, #tpu.memory_space<vmem>>, %arg22: memref<8x8xf32, #tpu.memory_space<vmem>>, %arg23: memref<8x1xf32, #tpu.memory_space<vmem>>, %arg24: memref<1x8x324xf32, #tpu.memory_space<vmem>>) attributes {dimension_semantics = [#tpu.dimension_semantics<parallel>], iteration_bounds = array<i64: 2>, scalar_prefetch = 0 : i64, scratch_operands = 0 : i64, tpu.core_type = #tpu.core_type<tc>, window_params = [{transform_indices = @transform_0, window_bounds = array<i64: 1, 4, 400>}, {transform_indices = @transform_1, window_bounds = array<i64: 1, 32, 1>}, {pipeline_mode = #tpu.pipeline_mode<synchronous>, transform_indices = @transform_2, window_bounds = array<i64: 1, 400>}, {pipeline_mode = #tpu.pipeline_mode<synchronous>, transform_indices = @transform_3, window_bounds = array<i64: 1, 362>}, {pipeline_mode = #tpu.pipeline_mode<synchronous>, transform_indices = @transform_4, window_bounds = array<i64: 1, 324>}, {pipeline_mode = #tpu.pipeline_mode<synchronous>, transform_indices = @transform_5, window_bounds = array<i64: 4, 1>}, {pipeline_mode = #tpu.pipeline_mode<synchronous>, transform_indices = @transform_6, window_bounds = array<i64: 4, 1>}, {pipeline_mode = #tpu.pipeline_mode<synchronous>, transform_indices = @transform_7, window_bounds = array<i64: 72, 4>}, {pipeline_mode = #tpu.pipeline_mode<synchronous>, transform_indices = @transform_8, window_bounds = array<i64: 8, 1>}, {pipeline_mode = #tpu.pipeline_mode<synchronous>, transform_indices = @transform_9, window_bounds = array<i64: 16, 32>}, {pipeline_mode = #tpu.pipeline_mode<synchronous>, transform_indices = @transform_10, window_bounds = array<i64: 16, 1>}, {pipeline_mode = #tpu.pipeline_mode<synchronous>, transform_indices = @transform_11, window_bounds = array<i64: 8, 1>}, {pipeline_mode = #tpu.pipeline_mode<synchronous>, transform_indices = @transform_12, window_bounds = array<i64: 8, 1>}, {pipeline_mode = #tpu.pipeline_mode<synchronous>, transform_indices = @transform_13, window_bounds = array<i64: 72, 8>}, {pipeline_mode = #tpu.pipeline_mode<synchronous>, transform_indices = @transform_14, window_bounds = array<i64: 8, 1>}, {pipeline_mode = #tpu.pipeline_mode<synchronous>, transform_indices = @transform_15, window_bounds = array<i64: 8, 4>}, {pipeline_mode = #tpu.pipeline_mode<synchronous>, transform_indices = @transform_16, window_bounds = array<i64: 8, 1>}, {pipeline_mode = #tpu.pipeline_mode<synchronous>, transform_indices = @transform_17, window_bounds = array<i64: 8, 1>}, {pipeline_mode = #tpu.pipeline_mode<synchronous>, transform_indices = @transform_18, window_bounds = array<i64: 8, 1>}, {pipeline_mode = #tpu.pipeline_mode<synchronous>, transform_indices = @transform_19, window_bounds = array<i64: 24, 8>}, {pipeline_mode = #tpu.pipeline_mode<synchronous>, transform_indices = @transform_20, window_bounds = array<i64: 24, 1>}, {pipeline_mode = #tpu.pipeline_mode<synchronous>, transform_indices = @transform_21, window_bounds = array<i64: 8, 8>}, {pipeline_mode = #tpu.pipeline_mode<synchronous>, transform_indices = @transform_22, window_bounds = array<i64: 8, 1>}, {transform_indices = @transform_23, window_bounds = array<i64: 1, 8, 324>}]} {
    %c0 = arith.constant 0 : index
    %c0_0 = arith.constant 0 : index
    %c0_1 = arith.constant 0 : index
    %0 = vector.load %arg1[%c0, %c0_0, %c0_1] : memref<1x4x400xf32, #tpu.memory_space<vmem>>, vector<1x4x400xf32>
    %1 = vector.shape_cast %0 : vector<1x4x400xf32> to vector<4x400xf32>
    %c0_2 = arith.constant 0 : index
    %c0_3 = arith.constant 0 : index
    %2 = vector.load %arg3[%c0_2, %c0_3] : memref<1x400xf32, #tpu.memory_space<vmem>>, vector<1x400xf32>
    %c0_4 = arith.constant 0 : index
    %c0_5 = arith.constant 0 : index
    %3 = vector.load %arg4[%c0_4, %c0_5] : memref<1x362xf32, #tpu.memory_space<vmem>>, vector<1x362xf32>
    %c0_6 = arith.constant 0 : index
    %c0_7 = arith.constant 0 : index
    %4 = vector.load %arg5[%c0_6, %c0_7] : memref<1x324xf32, #tpu.memory_space<vmem>>, vector<1x324xf32>
    %c0_8 = arith.constant 0 : index
    %c0_9 = arith.constant 0 : index
    %5 = vector.load %arg6[%c0_8, %c0_9] : memref<4x1xf32, #tpu.memory_space<vmem>>, vector<4x1xf32>
    %c0_10 = arith.constant 0 : index
    %c0_11 = arith.constant 0 : index
    %6 = vector.load %arg7[%c0_10, %c0_11] : memref<4x1xf32, #tpu.memory_space<vmem>>, vector<4x1xf32>
    %7 = vector.broadcast %2 : vector<1x400xf32> to vector<4x400xf32>
    %8 = arith.mulf %1, %7 : vector<4x400xf32>
    %cst = arith.constant dense<0.000000e+00> : vector<4xf32>
    %9 = vector.multi_reduction <add>, %8, %cst [1] : vector<4x400xf32> to vector<4xf32>
    %10 = vector.shape_cast %9 : vector<4xf32> to vector<4x1xf32>
    %cst_12 = arith.constant dense<0.000000e+00> : vector<1xf32>
    %11 = vector.multi_reduction <add>, %10, %cst_12 [0] : vector<4x1xf32> to vector<1xf32>
    %12 = vector.shape_cast %11 : vector<1xf32> to vector<1x1xf32>
    %cst_13 = arith.constant 9.765625E-4 : f32
    %13 = vector.broadcast %cst_13 : f32 to vector<1x1xf32>
    %14 = arith.mulf %12, %13 : vector<1x1xf32>
    %15 = arith.mulf %8, %1 : vector<4x400xf32>
    %cst_14 = arith.constant dense<0.000000e+00> : vector<4xf32>
    %16 = vector.multi_reduction <add>, %15, %cst_14 [1] : vector<4x400xf32> to vector<4xf32>
    %17 = vector.shape_cast %16 : vector<4xf32> to vector<4x1xf32>
    %cst_15 = arith.constant dense<0.000000e+00> : vector<1xf32>
    %18 = vector.multi_reduction <add>, %17, %cst_15 [0] : vector<4x1xf32> to vector<1xf32>
    %19 = vector.shape_cast %18 : vector<1xf32> to vector<1x1xf32>
    %cst_16 = arith.constant 9.765625E-4 : f32
    %20 = vector.broadcast %cst_16 : f32 to vector<1x1xf32>
    %21 = arith.mulf %19, %20 : vector<1x1xf32>
    %22 = arith.mulf %14, %14 : vector<1x1xf32>
    %23 = arith.subf %21, %22 : vector<1x1xf32>
    %cst_17 = arith.constant 9.99999974E-6 : f32
    %24 = vector.broadcast %cst_17 : f32 to vector<1x1xf32>
    %25 = arith.addf %23, %24 : vector<1x1xf32>
    %26 = math.rsqrt %25 : vector<1x1xf32>
    %27 = vector.broadcast %14 : vector<1x1xf32> to vector<4x400xf32>
    %28 = arith.subf %1, %27 : vector<4x400xf32>
    %29 = vector.broadcast %26 : vector<1x1xf32> to vector<4x400xf32>
    %30 = arith.mulf %28, %29 : vector<4x400xf32>
    %31 = vector.broadcast %5 : vector<4x1xf32> to vector<4x400xf32>
    %32 = arith.mulf %30, %31 : vector<4x400xf32>
    %33 = vector.broadcast %6 : vector<4x1xf32> to vector<4x400xf32>
    %34 = arith.addf %32, %33 : vector<4x400xf32>
    %35 = arith.negf %34 : vector<4x400xf32>
    %36 = math.exp %35 : vector<4x400xf32>
    %cst_18 = arith.constant 1.000000e+00 : f32
    %37 = vector.broadcast %cst_18 : f32 to vector<4x400xf32>
    %38 = arith.addf %37, %36 : vector<4x400xf32>
    %39 = arith.divf %37, %38 : vector<4x400xf32>
    %40 = arith.mulf %34, %39 : vector<4x400xf32>
    %41 = vector.broadcast %2 : vector<1x400xf32> to vector<4x400xf32>
    %42 = arith.mulf %40, %41 : vector<4x400xf32>
    %c0_19 = arith.constant 0 : index
    %c0_20 = arith.constant 0 : index
    %43 = vector.load %arg8[%c0_19, %c0_20] : memref<72x4xf32, #tpu.memory_space<vmem>>, vector<72x4xf32>
    %c0_21 = arith.constant 0 : index
    %c0_22 = arith.constant 0 : index
    %44 = vector.load %arg9[%c0_21, %c0_22] : memref<8x1xf32, #tpu.memory_space<vmem>>, vector<8x1xf32>
    %cst_23 = arith.constant dense<0.000000e+00> : vector<72x400xf32>
    %45 = tpu.matmul %43, %42, %cst_23 {dimension_numbers = #tpu.dot_dimension_numbers<[1], [0], [0], [1], [0, 0, 1, 1], [], []>} : vector<72x4xf32>, vector<4x400xf32>, vector<72x400xf32> -> vector<72x400xf32>
    %46 = vector.extract_strided_slice %45 {offsets = [0, 0], sizes = [8, 362], strides = [1, 1]} : vector<72x400xf32> to vector<8x362xf32>
    %47 = vector.extract_strided_slice %45 {offsets = [8, 1], sizes = [8, 362], strides = [1, 1]} : vector<72x400xf32> to vector<8x362xf32>
    %48 = arith.addf %46, %47 : vector<8x362xf32>
    %49 = vector.extract_strided_slice %45 {offsets = [16, 2], sizes = [8, 362], strides = [1, 1]} : vector<72x400xf32> to vector<8x362xf32>
    %50 = arith.addf %48, %49 : vector<8x362xf32>
    %51 = vector.extract_strided_slice %45 {offsets = [24, 18], sizes = [8, 362], strides = [1, 1]} : vector<72x400xf32> to vector<8x362xf32>
    %52 = arith.addf %50, %51 : vector<8x362xf32>
    %53 = vector.extract_strided_slice %45 {offsets = [32, 19], sizes = [8, 362], strides = [1, 1]} : vector<72x400xf32> to vector<8x362xf32>
    %54 = arith.addf %52, %53 : vector<8x362xf32>
    %55 = vector.extract_strided_slice %45 {offsets = [40, 20], sizes = [8, 362], strides = [1, 1]} : vector<72x400xf32> to vector<8x362xf32>
    %56 = arith.addf %54, %55 : vector<8x362xf32>
    %57 = vector.extract_strided_slice %45 {offsets = [48, 36], sizes = [8, 362], strides = [1, 1]} : vector<72x400xf32> to vector<8x362xf32>
    %58 = arith.addf %56, %57 : vector<8x362xf32>
    %59 = vector.extract_strided_slice %45 {offsets = [56, 37], sizes = [8, 362], strides = [1, 1]} : vector<72x400xf32> to vector<8x362xf32>
    %60 = arith.addf %58, %59 : vector<8x362xf32>
    %61 = vector.extract_strided_slice %45 {offsets = [64, 38], sizes = [8, 362], strides = [1, 1]} : vector<72x400xf32> to vector<8x362xf32>
    %62 = arith.addf %60, %61 : vector<8x362xf32>
    %63 = vector.broadcast %44 : vector<8x1xf32> to vector<8x362xf32>
    %64 = arith.addf %62, %63 : vector<8x362xf32>
    %c0_24 = arith.constant 0 : index
    %c0_25 = arith.constant 0 : index
    %65 = vector.load %arg10[%c0_24, %c0_25] : memref<16x32xf32, #tpu.memory_space<vmem>>, vector<16x32xf32>
    %c0_26 = arith.constant 0 : index
    %c0_27 = arith.constant 0 : index
    %c0_28 = arith.constant 0 : index
    %66 = vector.load %arg2[%c0_26, %c0_27, %c0_28] : memref<1x32x1xf32, #tpu.memory_space<vmem>>, vector<1x32x1xf32>
    %67 = vector.shape_cast %66 : vector<1x32x1xf32> to vector<32x1xf32>
    %cst_29 = arith.constant dense<0.000000e+00> : vector<16x1xf32>
    %68 = tpu.matmul %65, %67, %cst_29 {dimension_numbers = #tpu.dot_dimension_numbers<[1], [0], [0], [1], [0, 0, 1, 1], [], []>} : vector<16x32xf32>, vector<32x1xf32>, vector<16x1xf32> -> vector<16x1xf32>
    %c0_30 = arith.constant 0 : index
    %c0_31 = arith.constant 0 : index
    %69 = vector.load %arg11[%c0_30, %c0_31] : memref<16x1xf32, #tpu.memory_space<vmem>>, vector<16x1xf32>
    %70 = arith.addf %68, %69 : vector<16x1xf32>
    %71 = vector.extract_strided_slice %70 {offsets = [0, 0], sizes = [8, 1], strides = [1, 1]} : vector<16x1xf32> to vector<8x1xf32>
    %72 = vector.extract_strided_slice %70 {offsets = [8, 0], sizes = [8, 1], strides = [1, 1]} : vector<16x1xf32> to vector<8x1xf32>
    %c0_32 = arith.constant 0 : index
    %c0_33 = arith.constant 0 : index
    %73 = vector.load %arg12[%c0_32, %c0_33] : memref<8x1xf32, #tpu.memory_space<vmem>>, vector<8x1xf32>
    %c0_34 = arith.constant 0 : index
    %c0_35 = arith.constant 0 : index
    %74 = vector.load %arg13[%c0_34, %c0_35] : memref<8x1xf32, #tpu.memory_space<vmem>>, vector<8x1xf32>
    %75 = vector.extract_strided_slice %64 {offsets = [0, 0], sizes = [4, 362], strides = [1, 1]} : vector<8x362xf32> to vector<4x362xf32>
    %76 = vector.broadcast %3 : vector<1x362xf32> to vector<4x362xf32>
    %77 = arith.mulf %75, %76 : vector<4x362xf32>
    %cst_36 = arith.constant dense<0.000000e+00> : vector<4xf32>
    %78 = vector.multi_reduction <add>, %77, %cst_36 [1] : vector<4x362xf32> to vector<4xf32>
    %79 = vector.shape_cast %78 : vector<4xf32> to vector<4x1xf32>
    %cst_37 = arith.constant dense<0.000000e+00> : vector<1xf32>
    %80 = vector.multi_reduction <add>, %79, %cst_37 [0] : vector<4x1xf32> to vector<1xf32>
    %81 = vector.shape_cast %80 : vector<1xf32> to vector<1x1xf32>
    %cst_38 = arith.constant 9.765625E-4 : f32
    %82 = vector.broadcast %cst_38 : f32 to vector<1x1xf32>
    %83 = arith.mulf %81, %82 : vector<1x1xf32>
    %84 = arith.mulf %77, %75 : vector<4x362xf32>
    %cst_39 = arith.constant dense<0.000000e+00> : vector<4xf32>
    %85 = vector.multi_reduction <add>, %84, %cst_39 [1] : vector<4x362xf32> to vector<4xf32>
    %86 = vector.shape_cast %85 : vector<4xf32> to vector<4x1xf32>
    %cst_40 = arith.constant dense<0.000000e+00> : vector<1xf32>
    %87 = vector.multi_reduction <add>, %86, %cst_40 [0] : vector<4x1xf32> to vector<1xf32>
    %88 = vector.shape_cast %87 : vector<1xf32> to vector<1x1xf32>
    %cst_41 = arith.constant 9.765625E-4 : f32
    %89 = vector.broadcast %cst_41 : f32 to vector<1x1xf32>
    %90 = arith.mulf %88, %89 : vector<1x1xf32>
    %91 = arith.mulf %83, %83 : vector<1x1xf32>
    %92 = arith.subf %90, %91 : vector<1x1xf32>
    %cst_42 = arith.constant 9.99999974E-6 : f32
    %93 = vector.broadcast %cst_42 : f32 to vector<1x1xf32>
    %94 = arith.addf %92, %93 : vector<1x1xf32>
    %95 = math.rsqrt %94 : vector<1x1xf32>
    %96 = vector.broadcast %83 : vector<1x1xf32> to vector<4x362xf32>
    %97 = arith.subf %75, %96 : vector<4x362xf32>
    %98 = vector.broadcast %95 : vector<1x1xf32> to vector<4x362xf32>
    %99 = arith.mulf %97, %98 : vector<4x362xf32>
    %100 = vector.extract_strided_slice %64 {offsets = [4, 0], sizes = [4, 362], strides = [1, 1]} : vector<8x362xf32> to vector<4x362xf32>
    %101 = vector.broadcast %3 : vector<1x362xf32> to vector<4x362xf32>
    %102 = arith.mulf %100, %101 : vector<4x362xf32>
    %cst_43 = arith.constant dense<0.000000e+00> : vector<4xf32>
    %103 = vector.multi_reduction <add>, %102, %cst_43 [1] : vector<4x362xf32> to vector<4xf32>
    %104 = vector.shape_cast %103 : vector<4xf32> to vector<4x1xf32>
    %cst_44 = arith.constant dense<0.000000e+00> : vector<1xf32>
    %105 = vector.multi_reduction <add>, %104, %cst_44 [0] : vector<4x1xf32> to vector<1xf32>
    %106 = vector.shape_cast %105 : vector<1xf32> to vector<1x1xf32>
    %cst_45 = arith.constant 9.765625E-4 : f32
    %107 = vector.broadcast %cst_45 : f32 to vector<1x1xf32>
    %108 = arith.mulf %106, %107 : vector<1x1xf32>
    %109 = arith.mulf %102, %100 : vector<4x362xf32>
    %cst_46 = arith.constant dense<0.000000e+00> : vector<4xf32>
    %110 = vector.multi_reduction <add>, %109, %cst_46 [1] : vector<4x362xf32> to vector<4xf32>
    %111 = vector.shape_cast %110 : vector<4xf32> to vector<4x1xf32>
    %cst_47 = arith.constant dense<0.000000e+00> : vector<1xf32>
    %112 = vector.multi_reduction <add>, %111, %cst_47 [0] : vector<4x1xf32> to vector<1xf32>
    %113 = vector.shape_cast %112 : vector<1xf32> to vector<1x1xf32>
    %cst_48 = arith.constant 9.765625E-4 : f32
    %114 = vector.broadcast %cst_48 : f32 to vector<1x1xf32>
    %115 = arith.mulf %113, %114 : vector<1x1xf32>
    %116 = arith.mulf %108, %108 : vector<1x1xf32>
    %117 = arith.subf %115, %116 : vector<1x1xf32>
    %cst_49 = arith.constant 9.99999974E-6 : f32
    %118 = vector.broadcast %cst_49 : f32 to vector<1x1xf32>
    %119 = arith.addf %117, %118 : vector<1x1xf32>
    %120 = math.rsqrt %119 : vector<1x1xf32>
    %121 = vector.broadcast %108 : vector<1x1xf32> to vector<4x362xf32>
    %122 = arith.subf %100, %121 : vector<4x362xf32>
    %123 = vector.broadcast %120 : vector<1x1xf32> to vector<4x362xf32>
    %124 = arith.mulf %122, %123 : vector<4x362xf32>
    %125 = tpu.concatenate %99, %124 in 0 : vector<4x362xf32>, vector<4x362xf32> -> vector<8x362xf32>
    %126 = vector.broadcast %73 : vector<8x1xf32> to vector<8x362xf32>
    %127 = arith.mulf %125, %126 : vector<8x362xf32>
    %128 = vector.broadcast %74 : vector<8x1xf32> to vector<8x362xf32>
    %129 = arith.addf %127, %128 : vector<8x362xf32>
    %cst_50 = arith.constant 1.000000e+00 : f32
    %130 = vector.broadcast %cst_50 : f32 to vector<8x1xf32>
    %131 = arith.addf %71, %130 : vector<8x1xf32>
    %132 = vector.broadcast %131 : vector<8x1xf32> to vector<8x362xf32>
    %133 = arith.mulf %129, %132 : vector<8x362xf32>
    %134 = vector.broadcast %72 : vector<8x1xf32> to vector<8x362xf32>
    %135 = arith.addf %134, %133 : vector<8x362xf32>
    %136 = arith.negf %135 : vector<8x362xf32>
    %137 = math.exp %136 : vector<8x362xf32>
    %cst_51 = arith.constant 1.000000e+00 : f32
    %138 = vector.broadcast %cst_51 : f32 to vector<8x362xf32>
    %139 = arith.addf %138, %137 : vector<8x362xf32>
    %140 = arith.divf %138, %139 : vector<8x362xf32>
    %141 = arith.mulf %135, %140 : vector<8x362xf32>
    %142 = vector.broadcast %3 : vector<1x362xf32> to vector<8x362xf32>
    %143 = arith.mulf %141, %142 : vector<8x362xf32>
    %c0_52 = arith.constant 0 : index
    %c0_53 = arith.constant 0 : index
    %144 = vector.load %arg14[%c0_52, %c0_53] : memref<72x8xf32, #tpu.memory_space<vmem>>, vector<72x8xf32>
    %c0_54 = arith.constant 0 : index
    %c0_55 = arith.constant 0 : index
    %145 = vector.load %arg15[%c0_54, %c0_55] : memref<8x1xf32, #tpu.memory_space<vmem>>, vector<8x1xf32>
    %cst_56 = arith.constant dense<0.000000e+00> : vector<72x362xf32>
    %146 = tpu.matmul %144, %143, %cst_56 {dimension_numbers = #tpu.dot_dimension_numbers<[1], [0], [0], [1], [0, 0, 1, 1], [], []>} : vector<72x8xf32>, vector<8x362xf32>, vector<72x362xf32> -> vector<72x362xf32>
    %147 = vector.extract_strided_slice %146 {offsets = [0, 0], sizes = [8, 324], strides = [1, 1]} : vector<72x362xf32> to vector<8x324xf32>
    %148 = vector.extract_strided_slice %146 {offsets = [8, 1], sizes = [8, 324], strides = [1, 1]} : vector<72x362xf32> to vector<8x324xf32>
    %149 = arith.addf %147, %148 : vector<8x324xf32>
    %150 = vector.extract_strided_slice %146 {offsets = [16, 2], sizes = [8, 324], strides = [1, 1]} : vector<72x362xf32> to vector<8x324xf32>
    %151 = arith.addf %149, %150 : vector<8x324xf32>
    %152 = vector.extract_strided_slice %146 {offsets = [24, 18], sizes = [8, 324], strides = [1, 1]} : vector<72x362xf32> to vector<8x324xf32>
    %153 = arith.addf %151, %152 : vector<8x324xf32>
    %154 = vector.extract_strided_slice %146 {offsets = [32, 19], sizes = [8, 324], strides = [1, 1]} : vector<72x362xf32> to vector<8x324xf32>
    %155 = arith.addf %153, %154 : vector<8x324xf32>
    %156 = vector.extract_strided_slice %146 {offsets = [40, 20], sizes = [8, 324], strides = [1, 1]} : vector<72x362xf32> to vector<8x324xf32>
    %157 = arith.addf %155, %156 : vector<8x324xf32>
    %158 = vector.extract_strided_slice %146 {offsets = [48, 36], sizes = [8, 324], strides = [1, 1]} : vector<72x362xf32> to vector<8x324xf32>
    %159 = arith.addf %157, %158 : vector<8x324xf32>
    %160 = vector.extract_strided_slice %146 {offsets = [56, 37], sizes = [8, 324], strides = [1, 1]} : vector<72x362xf32> to vector<8x324xf32>
    %161 = arith.addf %159, %160 : vector<8x324xf32>
    %162 = vector.extract_strided_slice %146 {offsets = [64, 38], sizes = [8, 324], strides = [1, 1]} : vector<72x362xf32> to vector<8x324xf32>
    %163 = arith.addf %161, %162 : vector<8x324xf32>
    %164 = vector.broadcast %145 : vector<8x1xf32> to vector<8x324xf32>
    %165 = arith.addf %163, %164 : vector<8x324xf32>
    %166 = vector.extract_strided_slice %1 {offsets = [0, 38], sizes = [4, 324], strides = [1, 1]} : vector<4x400xf32> to vector<4x324xf32>
    %c0_57 = arith.constant 0 : index
    %c0_58 = arith.constant 0 : index
    %167 = vector.load %arg16[%c0_57, %c0_58] : memref<8x4xf32, #tpu.memory_space<vmem>>, vector<8x4xf32>
    %cst_59 = arith.constant dense<0.000000e+00> : vector<8x324xf32>
    %168 = tpu.matmul %167, %166, %cst_59 {dimension_numbers = #tpu.dot_dimension_numbers<[1], [0], [0], [1], [0, 0, 1, 1], [], []>} : vector<8x4xf32>, vector<4x324xf32>, vector<8x324xf32> -> vector<8x324xf32>
    %c0_60 = arith.constant 0 : index
    %c0_61 = arith.constant 0 : index
    %169 = vector.load %arg17[%c0_60, %c0_61] : memref<8x1xf32, #tpu.memory_space<vmem>>, vector<8x1xf32>
    %170 = vector.broadcast %169 : vector<8x1xf32> to vector<8x324xf32>
    %171 = arith.addf %168, %170 : vector<8x324xf32>
    %172 = arith.addf %165, %171 : vector<8x324xf32>
    %cst_62 = arith.constant 1.000000e+00 : f32
    %173 = vector.broadcast %cst_62 : f32 to vector<8x324xf32>
    %174 = arith.mulf %172, %173 : vector<8x324xf32>
    %c0_63 = arith.constant 0 : index
    %c0_64 = arith.constant 0 : index
    %175 = vector.load %arg18[%c0_63, %c0_64] : memref<8x1xf32, #tpu.memory_space<vmem>>, vector<8x1xf32>
    %c0_65 = arith.constant 0 : index
    %c0_66 = arith.constant 0 : index
    %176 = vector.load %arg19[%c0_65, %c0_66] : memref<8x1xf32, #tpu.memory_space<vmem>>, vector<8x1xf32>
    %177 = vector.extract_strided_slice %174 {offsets = [0, 0], sizes = [4, 324], strides = [1, 1]} : vector<8x324xf32> to vector<4x324xf32>
    %178 = vector.broadcast %4 : vector<1x324xf32> to vector<4x324xf32>
    %179 = arith.mulf %177, %178 : vector<4x324xf32>
    %cst_67 = arith.constant dense<0.000000e+00> : vector<4xf32>
    %180 = vector.multi_reduction <add>, %179, %cst_67 [1] : vector<4x324xf32> to vector<4xf32>
    %181 = vector.shape_cast %180 : vector<4xf32> to vector<4x1xf32>
    %cst_68 = arith.constant dense<0.000000e+00> : vector<1xf32>
    %182 = vector.multi_reduction <add>, %181, %cst_68 [0] : vector<4x1xf32> to vector<1xf32>
    %183 = vector.shape_cast %182 : vector<1xf32> to vector<1x1xf32>
    %cst_69 = arith.constant 9.765625E-4 : f32
    %184 = vector.broadcast %cst_69 : f32 to vector<1x1xf32>
    %185 = arith.mulf %183, %184 : vector<1x1xf32>
    %186 = arith.mulf %179, %177 : vector<4x324xf32>
    %cst_70 = arith.constant dense<0.000000e+00> : vector<4xf32>
    %187 = vector.multi_reduction <add>, %186, %cst_70 [1] : vector<4x324xf32> to vector<4xf32>
    %188 = vector.shape_cast %187 : vector<4xf32> to vector<4x1xf32>
    %cst_71 = arith.constant dense<0.000000e+00> : vector<1xf32>
    %189 = vector.multi_reduction <add>, %188, %cst_71 [0] : vector<4x1xf32> to vector<1xf32>
    %190 = vector.shape_cast %189 : vector<1xf32> to vector<1x1xf32>
    %cst_72 = arith.constant 9.765625E-4 : f32
    %191 = vector.broadcast %cst_72 : f32 to vector<1x1xf32>
    %192 = arith.mulf %190, %191 : vector<1x1xf32>
    %193 = arith.mulf %185, %185 : vector<1x1xf32>
    %194 = arith.subf %192, %193 : vector<1x1xf32>
    %cst_73 = arith.constant 9.99999974E-6 : f32
    %195 = vector.broadcast %cst_73 : f32 to vector<1x1xf32>
    %196 = arith.addf %194, %195 : vector<1x1xf32>
    %197 = math.rsqrt %196 : vector<1x1xf32>
    %198 = vector.broadcast %185 : vector<1x1xf32> to vector<4x324xf32>
    %199 = arith.subf %177, %198 : vector<4x324xf32>
    %200 = vector.broadcast %197 : vector<1x1xf32> to vector<4x324xf32>
    %201 = arith.mulf %199, %200 : vector<4x324xf32>
    %202 = vector.extract_strided_slice %174 {offsets = [4, 0], sizes = [4, 324], strides = [1, 1]} : vector<8x324xf32> to vector<4x324xf32>
    %203 = vector.broadcast %4 : vector<1x324xf32> to vector<4x324xf32>
    %204 = arith.mulf %202, %203 : vector<4x324xf32>
    %cst_74 = arith.constant dense<0.000000e+00> : vector<4xf32>
    %205 = vector.multi_reduction <add>, %204, %cst_74 [1] : vector<4x324xf32> to vector<4xf32>
    %206 = vector.shape_cast %205 : vector<4xf32> to vector<4x1xf32>
    %cst_75 = arith.constant dense<0.000000e+00> : vector<1xf32>
    %207 = vector.multi_reduction <add>, %206, %cst_75 [0] : vector<4x1xf32> to vector<1xf32>
    %208 = vector.shape_cast %207 : vector<1xf32> to vector<1x1xf32>
    %cst_76 = arith.constant 9.765625E-4 : f32
    %209 = vector.broadcast %cst_76 : f32 to vector<1x1xf32>
    %210 = arith.mulf %208, %209 : vector<1x1xf32>
    %211 = arith.mulf %204, %202 : vector<4x324xf32>
    %cst_77 = arith.constant dense<0.000000e+00> : vector<4xf32>
    %212 = vector.multi_reduction <add>, %211, %cst_77 [1] : vector<4x324xf32> to vector<4xf32>
    %213 = vector.shape_cast %212 : vector<4xf32> to vector<4x1xf32>
    %cst_78 = arith.constant dense<0.000000e+00> : vector<1xf32>
    %214 = vector.multi_reduction <add>, %213, %cst_78 [0] : vector<4x1xf32> to vector<1xf32>
    %215 = vector.shape_cast %214 : vector<1xf32> to vector<1x1xf32>
    %cst_79 = arith.constant 9.765625E-4 : f32
    %216 = vector.broadcast %cst_79 : f32 to vector<1x1xf32>
    %217 = arith.mulf %215, %216 : vector<1x1xf32>
    %218 = arith.mulf %210, %210 : vector<1x1xf32>
    %219 = arith.subf %217, %218 : vector<1x1xf32>
    %cst_80 = arith.constant 9.99999974E-6 : f32
    %220 = vector.broadcast %cst_80 : f32 to vector<1x1xf32>
    %221 = arith.addf %219, %220 : vector<1x1xf32>
    %222 = math.rsqrt %221 : vector<1x1xf32>
    %223 = vector.broadcast %210 : vector<1x1xf32> to vector<4x324xf32>
    %224 = arith.subf %202, %223 : vector<4x324xf32>
    %225 = vector.broadcast %222 : vector<1x1xf32> to vector<4x324xf32>
    %226 = arith.mulf %224, %225 : vector<4x324xf32>
    %227 = tpu.concatenate %201, %226 in 0 : vector<4x324xf32>, vector<4x324xf32> -> vector<8x324xf32>
    %228 = vector.broadcast %175 : vector<8x1xf32> to vector<8x324xf32>
    %229 = arith.mulf %227, %228 : vector<8x324xf32>
    %230 = vector.broadcast %176 : vector<8x1xf32> to vector<8x324xf32>
    %231 = arith.addf %229, %230 : vector<8x324xf32>
    %232 = vector.broadcast %4 : vector<1x324xf32> to vector<8x324xf32>
    %233 = arith.mulf %231, %232 : vector<8x324xf32>
    %c0_81 = arith.constant 0 : index
    %c0_82 = arith.constant 0 : index
    %234 = vector.load %arg20[%c0_81, %c0_82] : memref<24x8xf32, #tpu.memory_space<vmem>>, vector<24x8xf32>
    %cst_83 = arith.constant dense<0.000000e+00> : vector<24x324xf32>
    %235 = tpu.matmul %234, %233, %cst_83 {dimension_numbers = #tpu.dot_dimension_numbers<[1], [0], [0], [1], [0, 0, 1, 1], [], []>} : vector<24x8xf32>, vector<8x324xf32>, vector<24x324xf32> -> vector<24x324xf32>
    %c0_84 = arith.constant 0 : index
    %c0_85 = arith.constant 0 : index
    %236 = vector.load %arg21[%c0_84, %c0_85] : memref<24x1xf32, #tpu.memory_space<vmem>>, vector<24x1xf32>
    %237 = vector.broadcast %236 : vector<24x1xf32> to vector<24x324xf32>
    %238 = arith.addf %235, %237 : vector<24x324xf32>
    %cst_86 = arith.constant 1.000000e+00 : f32
    %239 = vector.broadcast %cst_86 : f32 to vector<1x324xf32>
    %240 = arith.subf %4, %239 : vector<1x324xf32>
    %cst_87 = arith.constant 1.000000e+30 : f32
    %241 = vector.broadcast %cst_87 : f32 to vector<1x324xf32>
    %242 = arith.mulf %240, %241 : vector<1x324xf32>
    %cst_88 = arith.constant 1.000000e+00 : f32
    %243 = vector.broadcast %cst_88 : f32 to vector<1x324xf32>
    %244 = vector.extract_strided_slice %238 {offsets = [0, 0], sizes = [4, 324], strides = [1, 1]} : vector<24x324xf32> to vector<4x324xf32>
    %245 = vector.extract_strided_slice %238 {offsets = [4, 0], sizes = [4, 324], strides = [1, 1]} : vector<24x324xf32> to vector<4x324xf32>
    %246 = vector.extract_strided_slice %238 {offsets = [8, 0], sizes = [4, 324], strides = [1, 1]} : vector<24x324xf32> to vector<4x324xf32>
    %cst_89 = arith.constant dense<0.000000e+00> : vector<324x324xf32>
    %247 = tpu.matmul %244, %245, %cst_89 {dimension_numbers = #tpu.dot_dimension_numbers<[0], [0], [1], [1], [0, 1, 1, 1], [], []>} : vector<4x324xf32>, vector<4x324xf32>, vector<324x324xf32> -> vector<324x324xf32>
    %cst_90 = arith.constant 5.000000e-01 : f32
    %248 = vector.broadcast %cst_90 : f32 to vector<324x324xf32>
    %249 = arith.mulf %247, %248 : vector<324x324xf32>
    %250 = vector.broadcast %242 : vector<1x324xf32> to vector<324x324xf32>
    %251 = arith.addf %249, %250 : vector<324x324xf32>
    %cst_91 = arith.constant dense<0xFF800000> : vector<324xf32>
    %252 = vector.multi_reduction <maximumf>, %251, %cst_91 [1] : vector<324x324xf32> to vector<324xf32>
    %253 = vector.shape_cast %252 : vector<324xf32> to vector<324x1xf32>
    %254 = vector.broadcast %253 : vector<324x1xf32> to vector<324x324xf32>
    %255 = arith.subf %251, %254 : vector<324x324xf32>
    %256 = math.exp %255 : vector<324x324xf32>
    %257 = tpu.concatenate %246, %243 in 0 : vector<4x324xf32>, vector<1x324xf32> -> vector<5x324xf32>
    %cst_92 = arith.constant dense<0.000000e+00> : vector<5x324xf32>
    %258 = tpu.matmul %257, %256, %cst_92 {dimension_numbers = #tpu.dot_dimension_numbers<[1], [1], [0], [0], [0, 0, 1, 0], [], []>} : vector<5x324xf32>, vector<324x324xf32>, vector<5x324xf32> -> vector<5x324xf32>
    %259 = vector.extract_strided_slice %258 {offsets = [4, 0], sizes = [1, 324], strides = [1, 1]} : vector<5x324xf32> to vector<1x324xf32>
    %260 = vector.extract_strided_slice %258 {offsets = [0, 0], sizes = [4, 324], strides = [1, 1]} : vector<5x324xf32> to vector<4x324xf32>
    %261 = tpu.reciprocal %259 {approx = true} : vector<1x324xf32> -> vector<1x324xf32>
    %262 = vector.broadcast %261 : vector<1x324xf32> to vector<4x324xf32>
    %263 = arith.mulf %260, %262 : vector<4x324xf32>
    %264 = vector.extract_strided_slice %238 {offsets = [12, 0], sizes = [4, 324], strides = [1, 1]} : vector<24x324xf32> to vector<4x324xf32>
    %265 = vector.extract_strided_slice %238 {offsets = [16, 0], sizes = [4, 324], strides = [1, 1]} : vector<24x324xf32> to vector<4x324xf32>
    %266 = vector.extract_strided_slice %238 {offsets = [20, 0], sizes = [4, 324], strides = [1, 1]} : vector<24x324xf32> to vector<4x324xf32>
    %cst_93 = arith.constant dense<0.000000e+00> : vector<324x324xf32>
    %267 = tpu.matmul %264, %265, %cst_93 {dimension_numbers = #tpu.dot_dimension_numbers<[0], [0], [1], [1], [0, 1, 1, 1], [], []>} : vector<4x324xf32>, vector<4x324xf32>, vector<324x324xf32> -> vector<324x324xf32>
    %cst_94 = arith.constant 5.000000e-01 : f32
    %268 = vector.broadcast %cst_94 : f32 to vector<324x324xf32>
    %269 = arith.mulf %267, %268 : vector<324x324xf32>
    %270 = vector.broadcast %242 : vector<1x324xf32> to vector<324x324xf32>
    %271 = arith.addf %269, %270 : vector<324x324xf32>
    %cst_95 = arith.constant dense<0xFF800000> : vector<324xf32>
    %272 = vector.multi_reduction <maximumf>, %271, %cst_95 [1] : vector<324x324xf32> to vector<324xf32>
    %273 = vector.shape_cast %272 : vector<324xf32> to vector<324x1xf32>
    %274 = vector.broadcast %273 : vector<324x1xf32> to vector<324x324xf32>
    %275 = arith.subf %271, %274 : vector<324x324xf32>
    %276 = math.exp %275 : vector<324x324xf32>
    %277 = tpu.concatenate %266, %243 in 0 : vector<4x324xf32>, vector<1x324xf32> -> vector<5x324xf32>
    %cst_96 = arith.constant dense<0.000000e+00> : vector<5x324xf32>
    %278 = tpu.matmul %277, %276, %cst_96 {dimension_numbers = #tpu.dot_dimension_numbers<[1], [1], [0], [0], [0, 0, 1, 0], [], []>} : vector<5x324xf32>, vector<324x324xf32>, vector<5x324xf32> -> vector<5x324xf32>
    %279 = vector.extract_strided_slice %278 {offsets = [4, 0], sizes = [1, 324], strides = [1, 1]} : vector<5x324xf32> to vector<1x324xf32>
    %280 = vector.extract_strided_slice %278 {offsets = [0, 0], sizes = [4, 324], strides = [1, 1]} : vector<5x324xf32> to vector<4x324xf32>
    %281 = tpu.reciprocal %279 {approx = true} : vector<1x324xf32> -> vector<1x324xf32>
    %282 = vector.broadcast %281 : vector<1x324xf32> to vector<4x324xf32>
    %283 = arith.mulf %280, %282 : vector<4x324xf32>
    %284 = tpu.concatenate %263, %283 in 0 : vector<4x324xf32>, vector<4x324xf32> -> vector<8x324xf32>
    %c0_97 = arith.constant 0 : index
    %c0_98 = arith.constant 0 : index
    %285 = vector.load %arg22[%c0_97, %c0_98] : memref<8x8xf32, #tpu.memory_space<vmem>>, vector<8x8xf32>
    %cst_99 = arith.constant dense<0.000000e+00> : vector<8x324xf32>
    %286 = tpu.matmul %285, %284, %cst_99 {dimension_numbers = #tpu.dot_dimension_numbers<[1], [0], [0], [1], [0, 0, 1, 1], [], []>} : vector<8x8xf32>, vector<8x324xf32>, vector<8x324xf32> -> vector<8x324xf32>
    %c0_100 = arith.constant 0 : index
    %c0_101 = arith.constant 0 : index
    %287 = vector.load %arg23[%c0_100, %c0_101] : memref<8x1xf32, #tpu.memory_space<vmem>>, vector<8x1xf32>
    %288 = vector.broadcast %287 : vector<8x1xf32> to vector<8x324xf32>
    %289 = arith.addf %286, %288 : vector<8x324xf32>
    %290 = arith.addf %289, %174 : vector<8x324xf32>
    %cst_102 = arith.constant 1.000000e+00 : f32
    %291 = vector.broadcast %cst_102 : f32 to vector<8x324xf32>
    %292 = arith.mulf %290, %291 : vector<8x324xf32>
    %c0_103 = arith.constant 0 : index
    %c0_104 = arith.constant 0 : index
    %c0_105 = arith.constant 0 : index
    %293 = vector.load %arg24[%c0_103, %c0_104, %c0_105] : memref<1x8x324xf32, #tpu.memory_space<vmem>>, vector<1x8x324xf32>
    %294 = vector.shape_cast %293 : vector<1x8x324xf32> to vector<8x324xf32>
    %295 = vector.shape_cast %292 : vector<8x324xf32> to vector<1x8x324xf32>
    tpu.vector_store %arg24[%c0_103, %c0_104, %c0_105], %295 {strides = array<i32>} : memref<1x8x324xf32, #tpu.memory_space<vmem>>, vector<1x8x324xf32>,
    return
  }
  func.func @transform_0(%arg0: i32) -> (i32, i32, i32) {
    %c0_i32 = arith.constant 0 : i32
    %c0_i32_0 = arith.constant 0 : i32
    %c0_i32_1 = arith.constant 0 : i32
    return %arg0, %c0_i32, %c0_i32_0 : i32, i32, i32
  }
  func.func @transform_1(%arg0: i32) -> (i32, i32, i32) {
    %c0_i32 = arith.constant 0 : i32
    %c0_i32_0 = arith.constant 0 : i32
    %c0_i32_1 = arith.constant 0 : i32
    return %arg0, %c0_i32, %c0_i32_0 : i32, i32, i32
  }
  func.func @transform_2(%arg0: i32) -> (i32, i32) {
    %c0_i32 = arith.constant 0 : i32
    %c0_i32_0 = arith.constant 0 : i32
    %c0_i32_1 = arith.constant 0 : i32
    return %c0_i32, %c0_i32_0 : i32, i32
  }
  func.func @transform_3(%arg0: i32) -> (i32, i32) {
    %c0_i32 = arith.constant 0 : i32
    %c0_i32_0 = arith.constant 0 : i32
    %c0_i32_1 = arith.constant 0 : i32
    return %c0_i32, %c0_i32_0 : i32, i32
  }
  func.func @transform_4(%arg0: i32) -> (i32, i32) {
    %c0_i32 = arith.constant 0 : i32
    %c0_i32_0 = arith.constant 0 : i32
    %c0_i32_1 = arith.constant 0 : i32
    return %c0_i32, %c0_i32_0 : i32, i32
  }
  func.func @transform_5(%arg0: i32) -> (i32, i32) {
    %c0_i32 = arith.constant 0 : i32
    %c0_i32_0 = arith.constant 0 : i32
    %c0_i32_1 = arith.constant 0 : i32
    return %c0_i32, %c0_i32_0 : i32, i32
  }
  func.func @transform_6(%arg0: i32) -> (i32, i32) {
    %c0_i32 = arith.constant 0 : i32
    %c0_i32_0 = arith.constant 0 : i32
    %c0_i32_1 = arith.constant 0 : i32
    return %c0_i32, %c0_i32_0 : i32, i32
  }
  func.func @transform_7(%arg0: i32) -> (i32, i32) {
    %c0_i32 = arith.constant 0 : i32
    %c0_i32_0 = arith.constant 0 : i32
    %c0_i32_1 = arith.constant 0 : i32
    return %c0_i32, %c0_i32_0 : i32, i32
  }
  func.func @transform_8(%arg0: i32) -> (i32, i32) {
    %c0_i32 = arith.constant 0 : i32
    %c0_i32_0 = arith.constant 0 : i32
    %c0_i32_1 = arith.constant 0 : i32
    return %c0_i32, %c0_i32_0 : i32, i32
  }
  func.func @transform_9(%arg0: i32) -> (i32, i32) {
    %c0_i32 = arith.constant 0 : i32
    %c0_i32_0 = arith.constant 0 : i32
    %c0_i32_1 = arith.constant 0 : i32
    return %c0_i32, %c0_i32_0 : i32, i32
  }
  func.func @transform_10(%arg0: i32) -> (i32, i32) {
    %c0_i32 = arith.constant 0 : i32
    %c0_i32_0 = arith.constant 0 : i32
    %c0_i32_1 = arith.constant 0 : i32
    return %c0_i32, %c0_i32_0 : i32, i32
  }
  func.func @transform_11(%arg0: i32) -> (i32, i32) {
    %c0_i32 = arith.constant 0 : i32
    %c0_i32_0 = arith.constant 0 : i32
    %c0_i32_1 = arith.constant 0 : i32
    return %c0_i32, %c0_i32_0 : i32, i32
  }
  func.func @transform_12(%arg0: i32) -> (i32, i32) {
    %c0_i32 = arith.constant 0 : i32
    %c0_i32_0 = arith.constant 0 : i32
    %c0_i32_1 = arith.constant 0 : i32
    return %c0_i32, %c0_i32_0 : i32, i32
  }
  func.func @transform_13(%arg0: i32) -> (i32, i32) {
    %c0_i32 = arith.constant 0 : i32
    %c0_i32_0 = arith.constant 0 : i32
    %c0_i32_1 = arith.constant 0 : i32
    return %c0_i32, %c0_i32_0 : i32, i32
  }
  func.func @transform_14(%arg0: i32) -> (i32, i32) {
    %c0_i32 = arith.constant 0 : i32
    %c0_i32_0 = arith.constant 0 : i32
    %c0_i32_1 = arith.constant 0 : i32
    return %c0_i32, %c0_i32_0 : i32, i32
  }
  func.func @transform_15(%arg0: i32) -> (i32, i32) {
    %c0_i32 = arith.constant 0 : i32
    %c0_i32_0 = arith.constant 0 : i32
    %c0_i32_1 = arith.constant 0 : i32
    return %c0_i32, %c0_i32_0 : i32, i32
  }
  func.func @transform_16(%arg0: i32) -> (i32, i32) {
    %c0_i32 = arith.constant 0 : i32
    %c0_i32_0 = arith.constant 0 : i32
    %c0_i32_1 = arith.constant 0 : i32
    return %c0_i32, %c0_i32_0 : i32, i32
  }
  func.func @transform_17(%arg0: i32) -> (i32, i32) {
    %c0_i32 = arith.constant 0 : i32
    %c0_i32_0 = arith.constant 0 : i32
    %c0_i32_1 = arith.constant 0 : i32
    return %c0_i32, %c0_i32_0 : i32, i32
  }
  func.func @transform_18(%arg0: i32) -> (i32, i32) {
    %c0_i32 = arith.constant 0 : i32
    %c0_i32_0 = arith.constant 0 : i32
    %c0_i32_1 = arith.constant 0 : i32
    return %c0_i32, %c0_i32_0 : i32, i32
  }
  func.func @transform_19(%arg0: i32) -> (i32, i32) {
    %c0_i32 = arith.constant 0 : i32
    %c0_i32_0 = arith.constant 0 : i32
    %c0_i32_1 = arith.constant 0 : i32
    return %c0_i32, %c0_i32_0 : i32, i32
  }
  func.func @transform_20(%arg0: i32) -> (i32, i32) {
    %c0_i32 = arith.constant 0 : i32
    %c0_i32_0 = arith.constant 0 : i32
    %c0_i32_1 = arith.constant 0 : i32
    return %c0_i32, %c0_i32_0 : i32, i32
  }
  func.func @transform_21(%arg0: i32) -> (i32, i32) {
    %c0_i32 = arith.constant 0 : i32
    %c0_i32_0 = arith.constant 0 : i32
    %c0_i32_1 = arith.constant 0 : i32
    return %c0_i32, %c0_i32_0 : i32, i32
  }
  func.func @transform_22(%arg0: i32) -> (i32, i32) {
    %c0_i32 = arith.constant 0 : i32
    %c0_i32_0 = arith.constant 0 : i32
    %c0_i32_1 = arith.constant 0 : i32
    return %c0_i32, %c0_i32_0 : i32, i32
  }
  func.func @transform_23(%arg0: i32) -> (i32, i32, i32) {
    %c0_i32 = arith.constant 0 : i32
    %c0_i32_0 = arith.constant 0 : i32
    %c0_i32_1 = arith.constant 0 : i32
    return %arg0, %c0_i32, %c0_i32_0 : i32, i32, i32
  }
}

</mosaic_0001>

<llo_original>
// kernel: unet_block_forward.1
$region0: #{unet_block_forward.1}
  #allocation0 [shape = 'u32[]', space=smem, size = 0x4, offset = 0x4, fixed_abs, tag = 'smem constant byte address 0x4 - core index']
  #allocation1 [shape = 'u32[72,128]{1,0:T(1,128)}', space=vmem, size = 0x9000, scoped, tag = 'internal scratch']
  %s0 = inlined_call_operand.vmem [shape: f32[2,4,400], index: 0, kind: input, shape index: {}]
  %s1 = inlined_call_operand.vmem [shape: f32[2,32,1], index: 1, kind: input, shape index: {}]
  %s2 = inlined_call_operand.vmem [shape: f32[1,400], index: 2, kind: input, shape index: {}]
  %s3 = inlined_call_operand.vmem [shape: f32[1,362], index: 3, kind: input, shape index: {}]
  %s4 = inlined_call_operand.vmem [shape: f32[1,324], index: 4, kind: input, shape index: {}]
  %s5 = inlined_call_operand.vmem [shape: f32[4,1], index: 5, kind: input, shape index: {}]
  %s6 = inlined_call_operand.vmem [shape: f32[4,1], index: 6, kind: input, shape index: {}]
  %s7 = inlined_call_operand.vmem [shape: f32[72,4], index: 7, kind: input, shape index: {}]
  %s8 = inlined_call_operand.vmem [shape: f32[8,1], index: 8, kind: input, shape index: {}]
  %s9 = inlined_call_operand.vmem [shape: f32[16,32], index: 9, kind: input, shape index: {}]
  %s10 = inlined_call_operand.vmem [shape: f32[16,1], index: 10, kind: input, shape index: {}]
  %s11 = inlined_call_operand.vmem [shape: f32[8,1], index: 11, kind: input, shape index: {}]
  %s12 = inlined_call_operand.vmem [shape: f32[8,1], index: 12, kind: input, shape index: {}]
  %s13 = inlined_call_operand.vmem [shape: f32[72,8], index: 13, kind: input, shape index: {}]
  %s14 = inlined_call_operand.vmem [shape: f32[8,1], index: 14, kind: input, shape index: {}]
  %s15 = inlined_call_operand.vmem [shape: f32[8,4], index: 15, kind: input, shape index: {}]
  %s16 = inlined_call_operand.vmem [shape: f32[8,1], index: 16, kind: input, shape index: {}]
  %s17 = inlined_call_operand.vmem [shape: f32[8,1], index: 17, kind: input, shape index: {}]
  %s18 = inlined_call_operand.vmem [shape: f32[8,1], index: 18, kind: input, shape index: {}]
  %s19 = inlined_call_operand.vmem [shape: f32[24,8], index: 19, kind: input, shape index: {}]
  %s20 = inlined_call_operand.vmem [shape: f32[24,1], index: 20, kind: input, shape index: {}]
  %s21 = inlined_call_operand.vmem [shape: f32[8,8], index: 21, kind: input, shape index: {}]
  %s22 = inlined_call_operand.vmem [shape: f32[8,1], index: 22, kind: input, shape index: {}]
  %s23 = inlined_call_operand.vmem [shape: f32[2,8,324], index: 23, kind: output, shape index: {}]
  %s24 = sld [smem:[#allocation0]]
  $region125: #{unet_block_forward.1} parent=0
    _
  %s26 = ssub.s32 1, %s24
  %s27 = scalar_select 0, %s26, %s24
  loop: start=0, step=1, limit=4
  $region2: #{unet_block_forward.1} parent=0 // loop_pre_header
    _
  $region3: #{unet_block_forward.1} parent=0 // loop_header
    %s29 = sphi 0, %s33
    %p30 = scmp.ge.s32.totalorder %s29, 4
    %s39 = sphi 0, %s41
    %s42 = sphi 0, %s39
    %s43 = sphi 0, %s42
    %s59 = sphi 0, %s43
    %s65 = sphi 0, %s67
    %s68 = sphi 0, %s65
    %s69 = sphi 0, %s68
    %s85 = sphi 0, %s69
    %s89 = sphi 0, %s89
    %s91 = sphi 0, %s89
    %s92 = sphi 0, %s91
    %s106 = sphi 0, %s92
    %s110 = sphi 0, %s110
    %s112 = sphi 0, %s110
    %s113 = sphi 0, %s112
    %s127 = sphi 0, %s113
    %s131 = sphi 0, %s131
    %s133 = sphi 0, %s131
    %s134 = sphi 0, %s133
    %s148 = sphi 0, %s134
    %s152 = sphi 0, %s152
    %s154 = sphi 0, %s152
    %s155 = sphi 0, %s154
    %s169 = sphi 0, %s155
    %s173 = sphi 0, %s173
    %s175 = sphi 0, %s173
    %s176 = sphi 0, %s175
    %s190 = sphi 0, %s176
    %s194 = sphi 0, %s194
    %s196 = sphi 0, %s194
    %s197 = sphi 0, %s196
    %s211 = sphi 0, %s197
    %s215 = sphi 0, %s215
    %s217 = sphi 0, %s215
    %s218 = sphi 0, %s217
    %s232 = sphi 0, %s218
    %s236 = sphi 0, %s236
    %s238 = sphi 0, %s236
    %s239 = sphi 0, %s238
    %s253 = sphi 0, %s239
    %s257 = sphi 0, %s257
    %s259 = sphi 0, %s257
    %s260 = sphi 0, %s259
    %s274 = sphi 0, %s260
    %s278 = sphi 0, %s278
    %s280 = sphi 0, %s278
    %s281 = sphi 0, %s280
    %s295 = sphi 0, %s281
    %s299 = sphi 0, %s299
    %s301 = sphi 0, %s299
    %s302 = sphi 0, %s301
    %s316 = sphi 0, %s302
    %s320 = sphi 0, %s320
    %s322 = sphi 0, %s320
    %s323 = sphi 0, %s322
    %s337 = sphi 0, %s323
    %s341 = sphi 0, %s341
    %s343 = sphi 0, %s341
    %s344 = sphi 0, %s343
    %s358 = sphi 0, %s344
    %s362 = sphi 0, %s362
    %s364 = sphi 0, %s362
    %s365 = sphi 0, %s364
    %s379 = sphi 0, %s365
    %s383 = sphi 0, %s383
    %s385 = sphi 0, %s383
    %s386 = sphi 0, %s385
    %s400 = sphi 0, %s386
    %s404 = sphi 0, %s404
    %s406 = sphi 0, %s404
    %s407 = sphi 0, %s406
    %s421 = sphi 0, %s407
    %s425 = sphi 0, %s425
    %s427 = sphi 0, %s425
    %s428 = sphi 0, %s427
    %s442 = sphi 0, %s428
    %s446 = sphi 0, %s446
    %s448 = sphi 0, %s446
    %s449 = sphi 0, %s448
    %s463 = sphi 0, %s449
    %s467 = sphi 0, %s467
    %s469 = sphi 0, %s467
    %s470 = sphi 0, %s469
    %s484 = sphi 0, %s470
    %s488 = sphi 0, %s488
    %s490 = sphi 0, %s488
    %s491 = sphi 0, %s490
    %s505 = sphi 0, %s491
    %s509 = sphi 0, %s509
    %s511 = sphi 0, %s509
    %s512 = sphi 0, %s511
    %s526 = sphi 0, %s512
    %s532 = sphi 0, %s534
    %s535 = sphi 0, %s532
    %s536 = sphi 0, %s535
    %s552 = sphi 0, %s536
  $region4: #{unet_block_forward.1} parent=0 // loop_header_branch
    %32 = sbr.rel (%p30) target = $region8
  $region5: #{unet_block_forward.1} parent=0 // loop_body
    %s34 = ssub.s32 %s29, 1
    %s35 = ssub.s32 %s29, 2
    %s36 = sadd.s32 %s29, 1
    %s37 = ssub.s32 %s29, %s36
    %p38 = scmp.eq.s32.totalorder %s37, 0
    %s40 = sadd.s32 %s39, 1
    %s41 = scalar_select %p38, %s39, %s40
    %p44 = pneg %p38
    %p45 = scmp.eq.s32.totalorder %s29, 1
    %p46 = por %p44, %p45
    %p47 = scmp.ne.s32.totalorder %s39, %s42
    %p48 = scmp.eq.s32.totalorder %s29, 0
    %p49 = por %p47, %p48
    %p50 = scmp.ne.s32.totalorder %s39, %s42
    %p51 = scmp.eq.s32.totalorder %s34, 1
    %p52 = por %p50, %p51
    %p53 = scmp.ne.s32.totalorder %s42, %s43
    %p54 = scmp.eq.s32.totalorder %s34, 0
    %p55 = por %p53, %p54
    %p56 = scmp.ne.s32.totalorder %s42, %s43
    %p57 = scmp.eq.s32.totalorder %s35, 1
    %p58 = por %p56, %p57
    %p60 = scmp.ne.s32.totalorder %s43, %s59
    %p61 = scmp.eq.s32.totalorder %s35, 0
    %p62 = por %p60, %p61
    %s63 = ssub.s32 %s29, %s36
    %p64 = scmp.eq.s32.totalorder %s63, 0
    %s66 = sadd.s32 %s65, 1
    %s67 = scalar_select %p64, %s65, %s66
    %p70 = pneg %p64
    %p71 = scmp.eq.s32.totalorder %s29, 1
    %p72 = por %p70, %p71
    %p73 = scmp.ne.s32.totalorder %s65, %s68
    %p74 = scmp.eq.s32.totalorder %s29, 0
    %p75 = por %p73, %p74
    %p76 = scmp.ne.s32.totalorder %s65, %s68
    %p77 = scmp.eq.s32.totalorder %s34, 1
    %p78 = por %p76, %p77
    %p79 = scmp.ne.s32.totalorder %s68, %s69
    %p80 = scmp.eq.s32.totalorder %s34, 0
    %p81 = por %p79, %p80
    %p82 = scmp.ne.s32.totalorder %s68, %s69
    %p83 = scmp.eq.s32.totalorder %s35, 1
    %p84 = por %p82, %p83
    %p86 = scmp.ne.s32.totalorder %s69, %s85
    %p87 = scmp.eq.s32.totalorder %s35, 0
    %p88 = por %p86, %p87
    %s90 = sadd.s32 %s89, 1
    %p93 = scmp.eq.s32.totalorder %s29, 1
    %p94 = scmp.ne.s32.totalorder %s89, %s91
    %p95 = scmp.eq.s32.totalorder %s29, 0
    %p96 = por %p94, %p95
    %p97 = scmp.ne.s32.totalorder %s89, %s91
    %p98 = scmp.eq.s32.totalorder %s34, 1
    %p99 = por %p97, %p98
    %p100 = scmp.ne.s32.totalorder %s91, %s92
    %p101 = scmp.eq.s32.totalorder %s34, 0
    %p102 = por %p100, %p101
    %p103 = scmp.ne.s32.totalorder %s91, %s92
    %p104 = scmp.eq.s32.totalorder %s35, 1
    %p105 = por %p103, %p104
    %p107 = scmp.ne.s32.totalorder %s92, %s106
    %p108 = scmp.eq.s32.totalorder %s35, 0
    %p109 = por %p107, %p108
    %s111 = sadd.s32 %s110, 1
    %p114 = scmp.eq.s32.totalorder %s29, 1
    %p115 = scmp.ne.s32.totalorder %s110, %s112
    %p116 = scmp.eq.s32.totalorder %s29, 0
    %p117 = por %p115, %p116
    %p118 = scmp.ne.s32.totalorder %s110, %s112
    %p119 = scmp.eq.s32.totalorder %s34, 1
    %p120 = por %p118, %p119
    %p121 = scmp.ne.s32.totalorder %s112, %s113
    %p122 = scmp.eq.s32.totalorder %s34, 0
    %p123 = por %p121, %p122
    %p124 = scmp.ne.s32.totalorder %s112, %s113
    %p125 = scmp.eq.s32.totalorder %s35, 1
    %p126 = por %p124, %p125
    %p128 = scmp.ne.s32.totalorder %s113, %s127
    %p129 = scmp.eq.s32.totalorder %s35, 0
    %p130 = por %p128, %p129
    %s132 = sadd.s32 %s131, 1
    %p135 = scmp.eq.s32.totalorder %s29, 1
    %p136 = scmp.ne.s32.totalorder %s131, %s133
    %p137 = scmp.eq.s32.totalorder %s29, 0
    %p138 = por %p136, %p137
    %p139 = scmp.ne.s32.totalorder %s131, %s133
    %p140 = scmp.eq.s32.totalorder %s34, 1
    %p141 = por %p139, %p140
    %p142 = scmp.ne.s32.totalorder %s133, %s134
    %p143 = scmp.eq.s32.totalorder %s34, 0
    %p144 = por %p142, %p143
    %p145 = scmp.ne.s32.totalorder %s133, %s134
    %p146 = scmp.eq.s32.totalorder %s35, 1
    %p147 = por %p145, %p146
    %p149 = scmp.ne.s32.totalorder %s134, %s148
    %p150 = scmp.eq.s32.totalorder %s35, 0
    %p151 = por %p149, %p150
    %s153 = sadd.s32 %s152, 1
    %p156 = scmp.eq.s32.totalorder %s29, 1
    %p157 = scmp.ne.s32.totalorder %s152, %s154
    %p158 = scmp.eq.s32.totalorder %s29, 0
    %p159 = por %p157, %p158
    %p160 = scmp.ne.s32.totalorder %s152, %s154
    %p161 = scmp.eq.s32.totalorder %s34, 1
    %p162 = por %p160, %p161
    %p163 = scmp.ne.s32.totalorder %s154, %s155
    %p164 = scmp.eq.s32.totalorder %s34, 0
    %p165 = por %p163, %p164
    %p166 = scmp.ne.s32.totalorder %s154, %s155
    %p167 = scmp.eq.s32.totalorder %s35, 1
    %p168 = por %p166, %p167
    %p170 = scmp.ne.s32.totalorder %s155, %s169
    %p171 = scmp.eq.s32.totalorder %s35, 0
    %p172 = por %p170, %p171
    %s174 = sadd.s32 %s173, 1
    %p177 = scmp.eq.s32.totalorder %s29, 1
    %p178 = scmp.ne.s32.totalorder %s173, %s175
    %p179 = scmp.eq.s32.totalorder %s29, 0
    %p180 = por %p178, %p179
    %p181 = scmp.ne.s32.totalorder %s173, %s175
    %p182 = scmp.eq.s32.totalorder %s34, 1
    %p183 = por %p181, %p182
    %p184 = scmp.ne.s32.totalorder %s175, %s176
    %p185 = scmp.eq.s32.totalorder %s34, 0
    %p186 = por %p184, %p185
    %p187 = scmp.ne.s32.totalorder %s175, %s176
    %p188 = scmp.eq.s32.totalorder %s35, 1
    %p189 = por %p187, %p188
    %p191 = scmp.ne.s32.totalorder %s176, %s190
    %p192 = scmp.eq.s32.totalorder %s35, 0
    %p193 = por %p191, %p192
    %s195 = sadd.s32 %s194, 1
    %p198 = scmp.eq.s32.totalorder %s29, 1
    %p199 = scmp.ne.s32.totalorder %s194, %s196
    %p200 = scmp.eq.s32.totalorder %s29, 0
    %p201 = por %p199, %p200
    %p202 = scmp.ne.s32.totalorder %s194, %s196
    %p203 = scmp.eq.s32.totalorder %s34, 1
    %p204 = por %p202, %p203
    %p205 = scmp.ne.s32.totalorder %s196, %s197
    %p206 = scmp.eq.s32.totalorder %s34, 0
    %p207 = por %p205, %p206
    %p208 = scmp.ne.s32.totalorder %s196, %s197
    %p209 = scmp.eq.s32.totalorder %s35, 1
    %p210 = por %p208, %p209
    %p212 = scmp.ne.s32.totalorder %s197, %s211
    %p213 = scmp.eq.s32.totalorder %s35, 0
    %p214 = por %p212, %p213
    %s216 = sadd.s32 %s215, 1
    %p219 = scmp.eq.s32.totalorder %s29, 1
    %p220 = scmp.ne.s32.totalorder %s215, %s217
    %p221 = scmp.eq.s32.totalorder %s29, 0
    %p222 = por %p220, %p221
    %p223 = scmp.ne.s32.totalorder %s215, %s217
    %p224 = scmp.eq.s32.totalorder %s34, 1
    %p225 = por %p223, %p224
    %p226 = scmp.ne.s32.totalorder %s217, %s218
    %p227 = scmp.eq.s32.totalorder %s34, 0
    %p228 = por %p226, %p227
    %p229 = scmp.ne.s32.totalorder %s217, %s218
    %p230 = scmp.eq.s32.totalorder %s35, 1
    %p231 = por %p229, %p230
    %p233 = scmp.ne.s32.totalorder %s218, %s232
    %p234 = scmp.eq.s32.totalorder %s35, 0
    %p235 = por %p233, %p234
    %s237 = sadd.s32 %s236, 1
    %p240 = scmp.eq.s32.totalorder %s29, 1
    %p241 = scmp.ne.s32.totalorder %s236, %s238
    %p242 = scmp.eq.s32.totalorder %s29, 0
    %p243 = por %p241, %p242
    %p244 = scmp.ne.s32.totalorder %s236, %s238
    %p245 = scmp.eq.s32.totalorder %s34, 1
    %p246 = por %p244, %p245
    %p247 = scmp.ne.s32.totalorder %s238, %s239
    %p248 = scmp.eq.s32.totalorder %s34, 0
    %p249 = por %p247, %p248
    %p250 = scmp.ne.s32.totalorder %s238, %s239
    %p251 = scmp.eq.s32.totalorder %s35, 1
    %p252 = por %p250, %p251
    %p254 = scmp.ne.s32.totalorder %s239, %s253
    %p255 = scmp.eq.s32.totalorder %s35, 0
    %p256 = por %p254, %p255
    %s258 = sadd.s32 %s257, 1
    %p261 = scmp.eq.s32.totalorder %s29, 1
    %p262 = scmp.ne.s32.totalorder %s257, %s259
    %p263 = scmp.eq.s32.totalorder %s29, 0
    %p264 = por %p262, %p263
    %p265 = scmp.ne.s32.totalorder %s257, %s259
    %p266 = scmp.eq.s32.totalorder %s34, 1
    %p267 = por %p265, %p266
    %p268 = scmp.ne.s32.totalorder %s259, %s260
    %p269 = scmp.eq.s32.totalorder %s34, 0
    %p270 = por %p268, %p269
    %p271 = scmp.ne.s32.totalorder %s259, %s260
    %p272 = scmp.eq.s32.totalorder %s35, 1
    %p273 = por %p271, %p272
    %p275 = scmp.ne.s32.totalorder %s260, %s274
    %p276 = scmp.eq.s32.totalorder %s35, 0
    %p277 = por %p275, %p276
    %s279 = sadd.s32 %s278, 1
    %p282 = scmp.eq.s32.totalorder %s29, 1
    %p283 = scmp.ne.s32.totalorder %s278, %s280
    %p284 = scmp.eq.s32.totalorder %s29, 0
    %p285 = por %p283, %p284
    %p286 = scmp.ne.s32.totalorder %s278, %s280
    %p287 = scmp.eq.s32.totalorder %s34, 1
    %p288 = por %p286, %p287
    %p289 = scmp.ne.s32.totalorder %s280, %s281
    %p290 = scmp.eq.s32.totalorder %s34, 0
    %p291 = por %p289, %p290
    %p292 = scmp.ne.s32.totalorder %s280, %s281
    %p293 = scmp.eq.s32.totalorder %s35, 1
    %p294 = por %p292, %p293
    %p296 = scmp.ne.s32.totalorder %s281, %s295
    %p297 = scmp.eq.s32.totalorder %s35, 0
    %p298 = por %p296, %p297
    %s300 = sadd.s32 %s299, 1
    %p303 = scmp.eq.s32.totalorder %s29, 1
    %p304 = scmp.ne.s32.totalorder %s299, %s301
    %p305 = scmp.eq.s32.totalorder %s29, 0
    %p306 = por %p304, %p305
    %p307 = scmp.ne.s32.totalorder %s299, %s301
    %p308 = scmp.eq.s32.totalorder %s34, 1
    %p309 = por %p307, %p308
    %p310 = scmp.ne.s32.totalorder %s301, %s302
    %p311 = scmp.eq.s32.totalorder %s34, 0
    %p312 = por %p310, %p311
    %p313 = scmp.ne.s32.totalorder %s301, %s302
    %p314 = scmp.eq.s32.totalorder %s35, 1
    %p315 = por %p313, %p314
    %p317 = scmp.ne.s32.totalorder %s302, %s316
    %p318 = scmp.eq.s32.totalorder %s35, 0
    %p319 = por %p317, %p318
    %s321 = sadd.s32 %s320, 1
    %p324 = scmp.eq.s32.totalorder %s29, 1
    %p325 = scmp.ne.s32.totalorder %s320, %s322
    %p326 = scmp.eq.s32.totalorder %s29, 0
    %p327 = por %p325, %p326
    %p328 = scmp.ne.s32.totalorder %s320, %s322
    %p329 = scmp.eq.s32.totalorder %s34, 1
    %p330 = por %p328, %p329
    %p331 = scmp.ne.s32.totalorder %s322, %s323
    %p332 = scmp.eq.s32.totalorder %s34, 0
    %p333 = por %p331, %p332
    %p334 = scmp.ne.s32.totalorder %s322, %s323
    %p335 = scmp.eq.s32.totalorder %s35, 1
    %p336 = por %p334, %p335
    %p338 = scmp.ne.s32.totalorder %s323, %s337
    %p339 = scmp.eq.s32.totalorder %s35, 0
    %p340 = por %p338, %p339
    %s342 = sadd.s32 %s341, 1
    %p345 = scmp.eq.s32.totalorder %s29, 1
    %p346 = scmp.ne.s32.totalorder %s341, %s343
    %p347 = scmp.eq.s32.totalorder %s29, 0
    %p348 = por %p346, %p347
    %p349 = scmp.ne.s32.totalorder %s341, %s343
    %p350 = scmp.eq.s32.totalorder %s34, 1
    %p351 = por %p349, %p350
    %p352 = scmp.ne.s32.totalorder %s343, %s344
    %p353 = scmp.eq.s32.totalorder %s34, 0
    %p354 = por %p352, %p353
    %p355 = scmp.ne.s32.totalorder %s343, %s344
    %p356 = scmp.eq.s32.totalorder %s35, 1
    %p357 = por %p355, %p356
    %p359 = scmp.ne.s32.totalorder %s344, %s358
    %p360 = scmp.eq.s32.totalorder %s35, 0
    %p361 = por %p359, %p360
    %s363 = sadd.s32 %s362, 1
    %p366 = scmp.eq.s32.totalorder %s29, 1
    %p367 = scmp.ne.s32.totalorder %s362, %s364
    %p368 = scmp.eq.s32.totalorder %s29, 0
    %p369 = por %p367, %p368
    %p370 = scmp.ne.s32.totalorder %s362, %s364
    %p371 = scmp.eq.s32.totalorder %s34, 1
    %p372 = por %p370, %p371
    %p373 = scmp.ne.s32.totalorder %s364, %s365
    %p374 = scmp.eq.s32.totalorder %s34, 0
    %p375 = por %p373, %p374
    %p376 = scmp.ne.s32.totalorder %s364, %s365
    %p377 = scmp.eq.s32.totalorder %s35, 1
    %p378 = por %p376, %p377
    %p380 = scmp.ne.s32.totalorder %s365, %s379
    %p381 = scmp.eq.s32.totalorder %s35, 0
    %p382 = por %p380, %p381
    %s384 = sadd.s32 %s383, 1
    %p387 = scmp.eq.s32.totalorder %s29, 1
    %p388 = scmp.ne.s32.totalorder %s383, %s385
    %p389 = scmp.eq.s32.totalorder %s29, 0
    %p390 = por %p388, %p389
    %p391 = scmp.ne.s32.totalorder %s383, %s385
    %p392 = scmp.eq.s32.totalorder %s34, 1
    %p393 = por %p391, %p392
    %p394 = scmp.ne.s32.totalorder %s385, %s386
    %p395 = scmp.eq.s32.totalorder %s34, 0
    %p396 = por %p394, %p395
    %p397 = scmp.ne.s32.totalorder %s385, %s386
    %p398 = scmp.eq.s32.totalorder %s35, 1
    %p399 = por %p397, %p398
    %p401 = scmp.ne.s32.totalorder %s386, %s400
    %p402 = scmp.eq.s32.totalorder %s35, 0
    %p403 = por %p401, %p402
    %s405 = sadd.s32 %s404, 1
    %p408 = scmp.eq.s32.totalorder %s29, 1
    %p409 = scmp.ne.s32.totalorder %s404, %s406
    %p410 = scmp.eq.s32.totalorder %s29, 0
    %p411 = por %p409, %p410
    %p412 = scmp.ne.s32.totalorder %s404, %s406
    %p413 = scmp.eq.s32.totalorder %s34, 1
    %p414 = por %p412, %p413
    %p415 = scmp.ne.s32.totalorder %s406, %s407
    %p416 = scmp.eq.s32.totalorder %s34, 0
    %p417 = por %p415, %p416
    %p418 = scmp.ne.s32.totalorder %s406, %s407
    %p419 = scmp.eq.s32.totalorder %s35, 1
    %p420 = por %p418, %p419
    %p422 = scmp.ne.s32.totalorder %s407, %s421
    %p423 = scmp.eq.s32.totalorder %s35, 0
    %p424 = por %p422, %p423
    %s426 = sadd.s32 %s425, 1
    %p429 = scmp.eq.s32.totalorder %s29, 1
    %p430 = scmp.ne.s32.totalorder %s425, %s427
    %p431 = scmp.eq.s32.totalorder %s29, 0
    %p432 = por %p430, %p431
    %p433 = scmp.ne.s32.totalorder %s425, %s427
    %p434 = scmp.eq.s32.totalorder %s34, 1
    %p435 = por %p433, %p434
    %p436 = scmp.ne.s32.totalorder %s427, %s428
    %p437 = scmp.eq.s32.totalorder %s34, 0
    %p438 = por %p436, %p437
    %p439 = scmp.ne.s32.totalorder %s427, %s428
    %p440 = scmp.eq.s32.totalorder %s35, 1
    %p441 = por %p439, %p440
    %p443 = scmp.ne.s32.totalorder %s428, %s442
    %p444 = scmp.eq.s32.totalorder %s35, 0
    %p445 = por %p443, %p444
    %s447 = sadd.s32 %s446, 1
    %p450 = scmp.eq.s32.totalorder %s29, 1
    %p451 = scmp.ne.s32.totalorder %s446, %s448
    %p452 = scmp.eq.s32.totalorder %s29, 0
    %p453 = por %p451, %p452
    %p454 = scmp.ne.s32.totalorder %s446, %s448
    %p455 = scmp.eq.s32.totalorder %s34, 1
    %p456 = por %p454, %p455
    %p457 = scmp.ne.s32.totalorder %s448, %s449
    %p458 = scmp.eq.s32.totalorder %s34, 0
    %p459 = por %p457, %p458
    %p460 = scmp.ne.s32.totalorder %s448, %s449
    %p461 = scmp.eq.s32.totalorder %s35, 1
    %p462 = por %p460, %p461
    %p464 = scmp.ne.s32.totalorder %s449, %s463
    %p465 = scmp.eq.s32.totalorder %s35, 0
    %p466 = por %p464, %p465
    %s468 = sadd.s32 %s467, 1
    %p471 = scmp.eq.s32.totalorder %s29, 1
    %p472 = scmp.ne.s32.totalorder %s467, %s469
    %p473 = scmp.eq.s32.totalorder %s29, 0
    %p474 = por %p472, %p473
    %p475 = scmp.ne.s32.totalorder %s467, %s469
    %p476 = scmp.eq.s32.totalorder %s34, 1
    %p477 = por %p475, %p476
    %p478 = scmp.ne.s32.totalorder %s469, %s470
    %p479 = scmp.eq.s32.totalorder %s34, 0
    %p480 = por %p478, %p479
    %p481 = scmp.ne.s32.totalorder %s469, %s470
    %p482 = scmp.eq.s32.totalorder %s35, 1
    %p483 = por %p481, %p482
    %p485 = scmp.ne.s32.totalorder %s470, %s484
    %p486 = scmp.eq.s32.totalorder %s35, 0
    %p487 = por %p485, %p486
    %s489 = sadd.s32 %s488, 1
    %p492 = scmp.eq.s32.totalorder %s29, 1
    %p493 = scmp.ne.s32.totalorder %s488, %s490
    %p494 = scmp.eq.s32.totalorder %s29, 0
    %p495 = por %p493, %p494
    %p496 = scmp.ne.s32.totalorder %s488, %s490
    %p497 = scmp.eq.s32.totalorder %s34, 1
    %p498 = por %p496, %p497
    %p499 = scmp.ne.s32.totalorder %s490, %s491
    %p500 = scmp.eq.s32.totalorder %s34, 0
    %p501 = por %p499, %p500
    %p502 = scmp.ne.s32.totalorder %s490, %s491
    %p503 = scmp.eq.s32.totalorder %s35, 1
    %p504 = por %p502, %p503
    %p506 = scmp.ne.s32.totalorder %s491, %s505
    %p507 = scmp.eq.s32.totalorder %s35, 0
    %p508 = por %p506, %p507
    %s510 = sadd.s32 %s509, 1
    %p513 = scmp.eq.s32.totalorder %s29, 1
    %p514 = scmp.ne.s32.totalorder %s509, %s511
    %p515 = scmp.eq.s32.totalorder %s29, 0
    %p516 = por %p514, %p515
    %p517 = scmp.ne.s32.totalorder %s509, %s511
    %p518 = scmp.eq.s32.totalorder %s34, 1
    %p519 = por %p517, %p518
    %p520 = scmp.ne.s32.totalorder %s511, %s512
    %p521 = scmp.eq.s32.totalorder %s34, 0
    %p522 = por %p520, %p521
    %p523 = scmp.ne.s32.totalorder %s511, %s512
    %p524 = scmp.eq.s32.totalorder %s35, 1
    %p525 = por %p523, %p524
    %p527 = scmp.ne.s32.totalorder %s512, %s526
    %p528 = scmp.eq.s32.totalorder %s35, 0
    %p529 = por %p527, %p528
    %s530 = ssub.s32 %s29, %s36
    %p531 = scmp.eq.s32.totalorder %s530, 0
    %s533 = sadd.s32 %s532, 1
    %s534 = scalar_select %p531, %s532, %s533
    %p537 = pneg %p531
    %p538 = scmp.eq.s32.totalorder %s29, 1
    %p539 = por %p537, %p538
    %p540 = scmp.ne.s32.totalorder %s532, %s535
    %p541 = scmp.eq.s32.totalorder %s29, 0
    %p542 = por %p540, %p541
    %p543 = scmp.ne.s32.totalorder %s532, %s535
    %p544 = scmp.eq.s32.totalorder %s34, 1
    %p545 = por %p543, %p544
    %p546 = scmp.ne.s32.totalorder %s535, %s536
    %p547 = scmp.eq.s32.totalorder %s34, 0
    %p548 = por %p546, %p547
    %p549 = scmp.ne.s32.totalorder %s535, %s536
    %p550 = scmp.eq.s32.totalorder %s35, 1
    %p551 = por %p549, %p550
    %p553 = scmp.ne.s32.totalorder %s536, %s552
    %p554 = scmp.eq.s32.totalorder %s35, 0
    %p555 = por %p553, %p554
    %p556 = scmp.le.s32.totalorder 1, %s29
    %p557 = scmp.lt.s32.totalorder %s29, 3
    %p558 = pnand %p556, %p557
    %p559 = pneg %p558
    // Predicated region
    $region9: #{unet_block_forward.1} parent=5 // pred_check
      _
    $region10: #{unet_block_forward.1} parent=5 // pred_check_branch
      %561 = sbr.rel (%p558) target = $region12
    $region11: #{unet_block_forward.1} parent=5 // pred_region
      %s562 = ssub.s32 %s29, 1
      // Predicated region
      $region13: #{unet_block_forward.1} parent=11 // pred_check
        %p563 = pneg %p102
      $region14: #{unet_block_forward.1} parent=11 // pred_check_branch
        %565 = sbr.rel (%p563) target = $region16
      $region15: #{unet_block_forward.1} parent=11 // pred_region
        _
      $region16: #{unet_block_forward.1} parent=11 // pred_fallthru
        _
      // Predicated region
      $region17: #{unet_block_forward.1} parent=11 // pred_check
        %p566 = pneg %p123
      $region18: #{unet_block_forward.1} parent=11 // pred_check_branch
        %568 = sbr.rel (%p566) target = $region20
      $region19: #{unet_block_forward.1} parent=11 // pred_region
        _
      $region20: #{unet_block_forward.1} parent=11 // pred_fallthru
        _
      // Predicated region
      $region21: #{unet_block_forward.1} parent=11 // pred_check
        %p569 = pneg %p144
      $region22: #{unet_block_forward.1} parent=11 // pred_check_branch
        %571 = sbr.rel (%p569) target = $region24
      $region23: #{unet_block_forward.1} parent=11 // pred_region
        _
      $region24: #{unet_block_forward.1} parent=11 // pred_fallthru
        _
      // Predicated region
      $region25: #{unet_block_forward.1} parent=11 // pred_check
        %p572 = pneg %p165
      $region26: #{unet_block_forward.1} parent=11 // pred_check_branch
        %574 = sbr.rel (%p572) target = $region28
      $region27: #{unet_block_forward.1} parent=11 // pred_region
        _
      $region28: #{unet_block_forward.1} parent=11 // pred_fallthru
        _
      // Predicated region
      $region29: #{unet_block_forward.1} parent=11 // pred_check
        %p575 = pneg %p186
      $region30: #{unet_block_forward.1} parent=11 // pred_check_branch
        %577 = sbr.rel (%p575) target = $region32
      $region31: #{unet_block_forward.1} parent=11 // pred_region
        _
      $region32: #{unet_block_forward.1} parent=11 // pred_fallthru
        _
      // Predicated region
      $region33: #{unet_block_forward.1} parent=11 // pred_check
        %p578 = pneg %p207
      $region34: #{unet_block_forward.1} parent=11 // pred_check_branch
        %580 = sbr.rel (%p578) target = $region36
      $region35: #{unet_block_forward.1} parent=11 // pred_region
        _
      $region36: #{unet_block_forward.1} parent=11 // pred_fallthru
        _
      // Predicated region
      $region37: #{unet_block_forward.1} parent=11 // pred_check
        %p581 = pneg %p228
      $region38: #{unet_block_forward.1} parent=11 // pred_check_branch
        %583 = sbr.rel (%p581) target = $region40
      $region39: #{unet_block_forward.1} parent=11 // pred_region
        _
      $region40: #{unet_block_forward.1} parent=11 // pred_fallthru
        _
      // Predicated region
      $region41: #{unet_block_forward.1} parent=11 // pred_check
        %p584 = pneg %p249
      $region42: #{unet_block_forward.1} parent=11 // pred_check_branch
        %586 = sbr.rel (%p584) target = $region44
      $region43: #{unet_block_forward.1} parent=11 // pred_region
        _
      $region44: #{unet_block_forward.1} parent=11 // pred_fallthru
        _
      // Predicated region
      $region45: #{unet_block_forward.1} parent=11 // pred_check
        %p587 = pneg %p270
      $region46: #{unet_block_forward.1} parent=11 // pred_check_branch
        %589 = sbr.rel (%p587) target = $region48
      $region47: #{unet_block_forward.1} parent=11 // pred_region
        _
      $region48: #{unet_block_forward.1} parent=11 // pred_fallthru
        _
      // Predicated region
      $region49: #{unet_block_forward.1} parent=11 // pred_check
        %p590 = pneg %p291
      $region50: #{unet_block_forward.1} parent=11 // pred_check_branch
        %592 = sbr.rel (%p590) target = $region52
      $region51: #{unet_block_forward.1} parent=11 // pred_region
        _
      $region52: #{unet_block_forward.1} parent=11 // pred_fallthru
        _
      // Predicated region
      $region53: #{unet_block_forward.1} parent=11 // pred_check
        %p593 = pneg %p312
      $region54: #{unet_block_forward.1} parent=11 // pred_check_branch
        %595 = sbr.rel (%p593) target = $region56
      $region55: #{unet_block_forward.1} parent=11 // pred_region
        _
      $region56: #{unet_block_forward.1} parent=11 // pred_fallthru
        _
      // Predicated region
      $region57: #{unet_block_forward.1} parent=11 // pred_check
        %p596 = pneg %p333
      $region58: #{unet_block_forward.1} parent=11 // pred_check_branch
        %598 = sbr.rel (%p596) target = $region60
      $region59: #{unet_block_forward.1} parent=11 // pred_region
        _
      $region60: #{unet_block_forward.1} parent=11 // pred_fallthru
        _
      // Predicated region
      $region61: #{unet_block_forward.1} parent=11 // pred_check
        %p599 = pneg %p354
      $region62: #{unet_block_forward.1} parent=11 // pred_check_branch
        %601 = sbr.rel (%p599) target = $region64
      $region63: #{unet_block_forward.1} parent=11 // pred_region
        _
      $region64: #{unet_block_forward.1} parent=11 // pred_fallthru
        _
      // Predicated region
      $region65: #{unet_block_forward.1} parent=11 // pred_check
        %p602 = pneg %p375
      $region66: #{unet_block_forward.1} parent=11 // pred_check_branch
        %604 = sbr.rel (%p602) target = $region68
      $region67: #{unet_block_forward.1} parent=11 // pred_region
        _
      $region68: #{unet_block_forward.1} parent=11 // pred_fallthru
        _
      // Predicated region
      $region69: #{unet_block_forward.1} parent=11 // pred_check
        %p605 = pneg %p396
      $region70: #{unet_block_forward.1} parent=11 // pred_check_branch
        %607 = sbr.rel (%p605) target = $region72
      $region71: #{unet_block_forward.1} parent=11 // pred_region
        _
      $region72: #{unet_block_forward.1} parent=11 // pred_fallthru
        _
      // Predicated region
      $region73: #{unet_block_forward.1} parent=11 // pred_check
        %p608 = pneg %p417
      $region74: #{unet_block_forward.1} parent=11 // pred_check_branch
        %610 = sbr.rel (%p608) target = $region76
      $region75: #{unet_block_forward.1} parent=11 // pred_region
        _
      $region76: #{unet_block_forward.1} parent=11 // pred_fallthru
        _
      // Predicated region
      $region77: #{unet_block_forward.1} parent=11 // pred_check
        %p611 = pneg %p438
      $region78: #{unet_block_forward.1} parent=11 // pred_check_branch
        %613 = sbr.rel (%p611) target = $region80
      $region79: #{unet_block_forward.1} parent=11 // pred_region
        _
      $region80: #{unet_block_forward.1} parent=11 // pred_fallthru
        _
      // Predicated region
      $region81: #{unet_block_forward.1} parent=11 // pred_check
        %p614 = pneg %p459
      $region82: #{unet_block_forward.1} parent=11 // pred_check_branch
        %616 = sbr.rel (%p614) target = $region84
      $region83: #{unet_block_forward.1} parent=11 // pred_region
        _
      $region84: #{unet_block_forward.1} parent=11 // pred_fallthru
        _
      // Predicated region
      $region85: #{unet_block_forward.1} parent=11 // pred_check
        %p617 = pneg %p480
      $region86: #{unet_block_forward.1} parent=11 // pred_check_branch
        %619 = sbr.rel (%p617) target = $region88
      $region87: #{unet_block_forward.1} parent=11 // pred_region
        _
      $region88: #{unet_block_forward.1} parent=11 // pred_fallthru
        _
      // Predicated region
      $region89: #{unet_block_forward.1} parent=11 // pred_check
        %p620 = pneg %p501
      $region90: #{unet_block_forward.1} parent=11 // pred_check_branch
        %622 = sbr.rel (%p620) target = $region92
      $region91: #{unet_block_forward.1} parent=11 // pred_region
        _
      $region92: #{unet_block_forward.1} parent=11 // pred_fallthru
        _
      // Predicated region
      $region93: #{unet_block_forward.1} parent=11 // pred_check
        %p623 = pneg %p522
      $region94: #{unet_block_forward.1} parent=11 // pred_check_branch
        %625 = sbr.rel (%p623) target = $region96
      $region95: #{unet_block_forward.1} parent=11 // pred_region
        _
      $region96: #{unet_block_forward.1} parent=11 // pred_fallthru
        _
    $region12: #{unet_block_forward.1} parent=5 // pred_fallthru
      _
    %p626 = scmp.lt.s32.totalorder %s29, 2
    // Predicated region
    $region97: #{unet_block_forward.1} parent=5 // pred_check
      %p627 = pneg %p626
    $region98: #{unet_block_forward.1} parent=5 // pred_check_branch
      %629 = sbr.rel (%p627) target = $region100
    $region99: #{unet_block_forward.1} parent=5 // pred_region
      // Predicated region
      $region101: #{unet_block_forward.1} parent=99 // pred_check
        %p630 = pneg %p49
      $region102: #{unet_block_forward.1} parent=99 // pred_check_branch
        %632 = sbr.rel (%p630) target = $region104
      $region103: #{unet_block_forward.1} parent=99 // pred_region
        %p633 = scmp.lt.s32.totalorder %s29, 1
        %s634 = scalar_select %p633, %s29, 1
        %s635 = smul.addr %s634, 4
        %s636 = smul.addr %s635, 4
        %s637 = scalar_lea.vmem %s0, %s636
      $region104: #{unet_block_forward.1} parent=99 // pred_fallthru
        _
      // Predicated region
      $region105: #{unet_block_forward.1} parent=99 // pred_check
        %p638 = pneg %p75
      $region106: #{unet_block_forward.1} parent=99 // pred_check_branch
        %640 = sbr.rel (%p638) target = $region108
      $region107: #{unet_block_forward.1} parent=99 // pred_region
        %p641 = scmp.lt.s32.totalorder %s29, 1
        %s642 = scalar_select %p641, %s29, 1
        %s643 = smul.addr %s642, 4
        %s644 = smul.addr %s643, 8
        %s645 = scalar_lea.vmem %s1, %s644
      $region108: #{unet_block_forward.1} parent=99 // pred_fallthru
        _
    $region100: #{unet_block_forward.1} parent=5 // pred_fallthru
      _
    %p646 = scmp.le.s32.totalorder 1, %s29
    %p647 = scmp.lt.s32.totalorder %s29, 3
    %p648 = pnand %p646, %p647
    %p649 = pneg %p648
    // Predicated region
    $region109: #{unet_block_forward.1} parent=5 // pred_check
      _
    $region110: #{unet_block_forward.1} parent=5 // pred_check_branch
      %651 = sbr.rel (%p648) target = $region112
    $region111: #{unet_block_forward.1} parent=5 // pred_region
      %s652 = ssub.s32 %s29, 1
      %p653 = scmp.lt.s32.totalorder %s34, 1
      %s654 = scalar_select %p653, %s34, 1
      %s655 = smul.addr %s654, 4
      %s656 = smul.addr %s655, 4
      %s657 = scalar_lea.vmem %s0, %s656
      %p658 = pneg %p55
      %p659 = pneg %p52
      %p660 = scmp.lt.s32.totalorder %s34, 1
      %s661 = scalar_select %p660, %s34, 1
      %s662 = smul.addr %s661, 4
      %s663 = smul.addr %s662, 8
      %s664 = scalar_lea.vmem %s1, %s663
      %p665 = pneg %p81
      %p666 = pneg %p78
      %p667 = pneg %p102
      %p668 = pneg %p99
      %p669 = pneg %p123
      %p670 = pneg %p120
      %p671 = pneg %p144
      %p672 = pneg %p141
      %p673 = pneg %p165
      %p674 = pneg %p162
      %p675 = pneg %p186
      %p676 = pneg %p183
      %p677 = pneg %p207
      %p678 = pneg %p204
      %p679 = pneg %p228
      %p680 = pneg %p225
      %p681 = pneg %p249
      %p682 = pneg %p246
      %p683 = pneg %p270
      %p684 = pneg %p267
      %p685 = pneg %p291
      %p686 = pneg %p288
      %p687 = pneg %p312
      %p688 = pneg %p309
      %p689 = pneg %p333
      %p690 = pneg %p330
      %p691 = pneg %p354
      %p692 = pneg %p351
      %p693 = pneg %p375
      %p694 = pneg %p372
      %p695 = pneg %p396
      %p696 = pneg %p393
      %p697 = pneg %p417
      %p698 = pneg %p414
      %p699 = pneg %p438
      %p700 = pneg %p435
      %p701 = pneg %p459
      %p702 = pneg %p456
      %p703 = pneg %p480
      %p704 = pneg %p477
      %p705 = pneg %p501
      %p706 = pneg %p498
      %p707 = pneg %p522
      %p708 = pneg %p519
      %p709 = pneg %p548
      %p710 = pneg %p545
      %p711 = scmp.lt.s32.totalorder %s34, 1
      %s712 = scalar_select %p711, %s34, 1
      %s713 = smul.addr %s712, 3
      %s714 = smul.addr %s713, 8
      %s715 = scalar_lea.vmem %s23, %s714
      %p716 = scmp.lt.s32.totalorder %s34, 1
      %s717 = scalar_select %p716, %s34, 1
      %s718 = smul.addr %s717, 4
      %s719 = smul.addr %s718, 4
      %s720 = scalar_lea.vmem %s0, %s719
      %p721 = scmp.lt.s32.totalorder %s34, 1
      %s722 = scalar_select %p721, %s34, 1
      %s723 = smul.addr %s722, 4
      %s724 = smul.addr %s723, 8
      %s725 = scalar_lea.vmem %s1, %s724
      %p726 = scmp.lt.s32.totalorder %s34, 1
      %s727 = scalar_select %p726, %s34, 1
      %s728 = smul.addr %s727, 3
      %s729 = smul.addr %s728, 8
      %s730 = scalar_lea.vmem %s23, %s729
      %v731 = vld [vmem:[%s720] sm:$0xff]
      %v732 = vld [vmem:[%s720 + $0x8] sm:$0xff]
      %v733 = vld [vmem:[%s2] sm:$0xf]
      %v734 = vld [vmem:[%s3] sm:$0x7]
      %v735 = vld [vmem:[%s4] sm:$0x7]
      %v736 = vld [vmem:[%s5] sm:$0xf]
      %v737 = vld [vmem:[%s6] sm:$0xf]
      %v739 = vperm.slane %v733, 0
      %v740 = vperm.slane %v733, 1
      %v741 = vperm.slane %v733, 2
      %v742 = vperm.slane %v733, 3
      %v743 = vrot.slane %v740, 4
      %v744 = vrot.slane %v742, 4
      %vm745 = vcmask 1043456
      %v746 = vsel %vm745, %v739, %v743
      %v747 = vsel %vm745, %v741, %v744
      %v750 = vmul.f32 %v731, %v746
      %v751 = vmul.f32 %v732, %v747
      %754 = vst [vmem:[#allocation1] ss:$2 sm:$0xff] %v750
      %s755 = scalar_lea.vmem [#allocation1], 16
      %756 = vst [vmem:[%s755] ss:$2 sm:$0xff] %v751
      %v757 = vld.sshfl [vmem:[#allocation1] sm:$0xff pattern:$0x75316420]
      %v758 = vld.sshfl [vmem:[#allocation1 + $0x8] sm:$0xff pattern:$0x75316420]
      %v759 = vld.sshfl [vmem:[#allocation1 + $0x10] sm:$0xff pattern:$0x75316420]
      %v760 = vld.sshfl [vmem:[#allocation1 + $0x18] sm:$0xff pattern:$0x75316420]
      %v765 = vsel %vm745, %v757, 0.0
      %v766 = vsel %vm745, %v758, 0.0
      %v767 = vadd.f32 %v765, %v766
      %v768 = vsel %vm745, %v759, 0.0
      %v769 = vadd.f32 %v767, %v768
      %vm770 = vcmask 125952
      %v771 = vsel %vm770, %v760, 0.0
      %v772 = vadd.f32 %v769, %v771
      %773 = vadd.xlane.f32.xlu0 %v772
      %v774 = vpop.xlane.xlu0 %773
      %v775 = vsel %vm745, %v774, 0.0
      %v776 = vrot.slane %v775, 4
      %v777 = vadd.f32 %v775, %v776
      %v778 = vrot.slane %v777, 2
      %v779 = vadd.f32 %v777, %v778
      %v780 = vrot.slane %v779, 1
      %v781 = vadd.f32 %v779, %v780
      %v782 = vmul.f32 %v781, 0.0009765625
      %v783 = vmul.f32 %v750, %v731
      %v784 = vmul.f32 %v751, %v732
      %787 = vst [vmem:[#allocation1] ss:$2 sm:$0xff] %v783
      %s788 = scalar_lea.vmem [#allocation1], 16
      %789 = vst [vmem:[%s788] ss:$2 sm:$0xff] %v784
      %v790 = vld.sshfl [vmem:[#allocation1] sm:$0xff pattern:$0x75316420]
      %v791 = vld.sshfl [vmem:[#allocation1 + $0x8] sm:$0xff pattern:$0x75316420]
      %v792 = vld.sshfl [vmem:[#allocation1 + $0x10] sm:$0xff pattern:$0x75316420]
      %v793 = vld.sshfl [vmem:[#allocation1 + $0x18] sm:$0xff pattern:$0x75316420]
      %v798 = vsel %vm745, %v790, 0.0
      %v799 = vsel %vm745, %v791, 0.0
      %v800 = vadd.f32 %v798, %v799
      %v801 = vsel %vm745, %v792, 0.0
      %v802 = vadd.f32 %v800, %v801
      %v803 = vsel %vm770, %v793, 0.0
      %v804 = vadd.f32 %v802, %v803
      %805 = vadd.xlane.f32.xlu0 %v804
      %v806 = vpop.xlane.xlu0 %805
      %v807 = vsel %vm745, %v806, 0.0
      %v808 = vrot.slane %v807, 4
      %v809 = vadd.f32 %v807, %v808
      %v810 = vrot.slane %v809, 2
      %v811 = vadd.f32 %v809, %v810
      %v812 = vrot.slane %v811, 1
      %v813 = vadd.f32 %v811, %v812
      %v814 = vmul.f32 %v813, 0.0009765625
      %v815 = vmul.f32 %v782, %v782
      %v816 = vsub.f32 %v814, %v815
      %v817 = vadd.f32 %v816, 1e-05
      %v818 = vrsqrt.pop %v817
      %v819 = vmul.f32 %v818, %v817
      %v820 = vmul.f32 %v819, %v818
      %v821 = vmul.f32 0.5, %v820
      %v822 = vsub.f32 1.5, %v821
      %v823 = vmul.f32 %v818, %v822
      %vm824 = vweird.f32 %v817
      %vm825 = vweird.f32 %v818
      %vm826 = vmor %vm824, %vm825
      %v827 = vsel %vm826, %v818, %v823
      %v828 = vsub.f32 %v731, %v782
      %v829 = vsub.f32 %v732, %v782
      %v830 = vmul.f32 %v828, %v827
      %v831 = vmul.f32 %v829, %v827
      %833 = vset.pattern.permute.xlu0 0
      %834 = vperm.xlu0 %833, %v736
      %v835 = vpop.permute.xlu0 %834
      %v837 = vunpack.c.l.s4 839922192
      %v838 = vunpack.c.0.s8 %v837
      %v839 = vperm.slane %v835, %v838
      %v841 = vmul.f32 %v830, %v839
      %v842 = vmul.f32 %v831, %v839
      %844 = vset.pattern.permute.xlu0 0
      %845 = vperm.xlu0 %844, %v737
      %v846 = vpop.permute.xlu0 %845
      %v848 = vunpack.c.l.s4 839922192
      %v849 = vunpack.c.0.s8 %v848
      %v850 = vperm.slane %v846, %v849
      %v852 = vadd.f32 %v841, %v850
      %v853 = vadd.f32 %v842, %v850
      %v854 = vxor.u32 %v852, 2147483648
      %v855 = vxor.u32 %v853, 2147483648
      %v856 = vmul.f32 %v854, 1.442695
      %v857 = vpow.pop %v856
      %v858 = vmul.f32 %v855, 1.442695
      %v859 = vpow.pop %v858
      %v860 = vadd.f32 %v857, 1.0
      %v861 = vadd.f32 %v859, 1.0
      %v862 = vrcp.pop %v860
      %v863 = vmul.f32 %v860, %v862
      %v864 = vsub.f32 1.0, %v863
      %v865 = vmul.f32 %v862, %v864
      %v866 = vadd.f32 %v862, %v865
      %vm867 = vweird.f32 %v860
      %vm868 = vweird.f32 %v862
      %vm869 = vmor %vm867, %vm868
      %v870 = vsel %vm869, %v862, %v866
      %v871 = vand.u32 2147483647, %v860
      %vm872 = vcmp.eq.f32.partialorder %v871, 8.507059e+37
      %v873 = vand.u32 %v860, 2147483648
      %v874 = vor.u32 1.1754944e-38, %v873
      %v875 = vsel %vm872, %v874, %v870
      %v876 = vmul.f32 1.0, %v875
      %v877 = vrcp.pop %v861
      %v878 = vmul.f32 %v861, %v877
      %v879 = vsub.f32 1.0, %v878
      %v880 = vmul.f32 %v877, %v879
      %v881 = vadd.f32 %v877, %v880
      %vm882 = vweird.f32 %v861
      %vm883 = vweird.f32 %v877
      %vm884 = vmor %vm882, %vm883
      %v885 = vsel %vm884, %v877, %v881
      %v886 = vand.u32 2147483647, %v861
      %vm887 = vcmp.eq.f32.partialorder %v886, 8.507059e+37
      %v888 = vand.u32 %v861, 2147483648
      %v889 = vor.u32 1.1754944e-38, %v888
      %v890 = vsel %vm887, %v889, %v885
      %v891 = vmul.f32 1.0, %v890
      %v892 = vmul.f32 %v852, %v876
      %v893 = vmul.f32 %v853, %v891
      %v894 = vmul.f32 %v892, %v746
      %v895 = vmul.f32 %v893, %v747
      %v896 = vld [vmem:[%s7] sm:$0xff]
      %v897 = vld [vmem:[%s7 + $0x8] sm:$0xff]
      %v898 = vld [vmem:[%s7 + $0x10] sm:$0xff]
      %v899 = vld [vmem:[%s7 + $0x18] sm:$0xff]
      %v900 = vld [vmem:[%s7 + $0x20] sm:$0xff]
      %v901 = vld [vmem:[%s7 + $0x28] sm:$0xff]
      %v902 = vld [vmem:[%s7 + $0x30] sm:$0xff]
      %v903 = vld [vmem:[%s7 + $0x38] sm:$0xff]
      %v904 = vld [vmem:[%s7 + $0x40] sm:$0xff]
      %v905 = vld [vmem:[%s8] sm:$0xff]
      %908 = vst [vmem:[#allocation1] ss:$2 sm:$0xff] %v894
      %s909 = scalar_lea.vmem [#allocation1], 16
      %910 = vst [vmem:[%s909] ss:$2 sm:$0xff] %v895
      %v911 = vld.sshfl [vmem:[#allocation1] sm:$0xff pattern:$0x75316420]
      %v912 = vld.sshfl [vmem:[#allocation1 + $0x8] sm:$0xff pattern:$0x75316420]
      %v913 = vld.sshfl [vmem:[#allocation1 + $0x10] sm:$0xff pattern:$0x75316420]
      %v914 = vld.sshfl [vmem:[#allocation1 + $0x18] sm:$0xff pattern:$0x75316420]
      %vm915 = vcmask 31744
      %v917 = vsel %vm915, %v896, 0
      %v920 = vsel %vm915, %v897, 0
      %v923 = vsel %vm915, %v898, 0
      %v926 = vsel %vm915, %v899, 0
      %v929 = vsel %vm915, %v900, 0
      %v932 = vsel %vm915, %v901, 0
      %v935 = vsel %vm915, %v902, 0
      %v938 = vsel %vm915, %v903, 0
      %v941 = vsel %vm915, %v904, 0
      %v943 = vsel %vm745, %v911, 0
      %v945 = vsel %vm745, %v912, 0
      %v947 = vsel %vm745, %v913, 0
      %v949 = vsel %vm745, %v914, 0
      %951 = vmatpush.msra.mxu0 0.0
      %952 = vmatpush.msra.mxu0 0.0
      %953 = vmatpush.msra.mxu0 0.0
      %954 = vmatpush.msra.mxu0 0.0
      %955 = vmatpush.msra.mxu0 0.0
      %956 = vmatpush.msra.mxu0 0.0
      %957 = vmatpush.msra.mxu0 0.0
      %958 = vmatpush.msra.mxu0 0.0
      %959 = vmatpush.msra.mxu0 0.0
      %960 = vmatpush.msra.mxu0 0.0
      %961 = vmatpush.msra.mxu0 0.0
      %962 = vmatpush.msra.mxu0 0.0
      %963 = vmatpush.msra.mxu0 0.0
      %964 = vmatpush.msra.mxu0 0.0
      %965 = vmatpush.msra.mxu0 0.0
      %966 = vmatpush.msra.mxu0 %v943
      %967 = vmatmul.f32.gmra.mxu0 %v917
      %v968 = vpop.f32.mrf.mxu0
      %v969 = vadd.f32 0.0, %v968
      %970 = vmatmul.f32.gmra.mxu0 %v920
      %v971 = vpop.f32.mrf.mxu0
      %v972 = vadd.f32 0.0, %v971
      %973 = vmatmul.f32.gmra.mxu0 %v923
      %v974 = vpop.f32.mrf.mxu0
      %v975 = vadd.f32 0.0, %v974
      %976 = vmatmul.f32.gmra.mxu0 %v926
      %v977 = vpop.f32.mrf.mxu0
      %v978 = vadd.f32 0.0, %v977
      %979 = vmatmul.f32.gmra.mxu0 %v929
      %v980 = vpop.f32.mrf.mxu0
      %v981 = vadd.f32 0.0, %v980
      %982 = vmatmul.f32.gmra.mxu0 %v932
      %v983 = vpop.f32.mrf.mxu0
      %v984 = vadd.f32 0.0, %v983
      %985 = vmatmul.f32.gmra.mxu0 %v935
      %v986 = vpop.f32.mrf.mxu0
      %v987 = vadd.f32 0.0, %v986
      %988 = vmatmul.f32.gmra.mxu0 %v938
      %v989 = vpop.f32.mrf.mxu0
      %v990 = vadd.f32 0.0, %v989
      %991 = vmatmul.f32.gmra.mxu0 %v941
      %v992 = vpop.f32.mrf.mxu0
      %v993 = vadd.f32 0.0, %v992
      %994 = vdwg.mxu0
      %995 = vmatpush.msra.mxu0 0.0
      %996 = vmatpush.msra.mxu0 0.0
      %997 = vmatpush.msra.mxu0 0.0
      %998 = vmatpush.msra.mxu0 0.0
      %999 = vmatpush.msra.mxu0 0.0
      %1000 = vmatpush.msra.mxu0 0.0
      %1001 = vmatpush.msra.mxu0 0.0
      %1002 = vmatpush.msra.mxu0 0.0
      %1003 = vmatpush.msra.mxu0 0.0
      %1004 = vmatpush.msra.mxu0 0.0
      %1005 = vmatpush.msra.mxu0 0.0
      %1006 = vmatpush.msra.mxu0 0.0
      %1007 = vmatpush.msra.mxu0 0.0
      %1008 = vmatpush.msra.mxu0 0.0
      %1009 = vmatpush.msra.mxu0 0.0
      %1010 = vmatpush.msra.mxu0 %v945
      %1011 = vmatmul.f32.gmra.mxu0 %v917
      %v1012 = vpop.f32.mrf.mxu0
      %v1013 = vadd.f32 0.0, %v1012
      %1014 = vmatmul.f32.gmra.mxu0 %v920
      %v1015 = vpop.f32.mrf.mxu0
      %v1016 = vadd.f32 0.0, %v1015
      %1017 = vmatmul.f32.gmra.mxu0 %v923
      %v1018 = vpop.f32.mrf.mxu0
      %v1019 = vadd.f32 0.0, %v1018
      %1020 = vmatmul.f32.gmra.mxu0 %v926
      %v1021 = vpop.f32.mrf.mxu0
      %v1022 = vadd.f32 0.0, %v1021
      %1023 = vmatmul.f32.gmra.mxu0 %v929
      %v1024 = vpop.f32.mrf.mxu0
      %v1025 = vadd.f32 0.0, %v1024
      %1026 = vmatmul.f32.gmra.mxu0 %v932
      %v1027 = vpop.f32.mrf.mxu0
      %v1028 = vadd.f32 0.0, %v1027
      %1029 = vmatmul.f32.gmra.mxu0 %v935
      %v1030 = vpop.f32.mrf.mxu0
      %v1031 = vadd.f32 0.0, %v1030
      %1032 = vmatmul.f32.gmra.mxu0 %v938
      %v1033 = vpop.f32.mrf.mxu0
      %v1034 = vadd.f32 0.0, %v1033
      %1035 = vmatmul.f32.gmra.mxu0 %v941
      %v1036 = vpop.f32.mrf.mxu0
      %v1037 = vadd.f32 0.0, %v1036
      %1038 = vdwg.mxu0
      %1039 = vmatpush.msra.mxu0 0.0
      %1040 = vmatpush.msra.mxu0 0.0
      %1041 = vmatpush.msra.mxu0 0.0
      %1042 = vmatpush.msra.mxu0 0.0
      %1043 = vmatpush.msra.mxu0 0.0
      %1044 = vmatpush.msra.mxu0 0.0
      %1045 = vmatpush.msra.mxu0 0.0
      %1046 = vmatpush.msra.mxu0 0.0
      %1047 = vmatpush.msra.mxu0 0.0
      %1048 = vmatpush.msra.mxu0 0.0
      %1049 = vmatpush.msra.mxu0 0.0
      %1050 = vmatpush.msra.mxu0 0.0
      %1051 = vmatpush.msra.mxu0 0.0
      %1052 = vmatpush.msra.mxu0 0.0
      %1053 = vmatpush.msra.mxu0 0.0
      %1054 = vmatpush.msra.mxu0 %v947
      %1055 = vmatmul.f32.gmra.mxu0 %v917
      %v1056 = vpop.f32.mrf.mxu0
      %v1057 = vadd.f32 0.0, %v1056
      %1058 = vmatmul.f32.gmra.mxu0 %v920
      %v1059 = vpop.f32.mrf.mxu0
      %v1060 = vadd.f32 0.0, %v1059
      %1061 = vmatmul.f32.gmra.mxu0 %v923
      %v1062 = vpop.f32.mrf.mxu0
      %v1063 = vadd.f32 0.0, %v1062
      %1064 = vmatmul.f32.gmra.mxu0 %v926
      %v1065 = vpop.f32.mrf.mxu0
      %v1066 = vadd.f32 0.0, %v1065
      %1067 = vmatmul.f32.gmra.mxu0 %v929
      %v1068 = vpop.f32.mrf.mxu0
      %v1069 = vadd.f32 0.0, %v1068
      %1070 = vmatmul.f32.gmra.mxu0 %v932
      %v1071 = vpop.f32.mrf.mxu0
      %v1072 = vadd.f32 0.0, %v1071
      %1073 = vmatmul.f32.gmra.mxu0 %v935
      %v1074 = vpop.f32.mrf.mxu0
      %v1075 = vadd.f32 0.0, %v1074
      %1076 = vmatmul.f32.gmra.mxu0 %v938
      %v1077 = vpop.f32.mrf.mxu0
      %v1078 = vadd.f32 0.0, %v1077
      %1079 = vmatmul.f32.gmra.mxu0 %v941
      %v1080 = vpop.f32.mrf.mxu0
      %v1081 = vadd.f32 0.0, %v1080
      %1082 = vdwg.mxu0
      %1083 = vmatpush.msra.mxu0 0.0
      %1084 = vmatpush.msra.mxu0 0.0
      %1085 = vmatpush.msra.mxu0 0.0
      %1086 = vmatpush.msra.mxu0 0.0
      %1087 = vmatpush.msra.mxu0 0.0
      %1088 = vmatpush.msra.mxu0 0.0
      %1089 = vmatpush.msra.mxu0 0.0
      %1090 = vmatpush.msra.mxu0 0.0
      %1091 = vmatpush.msra.mxu0 0.0
      %1092 = vmatpush.msra.mxu0 0.0
      %1093 = vmatpush.msra.mxu0 0.0
      %1094 = vmatpush.msra.mxu0 0.0
      %1095 = vmatpush.msra.mxu0 0.0
      %1096 = vmatpush.msra.mxu0 0.0
      %1097 = vmatpush.msra.mxu0 0.0
      %1098 = vmatpush.msra.mxu0 %v949
      %1099 = vmatmul.f32.gmra.mxu0 %v917
      %v1100 = vpop.f32.mrf.mxu0
      %1101 = vmatmul.f32.gmra.mxu0 %v920
      %v1102 = vpop.f32.mrf.mxu0
      %1103 = vmatmul.f32.gmra.mxu0 %v923
      %v1104 = vpop.f32.mrf.mxu0
      %1105 = vmatmul.f32.gmra.mxu0 %v926
      %v1106 = vpop.f32.mrf.mxu0
      %1107 = vmatmul.f32.gmra.mxu0 %v929
      %v1108 = vpop.f32.mrf.mxu0
      %1109 = vmatmul.f32.gmra.mxu0 %v932
      %v1110 = vpop.f32.mrf.mxu0
      %1111 = vmatmul.f32.gmra.mxu0 %v935
      %v1112 = vpop.f32.mrf.mxu0
      %v1113 = vadd.f32 0.0, %v1112
      %1114 = vmatmul.f32.gmra.mxu0 %v938
      %v1115 = vpop.f32.mrf.mxu0
      %v1116 = vadd.f32 0.0, %v1115
      %1117 = vmatmul.f32.gmra.mxu0 %v941
      %v1118 = vpop.f32.mrf.mxu0
      %v1119 = vadd.f32 0.0, %v1118
      %1120 = vdwg.mxu0
      %1124 = vrot.lane.b32.xlu0 %v972, 127
      %v1125 = vpop.permute.xlu0 %1124
      %1126 = vrot.lane.b32.xlu0 %v1016, 127
      %v1127 = vpop.permute.xlu0 %1126
      %1128 = vrot.lane.b32.xlu0 %v1060, 127
      %v1129 = vpop.permute.xlu0 %1128
      %vm1130 = vcmask 1039360
      %v1131 = vsel %vm1130, %v1125, %v1127
      %v1132 = vsel %vm1130, %v1127, %v1129
      %v1136 = vadd.f32 %v969, %v1131
      %v1137 = vadd.f32 %v1013, %v1132
      %v1138 = vadd.f32 %v1057, %v1129
      %1142 = vrot.lane.b32.xlu0 %v975, 126
      %v1143 = vpop.permute.xlu0 %1142
      %1144 = vrot.lane.b32.xlu0 %v1019, 126
      %v1145 = vpop.permute.xlu0 %1144
      %1146 = vrot.lane.b32.xlu0 %v1063, 126
      %v1147 = vpop.permute.xlu0 %1146
      %vm1148 = vcmask 1031168
      %v1149 = vsel %vm1148, %v1143, %v1145
      %v1150 = vsel %vm1148, %v1145, %v1147
      %v1154 = vadd.f32 %v1136, %v1149
      %v1155 = vadd.f32 %v1137, %v1150
      %v1156 = vadd.f32 %v1138, %v1147
      %1160 = vrot.lane.b32.xlu0 %v978, 110
      %v1161 = vpop.permute.xlu0 %1160
      %1162 = vrot.lane.b32.xlu0 %v1022, 110
      %v1163 = vpop.permute.xlu0 %1162
      %1164 = vrot.lane.b32.xlu0 %v1066, 110
      %v1165 = vpop.permute.xlu0 %1164
      %vm1166 = vcmask 900096
      %v1167 = vsel %vm1166, %v1161, %v1163
      %v1168 = vsel %vm1166, %v1163, %v1165
      %v1172 = vadd.f32 %v1154, %v1167
      %v1173 = vadd.f32 %v1155, %v1168
      %v1174 = vadd.f32 %v1156, %v1165
      %1178 = vrot.lane.b32.xlu0 %v981, 109
      %v1179 = vpop.permute.xlu0 %1178
      %1180 = vrot.lane.b32.xlu0 %v1025, 109
      %v1181 = vpop.permute.xlu0 %1180
      %1182 = vrot.lane.b32.xlu0 %v1069, 109
      %v1183 = vpop.permute.xlu0 %1182
      %vm1184 = vcmask 891904
      %v1185 = vsel %vm1184, %v1179, %v1181
      %v1186 = vsel %vm1184, %v1181, %v1183
      %v1190 = vadd.f32 %v1172, %v1185
      %v1191 = vadd.f32 %v1173, %v1186
      %v1192 = vadd.f32 %v1174, %v1183
      %1196 = vrot.lane.b32.xlu0 %v984, 108
      %v1197 = vpop.permute.xlu0 %1196
      %1198 = vrot.lane.b32.xlu0 %v1028, 108
      %v1199 = vpop.permute.xlu0 %1198
      %1200 = vrot.lane.b32.xlu0 %v1072, 108
      %v1201 = vpop.permute.xlu0 %1200
      %vm1202 = vcmask 883712
      %v1203 = vsel %vm1202, %v1197, %v1199
      %v1204 = vsel %vm1202, %v1199, %v1201
      %v1208 = vadd.f32 %v1190, %v1203
      %v1209 = vadd.f32 %v1191, %v1204
      %v1210 = vadd.f32 %v1192, %v1201
      %1215 = vrot.lane.b32.xlu0 %v987, 92
      %v1216 = vpop.permute.xlu0 %1215
      %1217 = vrot.lane.b32.xlu0 %v1031, 92
      %v1218 = vpop.permute.xlu0 %1217
      %1219 = vrot.lane.b32.xlu0 %v1075, 92
      %v1220 = vpop.permute.xlu0 %1219
      %1221 = vrot.lane.b32.xlu0 %v1113, 92
      %v1222 = vpop.permute.xlu0 %1221
      %vm1223 = vcmask 752640
      %v1224 = vsel %vm1223, %v1216, %v1218
      %v1225 = vsel %vm1223, %v1218, %v1220
      %v1226 = vsel %vm1223, %v1220, %v1222
      %v1230 = vadd.f32 %v1208, %v1224
      %v1231 = vadd.f32 %v1209, %v1225
      %v1232 = vadd.f32 %v1210, %v1226
      %1237 = vrot.lane.b32.xlu0 %v990, 91
      %v1238 = vpop.permute.xlu0 %1237
      %1239 = vrot.lane.b32.xlu0 %v1034, 91
      %v1240 = vpop.permute.xlu0 %1239
      %1241 = vrot.lane.b32.xlu0 %v1078, 91
      %v1242 = vpop.permute.xlu0 %1241
      %1243 = vrot.lane.b32.xlu0 %v1116, 91
      %v1244 = vpop.permute.xlu0 %1243
      %vm1245 = vcmask 744448
      %v1246 = vsel %vm1245, %v1238, %v1240
      %v1247 = vsel %vm1245, %v1240, %v1242
      %v1248 = vsel %vm1245, %v1242, %v1244
      %v1252 = vadd.f32 %v1230, %v1246
      %v1253 = vadd.f32 %v1231, %v1247
      %v1254 = vadd.f32 %v1232, %v1248
      %1259 = vrot.lane.b32.xlu0 %v993, 90
      %v1260 = vpop.permute.xlu0 %1259
      %1261 = vrot.lane.b32.xlu0 %v1037, 90
      %v1262 = vpop.permute.xlu0 %1261
      %1263 = vrot.lane.b32.xlu0 %v1081, 90
      %v1264 = vpop.permute.xlu0 %1263
      %1265 = vrot.lane.b32.xlu0 %v1119, 90
      %v1266 = vpop.permute.xlu0 %1265
      %vm1267 = vcmask 736256
      %v1268 = vsel %vm1267, %v1260, %v1262
      %v1269 = vsel %vm1267, %v1262, %v1264
      %v1270 = vsel %vm1267, %v1264, %v1266
      %v1274 = vadd.f32 %v1252, %v1268
      %v1275 = vadd.f32 %v1253, %v1269
      %v1276 = vadd.f32 %v1254, %v1270
      %1278 = vset.pattern.permute.xlu0 0
      %1279 = vperm.xlu0 %1278, %v905
      %v1280 = vpop.permute.xlu0 %1279
      %v1282 = vadd.f32 %v1274, %v1280
      %v1283 = vadd.f32 %v1275, %v1280
      %v1284 = vadd.f32 %v1276, %v1280
      %v1285 = vld [vmem:[%s9] sm:$0xff]
      %v1286 = vld [vmem:[%s9 + $0x8] sm:$0xff]
      %v1287 = vld [vmem:[%s725] sm:$0xff]
      %v1288 = vld [vmem:[%s725 + $0x8] sm:$0xff]
      %v1289 = vld [vmem:[%s725 + $0x10] sm:$0xff]
      %v1290 = vld [vmem:[%s725 + $0x18] sm:$0xff]
      %v1291 = vld [vmem:[%s10] sm:$0xff]
      %v1292 = vld [vmem:[%s10 + $0x8] sm:$0xff]
      %vm1293 = vcmask 261120
      %v1295 = vsel %vm1293, %v1285, 0
      %v1298 = vsel %vm1293, %v1286, 0
      %1300 = vmatpush.msra.mxu0 0.0
      %1301 = vmatpush.msra.mxu0 0.0
      %1302 = vmatpush.msra.mxu0 0.0
      %1303 = vmatpush.msra.mxu0 0.0
      %1304 = vmatpush.msra.mxu0 0.0
      %1305 = vmatpush.msra.mxu0 0.0
      %1306 = vmatpush.msra.mxu0 0.0
      %1307 = vmatpush.msra.mxu0 0.0
      %1308 = vmatpush.msra.mxu0 0.0
      %1309 = vmatpush.msra.mxu0 0.0
      %1310 = vmatpush.msra.mxu0 0.0
      %1311 = vmatpush.msra.mxu0 0.0
      %1312 = vmatpush.msra.mxu0 %v1290
      %1313 = vmatpush.msra.mxu0 %v1289
      %1314 = vmatpush.msra.mxu0 %v1288
      %1315 = vmatpush.msra.mxu0 %v1287
      %1316 = vmatmul.f32.gmra.mxu0 %v1295
      %v1317 = vpop.f32.mrf.mxu0
      %v1318 = vadd.f32 %v1291, %v1317
      %1319 = vmatmul.f32.gmra.mxu0 %v1298
      %v1320 = vpop.f32.mrf.mxu0
      %v1321 = vadd.f32 %v1292, %v1320
      %1322 = vdwg.mxu0
      %v1323 = vld [vmem:[%s11] sm:$0xff]
      %v1324 = vld [vmem:[%s12] sm:$0xff]
      %v1326 = vperm.slane %v734, 0
      %v1327 = vperm.slane %v734, 1
      %v1328 = vperm.slane %v734, 2
      %v1332 = vmul.f32 %v1282, %v1326
      %v1333 = vmul.f32 %v1283, %v1327
      %v1334 = vmul.f32 %v1284, %v1328
      %v1335 = vsel %vm745, %v1332, 0.0
      %v1336 = vsel %vm745, %v1333, 0.0
      %v1337 = vadd.f32 %v1335, %v1336
      %vm1338 = vcmask 863232
      %v1339 = vsel %vm1338, %v1334, 0.0
      %v1340 = vadd.f32 %v1337, %v1339
      %1341 = vadd.xlane.f32.xlu0 %v1340
      %v1342 = vpop.xlane.xlu0 %1341
      %v1343 = vsel %vm745, %v1342, 0.0
      %v1344 = vrot.slane %v1343, 4
      %v1345 = vadd.f32 %v1343, %v1344
      %v1346 = vrot.slane %v1345, 2
      %v1347 = vadd.f32 %v1345, %v1346
      %v1348 = vrot.slane %v1347, 1
      %v1349 = vadd.f32 %v1347, %v1348
      %v1350 = vmul.f32 %v1349, 0.0009765625
      %v1351 = vmul.f32 %v1332, %v1282
      %v1352 = vmul.f32 %v1333, %v1283
      %v1353 = vmul.f32 %v1334, %v1284
      %v1354 = vsel %vm745, %v1351, 0.0
      %v1355 = vsel %vm745, %v1352, 0.0
      %v1356 = vadd.f32 %v1354, %v1355
      %v1357 = vsel %vm1338, %v1353, 0.0
      %v1358 = vadd.f32 %v1356, %v1357
      %1359 = vadd.xlane.f32.xlu0 %v1358
      %v1360 = vpop.xlane.xlu0 %1359
      %v1361 = vsel %vm745, %v1360, 0.0
      %v1362 = vrot.slane %v1361, 4
      %v1363 = vadd.f32 %v1361, %v1362
      %v1364 = vrot.slane %v1363, 2
      %v1365 = vadd.f32 %v1363, %v1364
      %v1366 = vrot.slane %v1365, 1
      %v1367 = vadd.f32 %v1365, %v1366
      %v1368 = vmul.f32 %v1367, 0.0009765625
      %v1369 = vmul.f32 %v1350, %v1350
      %v1370 = vsub.f32 %v1368, %v1369
      %v1371 = vadd.f32 %v1370, 1e-05
      %v1372 = vrsqrt.pop %v1371
      %v1373 = vmul.f32 %v1372, %v1371
      %v1374 = vmul.f32 %v1373, %v1372
      %v1375 = vmul.f32 0.5, %v1374
      %v1376 = vsub.f32 1.5, %v1375
      %v1377 = vmul.f32 %v1372, %v1376
      %vm1378 = vweird.f32 %v1371
      %vm1379 = vweird.f32 %v1372
      %vm1380 = vmor %vm1378, %vm1379
      %v1381 = vsel %vm1380, %v1372, %v1377
      %v1382 = vsub.f32 %v1282, %v1350
      %v1383 = vsub.f32 %v1283, %v1350
      %v1384 = vsub.f32 %v1284, %v1350
      %v1385 = vmul.f32 %v1382, %v1381
      %v1386 = vmul.f32 %v1383, %v1381
      %v1387 = vmul.f32 %v1384, %v1381
      %vm1388 = vcmask 1047556
      %v1389 = vsel %vm1388, %v1332, 0.0
      %v1390 = vsel %vm1388, %v1333, 0.0
      %v1391 = vadd.f32 %v1389, %v1390
      %vm1392 = vcmask 867332
      %v1393 = vsel %vm1392, %v1334, 0.0
      %v1394 = vadd.f32 %v1391, %v1393
      %1395 = vadd.xlane.f32.xlu0 %v1394
      %v1396 = vpop.xlane.xlu0 %1395
      %v1398 = vrot.slane %v1396, 4
      %v1400 = vsel %vm745, %v1398, 0.0
      %v1401 = vrot.slane %v1400, 4
      %v1402 = vadd.f32 %v1400, %v1401
      %v1403 = vrot.slane %v1402, 2
      %v1404 = vadd.f32 %v1402, %v1403
      %v1405 = vrot.slane %v1404, 1
      %v1406 = vadd.f32 %v1404, %v1405
      %v1407 = vmul.f32 %v1406, 0.0009765625
      %v1408 = vsel %vm1388, %v1351, 0.0
      %v1409 = vsel %vm1388, %v1352, 0.0
      %v1410 = vadd.f32 %v1408, %v1409
      %v1411 = vsel %vm1392, %v1353, 0.0
      %v1412 = vadd.f32 %v1410, %v1411
      %1413 = vadd.xlane.f32.xlu0 %v1412
      %v1414 = vpop.xlane.xlu0 %1413
      %v1416 = vrot.slane %v1414, 4
      %v1418 = vsel %vm745, %v1416, 0.0
      %v1419 = vrot.slane %v1418, 4
      %v1420 = vadd.f32 %v1418, %v1419
      %v1421 = vrot.slane %v1420, 2
      %v1422 = vadd.f32 %v1420, %v1421
      %v1423 = vrot.slane %v1422, 1
      %v1424 = vadd.f32 %v1422, %v1423
      %v1425 = vmul.f32 %v1424, 0.0009765625
      %v1426 = vmul.f32 %v1407, %v1407
      %v1427 = vsub.f32 %v1425, %v1426
      %v1428 = vadd.f32 %v1427, 1e-05
      %v1429 = vrsqrt.pop %v1428
      %v1430 = vmul.f32 %v1429, %v1428
      %v1431 = vmul.f32 %v1430, %v1429
      %v1432 = vmul.f32 0.5, %v1431
      %v1433 = vsub.f32 1.5, %v1432
      %v1434 = vmul.f32 %v1429, %v1433
      %vm1435 = vweird.f32 %v1428
      %vm1436 = vweird.f32 %v1429
      %vm1437 = vmor %vm1435, %vm1436
      %v1438 = vsel %vm1437, %v1429, %v1434
      %v1439 = vsub.f32 %v1282, %v1407
      %v1440 = vsub.f32 %v1283, %v1407
      %v1441 = vsub.f32 %v1284, %v1407
      %v1442 = vmul.f32 %v1439, %v1438
      %v1443 = vmul.f32 %v1440, %v1438
      %v1444 = vmul.f32 %v1441, %v1438
      %v1445 = vsel %vm745, %v1385, %v1442
      %v1446 = vsel %vm745, %v1386, %v1443
      %v1447 = vsel %vm745, %v1387, %v1444
      %1449 = vset.pattern.permute.xlu0 0
      %1450 = vperm.xlu0 %1449, %v1323
      %v1451 = vpop.permute.xlu0 %1450
      %v1453 = vmul.f32 %v1445, %v1451
      %v1454 = vmul.f32 %v1446, %v1451
      %v1455 = vmul.f32 %v1447, %v1451
      %1457 = vset.pattern.permute.xlu0 0
      %1458 = vperm.xlu0 %1457, %v1324
      %v1459 = vpop.permute.xlu0 %1458
      %v1461 = vadd.f32 %v1453, %v1459
      %v1462 = vadd.f32 %v1454, %v1459
      %v1463 = vadd.f32 %v1455, %v1459
      %v1464 = vadd.f32 %v1318, 1.0
      %1466 = vset.pattern.permute.xlu0 0
      %1467 = vperm.xlu0 %1466, %v1464
      %v1468 = vpop.permute.xlu0 %1467
      %v1470 = vmul.f32 %v1461, %v1468
      %v1471 = vmul.f32 %v1462, %v1468
      %v1472 = vmul.f32 %v1463, %v1468
      %1474 = vset.pattern.permute.xlu0 0
      %1475 = vperm.xlu0 %1474, %v1321
      %v1476 = vpop.permute.xlu0 %1475
      %v1478 = vadd.f32 %v1476, %v1470
      %v1479 = vadd.f32 %v1476, %v1471
      %v1480 = vadd.f32 %v1476, %v1472
      %v1481 = vxor.u32 %v1478, 2147483648
      %v1482 = vxor.u32 %v1479, 2147483648
      %v1483 = vxor.u32 %v1480, 2147483648
      %v1484 = vmul.f32 %v1481, 1.442695
      %v1485 = vpow.pop %v1484
      %v1486 = vmul.f32 %v1482, 1.442695
      %v1487 = vpow.pop %v1486
      %v1488 = vmul.f32 %v1483, 1.442695
      %v1489 = vpow.pop %v1488
      %v1490 = vadd.f32 %v1485, 1.0
      %v1491 = vadd.f32 %v1487, 1.0
      %v1492 = vadd.f32 %v1489, 1.0
      %v1493 = vrcp.pop %v1490
      %v1494 = vmul.f32 %v1490, %v1493
      %v1495 = vsub.f32 1.0, %v1494
      %v1496 = vmul.f32 %v1493, %v1495
      %v1497 = vadd.f32 %v1493, %v1496
      %vm1498 = vweird.f32 %v1490
      %vm1499 = vweird.f32 %v1493
      %vm1500 = vmor %vm1498, %vm1499
      %v1501 = vsel %vm1500, %v1493, %v1497
      %v1502 = vand.u32 2147483647, %v1490
      %vm1503 = vcmp.eq.f32.partialorder %v1502, 8.507059e+37
      %v1504 = vand.u32 %v1490, 2147483648
      %v1505 = vor.u32 1.1754944e-38, %v1504
      %v1506 = vsel %vm1503, %v1505, %v1501
      %v1507 = vmul.f32 1.0, %v1506
      %v1508 = vrcp.pop %v1491
      %v1509 = vmul.f32 %v1491, %v1508
      %v1510 = vsub.f32 1.0, %v1509
      %v1511 = vmul.f32 %v1508, %v1510
      %v1512 = vadd.f32 %v1508, %v1511
      %vm1513 = vweird.f32 %v1491
      %vm1514 = vweird.f32 %v1508
      %vm1515 = vmor %vm1513, %vm1514
      %v1516 = vsel %vm1515, %v1508, %v1512
      %v1517 = vand.u32 2147483647, %v1491
      %vm1518 = vcmp.eq.f32.partialorder %v1517, 8.507059e+37
      %v1519 = vand.u32 %v1491, 2147483648
      %v1520 = vor.u32 1.1754944e-38, %v1519
      %v1521 = vsel %vm1518, %v1520, %v1516
      %v1522 = vmul.f32 1.0, %v1521
      %v1523 = vrcp.pop %v1492
      %v1524 = vmul.f32 %v1492, %v1523
      %v1525 = vsub.f32 1.0, %v1524
      %v1526 = vmul.f32 %v1523, %v1525
      %v1527 = vadd.f32 %v1523, %v1526
      %vm1528 = vweird.f32 %v1492
      %vm1529 = vweird.f32 %v1523
      %vm1530 = vmor %vm1528, %vm1529
      %v1531 = vsel %vm1530, %v1523, %v1527
      %v1532 = vand.u32 2147483647, %v1492
      %vm1533 = vcmp.eq.f32.partialorder %v1532, 8.507059e+37
      %v1534 = vand.u32 %v1492, 2147483648
      %v1535 = vor.u32 1.1754944e-38, %v1534
      %v1536 = vsel %vm1533, %v1535, %v1531
      %v1537 = vmul.f32 1.0, %v1536
      %v1538 = vmul.f32 %v1478, %v1507
      %v1539 = vmul.f32 %v1479, %v1522
      %v1540 = vmul.f32 %v1480, %v1537
      %v1541 = vmul.f32 %v1538, %v1326
      %v1542 = vmul.f32 %v1539, %v1327
      %v1543 = vmul.f32 %v1540, %v1328
      %v1544 = vld [vmem:[%s13] sm:$0xff]
      %v1545 = vld [vmem:[%s13 + $0x8] sm:$0xff]
      %v1546 = vld [vmem:[%s13 + $0x10] sm:$0xff]
      %v1547 = vld [vmem:[%s13 + $0x18] sm:$0xff]
      %v1548 = vld [vmem:[%s13 + $0x20] sm:$0xff]
      %v1549 = vld [vmem:[%s13 + $0x28] sm:$0xff]
      %v1550 = vld [vmem:[%s13 + $0x30] sm:$0xff]
      %v1551 = vld [vmem:[%s13 + $0x38] sm:$0xff]
      %v1552 = vld [vmem:[%s13 + $0x40] sm:$0xff]
      %v1553 = vld [vmem:[%s14] sm:$0xff]
      %vm1554 = vcmask 64512
      %v1556 = vsel %vm1554, %v1544, 0
      %v1559 = vsel %vm1554, %v1545, 0
      %v1562 = vsel %vm1554, %v1546, 0
      %v1565 = vsel %vm1554, %v1547, 0
      %v1568 = vsel %vm1554, %v1548, 0
      %v1571 = vsel %vm1554, %v1549, 0
      %v1574 = vsel %vm1554, %v1550, 0
      %v1577 = vsel %vm1554, %v1551, 0
      %v1580 = vsel %vm1554, %v1552, 0
      %1582 = vmatpush.msra.mxu0 0.0
      %1583 = vmatpush.msra.mxu0 0.0
      %1584 = vmatpush.msra.mxu0 0.0
      %1585 = vmatpush.msra.mxu0 0.0
      %1586 = vmatpush.msra.mxu0 0.0
      %1587 = vmatpush.msra.mxu0 0.0
      %1588 = vmatpush.msra.mxu0 0.0
      %1589 = vmatpush.msra.mxu0 0.0
      %1590 = vmatpush.msra.mxu0 0.0
      %1591 = vmatpush.msra.mxu0 0.0
      %1592 = vmatpush.msra.mxu0 0.0
      %1593 = vmatpush.msra.mxu0 0.0
      %1594 = vmatpush.msra.mxu0 0.0
      %1595 = vmatpush.msra.mxu0 0.0
      %1596 = vmatpush.msra.mxu0 0.0
      %1597 = vmatpush.msra.mxu0 %v1541
      %1598 = vmatmul.f32.gmra.mxu0 %v1556
      %v1599 = vpop.f32.mrf.mxu0
      %v1600 = vadd.f32 0.0, %v1599
      %1601 = vmatmul.f32.gmra.mxu0 %v1559
      %v1602 = vpop.f32.mrf.mxu0
      %v1603 = vadd.f32 0.0, %v1602
      %1604 = vmatmul.f32.gmra.mxu0 %v1562
      %v1605 = vpop.f32.mrf.mxu0
      %v1606 = vadd.f32 0.0, %v1605
      %1607 = vmatmul.f32.gmra.mxu0 %v1565
      %v1608 = vpop.f32.mrf.mxu0
      %v1609 = vadd.f32 0.0, %v1608
      %1610 = vmatmul.f32.gmra.mxu0 %v1568
      %v1611 = vpop.f32.mrf.mxu0
      %v1612 = vadd.f32 0.0, %v1611
      %1613 = vmatmul.f32.gmra.mxu0 %v1571
      %v1614 = vpop.f32.mrf.mxu0
      %v1615 = vadd.f32 0.0, %v1614
      %1616 = vmatmul.f32.gmra.mxu0 %v1574
      %v1617 = vpop.f32.mrf.mxu0
      %v1618 = vadd.f32 0.0, %v1617
      %1619 = vmatmul.f32.gmra.mxu0 %v1577
      %v1620 = vpop.f32.mrf.mxu0
      %v1621 = vadd.f32 0.0, %v1620
      %1622 = vmatmul.f32.gmra.mxu0 %v1580
      %v1623 = vpop.f32.mrf.mxu0
      %v1624 = vadd.f32 0.0, %v1623
      %1625 = vdwg.mxu0
      %1626 = vmatpush.msra.mxu0 0.0
      %1627 = vmatpush.msra.mxu0 0.0
      %1628 = vmatpush.msra.mxu0 0.0
      %1629 = vmatpush.msra.mxu0 0.0
      %1630 = vmatpush.msra.mxu0 0.0
      %1631 = vmatpush.msra.mxu0 0.0
      %1632 = vmatpush.msra.mxu0 0.0
      %1633 = vmatpush.msra.mxu0 0.0
      %1634 = vmatpush.msra.mxu0 0.0
      %1635 = vmatpush.msra.mxu0 0.0
      %1636 = vmatpush.msra.mxu0 0.0
      %1637 = vmatpush.msra.mxu0 0.0
      %1638 = vmatpush.msra.mxu0 0.0
      %1639 = vmatpush.msra.mxu0 0.0
      %1640 = vmatpush.msra.mxu0 0.0
      %1641 = vmatpush.msra.mxu0 %v1542
      %1642 = vmatmul.f32.gmra.mxu0 %v1556
      %v1643 = vpop.f32.mrf.mxu0
      %v1644 = vadd.f32 0.0, %v1643
      %1645 = vmatmul.f32.gmra.mxu0 %v1559
      %v1646 = vpop.f32.mrf.mxu0
      %v1647 = vadd.f32 0.0, %v1646
      %1648 = vmatmul.f32.gmra.mxu0 %v1562
      %v1649 = vpop.f32.mrf.mxu0
      %v1650 = vadd.f32 0.0, %v1649
      %1651 = vmatmul.f32.gmra.mxu0 %v1565
      %v1652 = vpop.f32.mrf.mxu0
      %v1653 = vadd.f32 0.0, %v1652
      %1654 = vmatmul.f32.gmra.mxu0 %v1568
      %v1655 = vpop.f32.mrf.mxu0
      %v1656 = vadd.f32 0.0, %v1655
      %1657 = vmatmul.f32.gmra.mxu0 %v1571
      %v1658 = vpop.f32.mrf.mxu0
      %v1659 = vadd.f32 0.0, %v1658
      %1660 = vmatmul.f32.gmra.mxu0 %v1574
      %v1661 = vpop.f32.mrf.mxu0
      %v1662 = vadd.f32 0.0, %v1661
      %1663 = vmatmul.f32.gmra.mxu0 %v1577
      %v1664 = vpop.f32.mrf.mxu0
      %v1665 = vadd.f32 0.0, %v1664
      %1666 = vmatmul.f32.gmra.mxu0 %v1580
      %v1667 = vpop.f32.mrf.mxu0
      %v1668 = vadd.f32 0.0, %v1667
      %1669 = vdwg.mxu0
      %1670 = vmatpush.msra.mxu0 0.0
      %1671 = vmatpush.msra.mxu0 0.0
      %1672 = vmatpush.msra.mxu0 0.0
      %1673 = vmatpush.msra.mxu0 0.0
      %1674 = vmatpush.msra.mxu0 0.0
      %1675 = vmatpush.msra.mxu0 0.0
      %1676 = vmatpush.msra.mxu0 0.0
      %1677 = vmatpush.msra.mxu0 0.0
      %1678 = vmatpush.msra.mxu0 0.0
      %1679 = vmatpush.msra.mxu0 0.0
      %1680 = vmatpush.msra.mxu0 0.0
      %1681 = vmatpush.msra.mxu0 0.0
      %1682 = vmatpush.msra.mxu0 0.0
      %1683 = vmatpush.msra.mxu0 0.0
      %1684 = vmatpush.msra.mxu0 0.0
      %1685 = vmatpush.msra.mxu0 %v1543
      %1686 = vmatmul.f32.gmra.mxu0 %v1556
      %v1687 = vpop.f32.mrf.mxu0
      %v1688 = vadd.f32 0.0, %v1687
      %1689 = vmatmul.f32.gmra.mxu0 %v1559
      %v1690 = vpop.f32.mrf.mxu0
      %v1691 = vadd.f32 0.0, %v1690
      %1692 = vmatmul.f32.gmra.mxu0 %v1562
      %v1693 = vpop.f32.mrf.mxu0
      %v1694 = vadd.f32 0.0, %v1693
      %1695 = vmatmul.f32.gmra.mxu0 %v1565
      %v1696 = vpop.f32.mrf.mxu0
      %v1697 = vadd.f32 0.0, %v1696
      %1698 = vmatmul.f32.gmra.mxu0 %v1568
      %v1699 = vpop.f32.mrf.mxu0
      %v1700 = vadd.f32 0.0, %v1699
      %1701 = vmatmul.f32.gmra.mxu0 %v1571
      %v1702 = vpop.f32.mrf.mxu0
      %v1703 = vadd.f32 0.0, %v1702
      %1704 = vmatmul.f32.gmra.mxu0 %v1574
      %v1705 = vpop.f32.mrf.mxu0
      %v1706 = vadd.f32 0.0, %v1705
      %1707 = vmatmul.f32.gmra.mxu0 %v1577
      %v1708 = vpop.f32.mrf.mxu0
      %v1709 = vadd.f32 0.0, %v1708
      %1710 = vmatmul.f32.gmra.mxu0 %v1580
      %v1711 = vpop.f32.mrf.mxu0
      %v1712 = vadd.f32 0.0, %v1711
      %1713 = vdwg.mxu0
      %1717 = vrot.lane.b32.xlu0 %v1603, 127
      %v1718 = vpop.permute.xlu0 %1717
      %1719 = vrot.lane.b32.xlu0 %v1647, 127
      %v1720 = vpop.permute.xlu0 %1719
      %1721 = vrot.lane.b32.xlu0 %v1691, 127
      %v1722 = vpop.permute.xlu0 %1721
      %v1723 = vsel %vm1130, %v1718, %v1720
      %v1724 = vsel %vm1130, %v1720, %v1722
      %v1728 = vadd.f32 %v1600, %v1723
      %v1729 = vadd.f32 %v1644, %v1724
      %v1730 = vadd.f32 %v1688, %v1722
      %1734 = vrot.lane.b32.xlu0 %v1606, 126
      %v1735 = vpop.permute.xlu0 %1734
      %1736 = vrot.lane.b32.xlu0 %v1650, 126
      %v1737 = vpop.permute.xlu0 %1736
      %1738 = vrot.lane.b32.xlu0 %v1694, 126
      %v1739 = vpop.permute.xlu0 %1738
      %v1740 = vsel %vm1148, %v1735, %v1737
      %v1741 = vsel %vm1148, %v1737, %v1739
      %v1745 = vadd.f32 %v1728, %v1740
      %v1746 = vadd.f32 %v1729, %v1741
      %v1747 = vadd.f32 %v1730, %v1739
      %1751 = vrot.lane.b32.xlu0 %v1609, 110
      %v1752 = vpop.permute.xlu0 %1751
      %1753 = vrot.lane.b32.xlu0 %v1653, 110
      %v1754 = vpop.permute.xlu0 %1753
      %1755 = vrot.lane.b32.xlu0 %v1697, 110
      %v1756 = vpop.permute.xlu0 %1755
      %v1757 = vsel %vm1166, %v1752, %v1754
      %v1758 = vsel %vm1166, %v1754, %v1756
      %v1762 = vadd.f32 %v1745, %v1757
      %v1763 = vadd.f32 %v1746, %v1758
      %v1764 = vadd.f32 %v1747, %v1756
      %1768 = vrot.lane.b32.xlu0 %v1612, 109
      %v1769 = vpop.permute.xlu0 %1768
      %1770 = vrot.lane.b32.xlu0 %v1656, 109
      %v1771 = vpop.permute.xlu0 %1770
      %1772 = vrot.lane.b32.xlu0 %v1700, 109
      %v1773 = vpop.permute.xlu0 %1772
      %v1774 = vsel %vm1184, %v1769, %v1771
      %v1775 = vsel %vm1184, %v1771, %v1773
      %v1779 = vadd.f32 %v1762, %v1774
      %v1780 = vadd.f32 %v1763, %v1775
      %v1781 = vadd.f32 %v1764, %v1773
      %1785 = vrot.lane.b32.xlu0 %v1615, 108
      %v1786 = vpop.permute.xlu0 %1785
      %1787 = vrot.lane.b32.xlu0 %v1659, 108
      %v1788 = vpop.permute.xlu0 %1787
      %1789 = vrot.lane.b32.xlu0 %v1703, 108
      %v1790 = vpop.permute.xlu0 %1789
      %v1791 = vsel %vm1202, %v1786, %v1788
      %v1792 = vsel %vm1202, %v1788, %v1790
      %v1796 = vadd.f32 %v1779, %v1791
      %v1797 = vadd.f32 %v1780, %v1792
      %v1798 = vadd.f32 %v1781, %v1790
      %1802 = vrot.lane.b32.xlu0 %v1618, 92
      %v1803 = vpop.permute.xlu0 %1802
      %1804 = vrot.lane.b32.xlu0 %v1662, 92
      %v1805 = vpop.permute.xlu0 %1804
      %1806 = vrot.lane.b32.xlu0 %v1706, 92
      %v1807 = vpop.permute.xlu0 %1806
      %v1808 = vsel %vm1223, %v1803, %v1805
      %v1809 = vsel %vm1223, %v1805, %v1807
      %v1813 = vadd.f32 %v1796, %v1808
      %v1814 = vadd.f32 %v1797, %v1809
      %v1815 = vadd.f32 %v1798, %v1807
      %1819 = vrot.lane.b32.xlu0 %v1621, 91
      %v1820 = vpop.permute.xlu0 %1819
      %1821 = vrot.lane.b32.xlu0 %v1665, 91
      %v1822 = vpop.permute.xlu0 %1821
      %1823 = vrot.lane.b32.xlu0 %v1709, 91
      %v1824 = vpop.permute.xlu0 %1823
      %v1825 = vsel %vm1245, %v1820, %v1822
      %v1826 = vsel %vm1245, %v1822, %v1824
      %v1830 = vadd.f32 %v1813, %v1825
      %v1831 = vadd.f32 %v1814, %v1826
      %v1832 = vadd.f32 %v1815, %v1824
      %1836 = vrot.lane.b32.xlu0 %v1624, 90
      %v1837 = vpop.permute.xlu0 %1836
      %1838 = vrot.lane.b32.xlu0 %v1668, 90
      %v1839 = vpop.permute.xlu0 %1838
      %1840 = vrot.lane.b32.xlu0 %v1712, 90
      %v1841 = vpop.permute.xlu0 %1840
      %v1842 = vsel %vm1267, %v1837, %v1839
      %v1843 = vsel %vm1267, %v1839, %v1841
      %v1847 = vadd.f32 %v1830, %v1842
      %v1848 = vadd.f32 %v1831, %v1843
      %v1849 = vadd.f32 %v1832, %v1841
      %1851 = vset.pattern.permute.xlu0 0
      %1852 = vperm.xlu0 %1851, %v1553
      %v1853 = vpop.permute.xlu0 %1852
      %v1855 = vadd.f32 %v1847, %v1853
      %v1856 = vadd.f32 %v1848, %v1853
      %v1857 = vadd.f32 %v1849, %v1853
      %v1858 = vld [vmem:[%s15] sm:$0xff]
      %v1859 = vld [vmem:[%s16] sm:$0xff]
      %1861 = vset.pattern.permute.xlu0 0
      %1862 = vperm.xlu0 %1861, %v1859
      %v1863 = vpop.permute.xlu0 %1862
      %1867 = vst [vmem:[#allocation1] ss:$2 sm:$0xff] %v731
      %s1868 = scalar_lea.vmem [#allocation1], 16
      %1869 = vst [vmem:[%s1868] ss:$2 sm:$0xff] %v732
      %v1870 = vld.sshfl [vmem:[#allocation1] sm:$0xff pattern:$0x75316420]
      %v1871 = vld.sshfl [vmem:[#allocation1 + $0x8] sm:$0xff pattern:$0x75316420]
      %v1872 = vld.sshfl [vmem:[#allocation1 + $0x10] sm:$0xff pattern:$0x75316420]
      %1873 = vrot.lane.b32.xlu0 %v1870, 90
      %v1874 = vpop.permute.xlu0 %1873
      %1875 = vrot.lane.b32.xlu0 %v1871, 90
      %v1876 = vpop.permute.xlu0 %1875
      %1877 = vrot.lane.b32.xlu0 %v1872, 90
      %v1878 = vpop.permute.xlu0 %1877
      %v1879 = vsel %vm1267, %v1874, %v1876
      %v1880 = vsel %vm1267, %v1876, %v1878
      %v1882 = vsel %vm915, %v1858, 0
      %v1884 = vsel %vm745, %v1879, 0
      %v1886 = vsel %vm745, %v1880, 0
      %v1888 = vsel %vm745, %v1878, 0
      %1890 = vmatpush.msra.mxu0 0.0
      %1891 = vmatpush.msra.mxu0 0.0
      %1892 = vmatpush.msra.mxu0 0.0
      %1893 = vmatpush.msra.mxu0 0.0
      %1894 = vmatpush.msra.mxu0 0.0
      %1895 = vmatpush.msra.mxu0 0.0
      %1896 = vmatpush.msra.mxu0 0.0
      %1897 = vmatpush.msra.mxu0 0.0
      %1898 = vmatpush.msra.mxu0 0.0
      %1899 = vmatpush.msra.mxu0 0.0
      %1900 = vmatpush.msra.mxu0 0.0
      %1901 = vmatpush.msra.mxu0 0.0
      %1902 = vmatpush.msra.mxu0 0.0
      %1903 = vmatpush.msra.mxu0 0.0
      %1904 = vmatpush.msra.mxu0 0.0
      %1905 = vmatpush.msra.mxu0 %v1884
      %1906 = vmatmul.f32.gmra.mxu0 %v1882
      %v1907 = vpop.f32.mrf.mxu0
      %v1908 = vadd.f32 %v1863, %v1907
      %1909 = vdwg.mxu0
      %1910 = vmatpush.msra.mxu0 0.0
      %1911 = vmatpush.msra.mxu0 0.0
      %1912 = vmatpush.msra.mxu0 0.0
      %1913 = vmatpush.msra.mxu0 0.0
      %1914 = vmatpush.msra.mxu0 0.0
      %1915 = vmatpush.msra.mxu0 0.0
      %1916 = vmatpush.msra.mxu0 0.0
      %1917 = vmatpush.msra.mxu0 0.0
      %1918 = vmatpush.msra.mxu0 0.0
      %1919 = vmatpush.msra.mxu0 0.0
      %1920 = vmatpush.msra.mxu0 0.0
      %1921 = vmatpush.msra.mxu0 0.0
      %1922 = vmatpush.msra.mxu0 0.0
      %1923 = vmatpush.msra.mxu0 0.0
      %1924 = vmatpush.msra.mxu0 0.0
      %1925 = vmatpush.msra.mxu0 %v1886
      %1926 = vmatmul.f32.gmra.mxu0 %v1882
      %v1927 = vpop.f32.mrf.mxu0
      %v1928 = vadd.f32 %v1863, %v1927
      %1929 = vdwg.mxu0
      %1930 = vmatpush.msra.mxu0 0.0
      %1931 = vmatpush.msra.mxu0 0.0
      %1932 = vmatpush.msra.mxu0 0.0
      %1933 = vmatpush.msra.mxu0 0.0
      %1934 = vmatpush.msra.mxu0 0.0
      %1935 = vmatpush.msra.mxu0 0.0
      %1936 = vmatpush.msra.mxu0 0.0
      %1937 = vmatpush.msra.mxu0 0.0
      %1938 = vmatpush.msra.mxu0 0.0
      %1939 = vmatpush.msra.mxu0 0.0
      %1940 = vmatpush.msra.mxu0 0.0
      %1941 = vmatpush.msra.mxu0 0.0
      %1942 = vmatpush.msra.mxu0 0.0
      %1943 = vmatpush.msra.mxu0 0.0
      %1944 = vmatpush.msra.mxu0 0.0
      %1945 = vmatpush.msra.mxu0 %v1888
      %1946 = vmatmul.f32.gmra.mxu0 %v1882
      %v1947 = vpop.f32.mrf.mxu0
      %v1948 = vadd.f32 %v1863, %v1947
      %1949 = vdwg.mxu0
      %v1950 = vadd.f32 %v1855, %v1908
      %v1951 = vadd.f32 %v1856, %v1928
      %v1952 = vadd.f32 %v1857, %v1948
      %v1953 = vld [vmem:[%s17] sm:$0xff]
      %v1954 = vld [vmem:[%s18] sm:$0xff]
      %v1956 = vperm.slane %v735, 0
      %v1957 = vperm.slane %v735, 1
      %v1958 = vperm.slane %v735, 2
      %v1962 = vmul.f32 %v1950, %v1956
      %v1963 = vmul.f32 %v1951, %v1957
      %v1964 = vmul.f32 %v1952, %v1958
      %v1965 = vsel %vm745, %v1962, 0.0
      %v1966 = vsel %vm745, %v1963, 0.0
      %v1967 = vadd.f32 %v1965, %v1966
      %vm1968 = vcmask 551936
      %v1969 = vsel %vm1968, %v1964, 0.0
      %v1970 = vadd.f32 %v1967, %v1969
      %1971 = vadd.xlane.f32.xlu0 %v1970
      %v1972 = vpop.xlane.xlu0 %1971
      %v1973 = vsel %vm745, %v1972, 0.0
      %v1974 = vrot.slane %v1973, 4
      %v1975 = vadd.f32 %v1973, %v1974
      %v1976 = vrot.slane %v1975, 2
      %v1977 = vadd.f32 %v1975, %v1976
      %v1978 = vrot.slane %v1977, 1
      %v1979 = vadd.f32 %v1977, %v1978
      %v1980 = vmul.f32 %v1979, 0.0009765625
      %v1981 = vmul.f32 %v1962, %v1950
      %v1982 = vmul.f32 %v1963, %v1951
      %v1983 = vmul.f32 %v1964, %v1952
      %v1984 = vsel %vm745, %v1981, 0.0
      %v1985 = vsel %vm745, %v1982, 0.0
      %v1986 = vadd.f32 %v1984, %v1985
      %v1987 = vsel %vm1968, %v1983, 0.0
      %v1988 = vadd.f32 %v1986, %v1987
      %1989 = vadd.xlane.f32.xlu0 %v1988
      %v1990 = vpop.xlane.xlu0 %1989
      %v1991 = vsel %vm745, %v1990, 0.0
      %v1992 = vrot.slane %v1991, 4
      %v1993 = vadd.f32 %v1991, %v1992
      %v1994 = vrot.slane %v1993, 2
      %v1995 = vadd.f32 %v1993, %v1994
      %v1996 = vrot.slane %v1995, 1
      %v1997 = vadd.f32 %v1995, %v1996
      %v1998 = vmul.f32 %v1997, 0.0009765625
      %v1999 = vmul.f32 %v1980, %v1980
      %v2000 = vsub.f32 %v1998, %v1999
      %v2001 = vadd.f32 %v2000, 1e-05
      %v2002 = vrsqrt.pop %v2001
      %v2003 = vmul.f32 %v2002, %v2001
      %v2004 = vmul.f32 %v2003, %v2002
      %v2005 = vmul.f32 0.5, %v2004
      %v2006 = vsub.f32 1.5, %v2005
      %v2007 = vmul.f32 %v2002, %v2006
      %vm2008 = vweird.f32 %v2001
      %vm2009 = vweird.f32 %v2002
      %vm2010 = vmor %vm2008, %vm2009
      %v2011 = vsel %vm2010, %v2002, %v2007
      %v2012 = vsub.f32 %v1950, %v1980
      %v2013 = vsub.f32 %v1951, %v1980
      %v2014 = vsub.f32 %v1952, %v1980
      %v2015 = vmul.f32 %v2012, %v2011
      %v2016 = vmul.f32 %v2013, %v2011
      %v2017 = vmul.f32 %v2014, %v2011
      %v2018 = vsel %vm1388, %v1962, 0.0
      %v2019 = vsel %vm1388, %v1963, 0.0
      %v2020 = vadd.f32 %v2018, %v2019
      %vm2021 = vcmask 556036
      %v2022 = vsel %vm2021, %v1964, 0.0
      %v2023 = vadd.f32 %v2020, %v2022
      %2024 = vadd.xlane.f32.xlu0 %v2023
      %v2025 = vpop.xlane.xlu0 %2024
      %v2027 = vrot.slane %v2025, 4
      %v2029 = vsel %vm745, %v2027, 0.0
      %v2030 = vrot.slane %v2029, 4
      %v2031 = vadd.f32 %v2029, %v2030
      %v2032 = vrot.slane %v2031, 2
      %v2033 = vadd.f32 %v2031, %v2032
      %v2034 = vrot.slane %v2033, 1
      %v2035 = vadd.f32 %v2033, %v2034
      %v2036 = vmul.f32 %v2035, 0.0009765625
      %v2037 = vsel %vm1388, %v1981, 0.0
      %v2038 = vsel %vm1388, %v1982, 0.0
      %v2039 = vadd.f32 %v2037, %v2038
      %v2040 = vsel %vm2021, %v1983, 0.0
      %v2041 = vadd.f32 %v2039, %v2040
      %2042 = vadd.xlane.f32.xlu0 %v2041
      %v2043 = vpop.xlane.xlu0 %2042
      %v2045 = vrot.slane %v2043, 4
      %v2047 = vsel %vm745, %v2045, 0.0
      %v2048 = vrot.slane %v2047, 4
      %v2049 = vadd.f32 %v2047, %v2048
      %v2050 = vrot.slane %v2049, 2
      %v2051 = vadd.f32 %v2049, %v2050
      %v2052 = vrot.slane %v2051, 1
      %v2053 = vadd.f32 %v2051, %v2052
      %v2054 = vmul.f32 %v2053, 0.0009765625
      %v2055 = vmul.f32 %v2036, %v2036
      %v2056 = vsub.f32 %v2054, %v2055
      %v2057 = vadd.f32 %v2056, 1e-05
      %v2058 = vrsqrt.pop %v2057
      %v2059 = vmul.f32 %v2058, %v2057
      %v2060 = vmul.f32 %v2059, %v2058
      %v2061 = vmul.f32 0.5, %v2060
      %v2062 = vsub.f32 1.5, %v2061
      %v2063 = vmul.f32 %v2058, %v2062
      %vm2064 = vweird.f32 %v2057
      %vm2065 = vweird.f32 %v2058
      %vm2066 = vmor %vm2064, %vm2065
      %v2067 = vsel %vm2066, %v2058, %v2063
      %v2068 = vsub.f32 %v1950, %v2036
      %v2069 = vsub.f32 %v1951, %v2036
      %v2070 = vsub.f32 %v1952, %v2036
      %v2071 = vmul.f32 %v2068, %v2067
      %v2072 = vmul.f32 %v2069, %v2067
      %v2073 = vmul.f32 %v2070, %v2067
      %v2074 = vsel %vm745, %v2015, %v2071
      %v2075 = vsel %vm745, %v2016, %v2072
      %v2076 = vsel %vm745, %v2017, %v2073
      %2078 = vset.pattern.permute.xlu0 0
      %2079 = vperm.xlu0 %2078, %v1953
      %v2080 = vpop.permute.xlu0 %2079
      %v2082 = vmul.f32 %v2074, %v2080
      %v2083 = vmul.f32 %v2075, %v2080
      %v2084 = vmul.f32 %v2076, %v2080
      %2086 = vset.pattern.permute.xlu0 0
      %2087 = vperm.xlu0 %2086, %v1954
      %v2088 = vpop.permute.xlu0 %2087
      %v2090 = vadd.f32 %v2082, %v2088
      %v2091 = vadd.f32 %v2083, %v2088
      %v2092 = vadd.f32 %v2084, %v2088
      %v2093 = vmul.f32 %v2090, %v1956
      %v2094 = vmul.f32 %v2091, %v1957
      %v2095 = vmul.f32 %v2092, %v1958
      %v2096 = vld [vmem:[%s19] sm:$0xff]
      %v2097 = vld [vmem:[%s19 + $0x8] sm:$0xff]
      %v2098 = vld [vmem:[%s19 + $0x10] sm:$0xff]
      %v2099 = vld [vmem:[%s20] sm:$0xff]
      %v2100 = vld [vmem:[%s20 + $0x8] sm:$0xff]
      %v2101 = vld [vmem:[%s20 + $0x10] sm:$0xff]
      %2103 = vset.pattern.permute.xlu0 0
      %2104 = vperm.xlu0 %2103, %v2099
      %v2105 = vpop.permute.xlu0 %2104
      %2108 = vset.pattern.permute.xlu0 0
      %2109 = vperm.xlu0 %2108, %v2100
      %v2110 = vpop.permute.xlu0 %2109
      %2113 = vset.pattern.permute.xlu0 0
      %2114 = vperm.xlu0 %2113, %v2101
      %v2115 = vpop.permute.xlu0 %2114
      %v2118 = vsel %vm1554, %v2096, 0
      %v2121 = vsel %vm1554, %v2097, 0
      %v2124 = vsel %vm1554, %v2098, 0
      %2126 = vmatpush.msra.mxu0 0.0
      %2127 = vmatpush.msra.mxu0 0.0
      %2128 = vmatpush.msra.mxu0 0.0
      %2129 = vmatpush.msra.mxu0 0.0
      %2130 = vmatpush.msra.mxu0 0.0
      %2131 = vmatpush.msra.mxu0 0.0
      %2132 = vmatpush.msra.mxu0 0.0
      %2133 = vmatpush.msra.mxu0 0.0
      %2134 = vmatpush.msra.mxu0 0.0
      %2135 = vmatpush.msra.mxu0 0.0
      %2136 = vmatpush.msra.mxu0 0.0
      %2137 = vmatpush.msra.mxu0 0.0
      %2138 = vmatpush.msra.mxu0 0.0
      %2139 = vmatpush.msra.mxu0 0.0
      %2140 = vmatpush.msra.mxu0 0.0
      %2141 = vmatpush.msra.mxu0 %v2093
      %2142 = vmatmul.f32.gmra.mxu0 %v2118
      %v2143 = vpop.f32.mrf.mxu0
      %v2144 = vadd.f32 %v2105, %v2143
      %2145 = vmatmul.f32.gmra.mxu0 %v2121
      %v2146 = vpop.f32.mrf.mxu0
      %v2147 = vadd.f32 %v2110, %v2146
      %2148 = vmatmul.f32.gmra.mxu0 %v2124
      %v2149 = vpop.f32.mrf.mxu0
      %v2150 = vadd.f32 %v2115, %v2149
      %2151 = vdwg.mxu0
      %2152 = vmatpush.msra.mxu0 0.0
      %2153 = vmatpush.msra.mxu0 0.0
      %2154 = vmatpush.msra.mxu0 0.0
      %2155 = vmatpush.msra.mxu0 0.0
      %2156 = vmatpush.msra.mxu0 0.0
      %2157 = vmatpush.msra.mxu0 0.0
      %2158 = vmatpush.msra.mxu0 0.0
      %2159 = vmatpush.msra.mxu0 0.0
      %2160 = vmatpush.msra.mxu0 0.0
      %2161 = vmatpush.msra.mxu0 0.0
      %2162 = vmatpush.msra.mxu0 0.0
      %2163 = vmatpush.msra.mxu0 0.0
      %2164 = vmatpush.msra.mxu0 0.0
      %2165 = vmatpush.msra.mxu0 0.0
      %2166 = vmatpush.msra.mxu0 0.0
      %2167 = vmatpush.msra.mxu0 %v2094
      %2168 = vmatmul.f32.gmra.mxu0 %v2118
      %v2169 = vpop.f32.mrf.mxu0
      %v2170 = vadd.f32 %v2105, %v2169
      %2171 = vmatmul.f32.gmra.mxu0 %v2121
      %v2172 = vpop.f32.mrf.mxu0
      %v2173 = vadd.f32 %v2110, %v2172
      %2174 = vmatmul.f32.gmra.mxu0 %v2124
      %v2175 = vpop.f32.mrf.mxu0
      %v2176 = vadd.f32 %v2115, %v2175
      %2177 = vdwg.mxu0
      %2178 = vmatpush.msra.mxu0 0.0
      %2179 = vmatpush.msra.mxu0 0.0
      %2180 = vmatpush.msra.mxu0 0.0
      %2181 = vmatpush.msra.mxu0 0.0
      %2182 = vmatpush.msra.mxu0 0.0
      %2183 = vmatpush.msra.mxu0 0.0
      %2184 = vmatpush.msra.mxu0 0.0
      %2185 = vmatpush.msra.mxu0 0.0
      %2186 = vmatpush.msra.mxu0 0.0
      %2187 = vmatpush.msra.mxu0 0.0
      %2188 = vmatpush.msra.mxu0 0.0
      %2189 = vmatpush.msra.mxu0 0.0
      %2190 = vmatpush.msra.mxu0 0.0
      %2191 = vmatpush.msra.mxu0 0.0
      %2192 = vmatpush.msra.mxu0 0.0
      %2193 = vmatpush.msra.mxu0 %v2095
      %2194 = vmatmul.f32.gmra.mxu0 %v2118
      %v2195 = vpop.f32.mrf.mxu0
      %v2196 = vadd.f32 %v2105, %v2195
      %2197 = vmatmul.f32.gmra.mxu0 %v2121
      %v2198 = vpop.f32.mrf.mxu0
      %v2199 = vadd.f32 %v2110, %v2198
      %2200 = vmatmul.f32.gmra.mxu0 %v2124
      %v2201 = vpop.f32.mrf.mxu0
      %v2202 = vadd.f32 %v2115, %v2201
      %2203 = vdwg.mxu0
      %v2204 = vsub.f32 %v735, 1.0
      %v2205 = vmul.f32 %v2204, 1e+30
      %2206 = vxpose.xlu0.b32.start [1/16] %v2144, 128
      %2207 = vxpose.xlu0.b32.cont [2/16] 0.0, 128
      %2208 = vxpose.xlu0.b32.cont [3/16] 0.0, 128
      %2209 = vxpose.xlu0.b32.cont [4/16] 0.0, 128
      %2210 = vxpose.xlu0.b32.cont [5/16] 0.0, 128
      %2211 = vxpose.xlu0.b32.cont [6/16] 0.0, 128
      %2212 = vxpose.xlu0.b32.cont [7/16] 0.0, 128
      %2213 = vxpose.xlu0.b32.cont [8/16] 0.0, 128
      %2214 = vxpose.xlu0.b32.cont [9/16] 0.0, 128
      %2215 = vxpose.xlu0.b32.cont [10/16] 0.0, 128
      %2216 = vxpose.xlu0.b32.cont [11/16] 0.0, 128
      %2217 = vxpose.xlu0.b32.cont [12/16] 0.0, 128
      %2218 = vxpose.xlu0.b32.cont [13/16] 0.0, 128
      %2219 = vxpose.xlu0.b32.cont [14/16] 0.0, 128
      %2220 = vxpose.xlu0.b32.cont [15/16] 0.0, 128
      %2221 = vxpose.xlu0.b32.end [16/16] 0.0, 128
      %v2222 = vpop.trf.xlu0
      %v2223 = vpop.trf.xlu0
      %v2224 = vpop.trf.xlu0
      %v2225 = vpop.trf.xlu0
      %v2226 = vpop.trf.xlu0
      %v2227 = vpop.trf.xlu0
      %v2228 = vpop.trf.xlu0
      %v2229 = vpop.trf.xlu0
      %v2230 = vpop.trf.xlu0
      %v2231 = vpop.trf.xlu0
      %v2232 = vpop.trf.xlu0
      %v2233 = vpop.trf.xlu0
      %v2234 = vpop.trf.xlu0
      %v2235 = vpop.trf.xlu0
      %v2236 = vpop.trf.xlu0
      %v2237 = vpop.trf.xlu0
      %2238 = vxpose.xlu0.b32.start [1/16] %v2170, 128
      %2239 = vxpose.xlu0.b32.cont [2/16] 0.0, 128
      %2240 = vxpose.xlu0.b32.cont [3/16] 0.0, 128
      %2241 = vxpose.xlu0.b32.cont [4/16] 0.0, 128
      %2242 = vxpose.xlu0.b32.cont [5/16] 0.0, 128
      %2243 = vxpose.xlu0.b32.cont [6/16] 0.0, 128
      %2244 = vxpose.xlu0.b32.cont [7/16] 0.0, 128
      %2245 = vxpose.xlu0.b32.cont [8/16] 0.0, 128
      %2246 = vxpose.xlu0.b32.cont [9/16] 0.0, 128
      %2247 = vxpose.xlu0.b32.cont [10/16] 0.0, 128
      %2248 = vxpose.xlu0.b32.cont [11/16] 0.0, 128
      %2249 = vxpose.xlu0.b32.cont [12/16] 0.0, 128
      %2250 = vxpose.xlu0.b32.cont [13/16] 0.0, 128
      %2251 = vxpose.xlu0.b32.cont [14/16] 0.0, 128
      %2252 = vxpose.xlu0.b32.cont [15/16] 0.0, 128
      %2253 = vxpose.xlu0.b32.end [16/16] 0.0, 128
      %v2254 = vpop.trf.xlu0
      %v2255 = vpop.trf.xlu0
      %v2256 = vpop.trf.xlu0
      %v2257 = vpop.trf.xlu0
      %v2258 = vpop.trf.xlu0
      %v2259 = vpop.trf.xlu0
      %v2260 = vpop.trf.xlu0
      %v2261 = vpop.trf.xlu0
      %v2262 = vpop.trf.xlu0
      %v2263 = vpop.trf.xlu0
      %v2264 = vpop.trf.xlu0
      %v2265 = vpop.trf.xlu0
      %v2266 = vpop.trf.xlu0
      %v2267 = vpop.trf.xlu0
      %v2268 = vpop.trf.xlu0
      %v2269 = vpop.trf.xlu0
      %2270 = vxpose.xlu0.b32.start [1/16] %v2196, 128
      %2271 = vxpose.xlu0.b32.cont [2/16] 0.0, 128
      %2272 = vxpose.xlu0.b32.cont [3/16] 0.0, 128
      %2273 = vxpose.xlu0.b32.cont [4/16] 0.0, 128
      %2274 = vxpose.xlu0.b32.cont [5/16] 0.0, 128
      %2275 = vxpose.xlu0.b32.cont [6/16] 0.0, 128
      %2276 = vxpose.xlu0.b32.cont [7/16] 0.0, 128
      %2277 = vxpose.xlu0.b32.cont [8/16] 0.0, 128
      %2278 = vxpose.xlu0.b32.cont [9/16] 0.0, 128
      %2279 = vxpose.xlu0.b32.cont [10/16] 0.0, 128
      %2280 = vxpose.xlu0.b32.cont [11/16] 0.0, 128
      %2281 = vxpose.xlu0.b32.cont [12/16] 0.0, 128
      %2282 = vxpose.xlu0.b32.cont [13/16] 0.0, 128
      %2283 = vxpose.xlu0.b32.cont [14/16] 0.0, 128
      %2284 = vxpose.xlu0.b32.cont [15/16] 0.0, 128
      %2285 = vxpose.xlu0.b32.end [16/16] 0.0, 128
      %v2286 = vpop.trf.xlu0
      %v2287 = vpop.trf.xlu0
      %v2288 = vpop.trf.xlu0
      %v2289 = vpop.trf.xlu0
      %v2290 = vpop.trf.xlu0
      %v2291 = vpop.trf.xlu0
      %v2292 = vpop.trf.xlu0
      %v2293 = vpop.trf.xlu0
      %v2294 = vpop.trf.xlu0
      %v2295 = vpop.trf.xlu0
      %v2296 = vpop.trf.xlu0
      %v2297 = vpop.trf.xlu0
      %v2298 = vpop.trf.xlu0
      %v2299 = vpop.trf.xlu0
      %v2300 = vpop.trf.xlu0
      %v2301 = vpop.trf.xlu0
      %v2305 = vrot.slane %v2144, 4
      %v2306 = vrot.slane %v2170, 4
      %v2307 = vrot.slane %v2196, 4
      %v2309 = vsel %vm915, %v2222, 0
      %v2312 = vsel %vm915, %v2223, 0
      %v2315 = vsel %vm915, %v2224, 0
      %v2318 = vsel %vm915, %v2225, 0
      %v2321 = vsel %vm915, %v2226, 0
      %v2324 = vsel %vm915, %v2227, 0
      %v2327 = vsel %vm915, %v2228, 0
      %v2330 = vsel %vm915, %v2229, 0
      %v2333 = vsel %vm915, %v2230, 0
      %v2336 = vsel %vm915, %v2231, 0
      %v2339 = vsel %vm915, %v2232, 0
      %v2342 = vsel %vm915, %v2233, 0
      %v2345 = vsel %vm915, %v2234, 0
      %v2348 = vsel %vm915, %v2235, 0
      %v2351 = vsel %vm915, %v2236, 0
      %v2354 = vsel %vm915, %v2237, 0
      %v2357 = vsel %vm915, %v2254, 0
      %v2360 = vsel %vm915, %v2255, 0
      %v2363 = vsel %vm915, %v2256, 0
      %v2366 = vsel %vm915, %v2257, 0
      %v2369 = vsel %vm915, %v2258, 0
      %v2372 = vsel %vm915, %v2259, 0
      %v2375 = vsel %vm915, %v2260, 0
      %v2378 = vsel %vm915, %v2261, 0
      %v2381 = vsel %vm915, %v2262, 0
      %v2384 = vsel %vm915, %v2263, 0
      %v2387 = vsel %vm915, %v2264, 0
      %v2390 = vsel %vm915, %v2265, 0
      %v2393 = vsel %vm915, %v2266, 0
      %v2396 = vsel %vm915, %v2267, 0
      %v2399 = vsel %vm915, %v2268, 0
      %v2402 = vsel %vm915, %v2269, 0
      %v2405 = vsel %vm915, %v2286, 0
      %v2408 = vsel %vm915, %v2287, 0
      %v2411 = vsel %vm915, %v2288, 0
      %v2414 = vsel %vm915, %v2289, 0
      %v2417 = vsel %vm915, %v2290, 0
      %v2420 = vsel %vm915, %v2291, 0
      %v2423 = vsel %vm915, %v2292, 0
      %v2426 = vsel %vm915, %v2293, 0
      %v2429 = vsel %vm915, %v2294, 0
      %v2431 = vsel %vm745, %v2305, 0
      %v2433 = vsel %vm745, %v2306, 0
      %v2435 = vsel %vm745, %v2307, 0
      %2437 = vmatpush.msra.mxu0 0.0
      %2438 = vmatpush.msra.mxu0 0.0
      %2439 = vmatpush.msra.mxu0 0.0
      %2440 = vmatpush.msra.mxu0 0.0
      %2441 = vmatpush.msra.mxu0 0.0
      %2442 = vmatpush.msra.mxu0 0.0
      %2443 = vmatpush.msra.mxu0 0.0
      %2444 = vmatpush.msra.mxu0 0.0
      %2445 = vmatpush.msra.mxu0 0.0
      %2446 = vmatpush.msra.mxu0 0.0
      %2447 = vmatpush.msra.mxu0 0.0
      %2448 = vmatpush.msra.mxu0 0.0
      %2449 = vmatpush.msra.mxu0 0.0
      %2450 = vmatpush.msra.mxu0 0.0
      %2451 = vmatpush.msra.mxu0 0.0
      %2452 = vmatpush.msra.mxu0 %v2431
      %2453 = vmatmul.f32.gmra.mxu0 %v2309
      %v2454 = vpop.f32.mrf.mxu0
      %v2455 = vadd.f32 0.0, %v2454
      %2456 = vmatmul.f32.gmra.mxu0 %v2312
      %v2457 = vpop.f32.mrf.mxu0
      %v2458 = vadd.f32 0.0, %v2457
      %2459 = vmatmul.f32.gmra.mxu0 %v2315
      %v2460 = vpop.f32.mrf.mxu0
      %v2461 = vadd.f32 0.0, %v2460
      %2462 = vmatmul.f32.gmra.mxu0 %v2318
      %v2463 = vpop.f32.mrf.mxu0
      %v2464 = vadd.f32 0.0, %v2463
      %2465 = vmatmul.f32.gmra.mxu0 %v2321
      %v2466 = vpop.f32.mrf.mxu0
      %v2467 = vadd.f32 0.0, %v2466
      %2468 = vmatmul.f32.gmra.mxu0 %v2324
      %v2469 = vpop.f32.mrf.mxu0
      %v2470 = vadd.f32 0.0, %v2469
      %2471 = vmatmul.f32.gmra.mxu0 %v2327
      %v2472 = vpop.f32.mrf.mxu0
      %v2473 = vadd.f32 0.0, %v2472
      %2474 = vmatmul.f32.gmra.mxu0 %v2330
      %v2475 = vpop.f32.mrf.mxu0
      %v2476 = vadd.f32 0.0, %v2475
      %2477 = vmatmul.f32.gmra.mxu0 %v2333
      %v2478 = vpop.f32.mrf.mxu0
      %v2479 = vadd.f32 0.0, %v2478
      %2480 = vmatmul.f32.gmra.mxu0 %v2336
      %v2481 = vpop.f32.mrf.mxu0
      %v2482 = vadd.f32 0.0, %v2481
      %2483 = vmatmul.f32.gmra.mxu0 %v2339
      %v2484 = vpop.f32.mrf.mxu0
      %v2485 = vadd.f32 0.0, %v2484
      %2486 = vmatmul.f32.gmra.mxu0 %v2342
      %v2487 = vpop.f32.mrf.mxu0
      %v2488 = vadd.f32 0.0, %v2487
      %2489 = vmatmul.f32.gmra.mxu0 %v2345
      %v2490 = vpop.f32.mrf.mxu0
      %v2491 = vadd.f32 0.0, %v2490
      %2492 = vmatmul.f32.gmra.mxu0 %v2348
      %v2493 = vpop.f32.mrf.mxu0
      %v2494 = vadd.f32 0.0, %v2493
      %2495 = vmatmul.f32.gmra.mxu0 %v2351
      %v2496 = vpop.f32.mrf.mxu0
      %v2497 = vadd.f32 0.0, %v2496
      %2498 = vmatmul.f32.gmra.mxu0 %v2354
      %v2499 = vpop.f32.mrf.mxu0
      %v2500 = vadd.f32 0.0, %v2499
      %2501 = vmatmul.f32.gmra.mxu0 %v2357
      %v2502 = vpop.f32.mrf.mxu0
      %v2503 = vadd.f32 0.0, %v2502
      %2504 = vmatmul.f32.gmra.mxu0 %v2360
      %v2505 = vpop.f32.mrf.mxu0
      %v2506 = vadd.f32 0.0, %v2505
      %2507 = vmatmul.f32.gmra.mxu0 %v2363
      %v2508 = vpop.f32.mrf.mxu0
      %v2509 = vadd.f32 0.0, %v2508
      %2510 = vmatmul.f32.gmra.mxu0 %v2366
      %v2511 = vpop.f32.mrf.mxu0
      %v2512 = vadd.f32 0.0, %v2511
      %2513 = vmatmul.f32.gmra.mxu0 %v2369
      %v2514 = vpop.f32.mrf.mxu0
      %v2515 = vadd.f32 0.0, %v2514
      %2516 = vmatmul.f32.gmra.mxu0 %v2372
      %v2517 = vpop.f32.mrf.mxu0
      %v2518 = vadd.f32 0.0, %v2517
      %2519 = vmatmul.f32.gmra.mxu0 %v2375
      %v2520 = vpop.f32.mrf.mxu0
      %v2521 = vadd.f32 0.0, %v2520
      %2522 = vmatmul.f32.gmra.mxu0 %v2378
      %v2523 = vpop.f32.mrf.mxu0
      %v2524 = vadd.f32 0.0, %v2523
      %2525 = vmatmul.f32.gmra.mxu0 %v2381
      %v2526 = vpop.f32.mrf.mxu0
      %v2527 = vadd.f32 0.0, %v2526
      %2528 = vmatmul.f32.gmra.mxu0 %v2384
      %v2529 = vpop.f32.mrf.mxu0
      %v2530 = vadd.f32 0.0, %v2529
      %2531 = vmatmul.f32.gmra.mxu0 %v2387
      %v2532 = vpop.f32.mrf.mxu0
      %v2533 = vadd.f32 0.0, %v2532
      %2534 = vmatmul.f32.gmra.mxu0 %v2390
      %v2535 = vpop.f32.mrf.mxu0
      %v2536 = vadd.f32 0.0, %v2535
      %2537 = vmatmul.f32.gmra.mxu0 %v2393
      %v2538 = vpop.f32.mrf.mxu0
      %v2539 = vadd.f32 0.0, %v2538
      %2540 = vmatmul.f32.gmra.mxu0 %v2396
      %v2541 = vpop.f32.mrf.mxu0
      %v2542 = vadd.f32 0.0, %v2541
      %2543 = vmatmul.f32.gmra.mxu0 %v2399
      %v2544 = vpop.f32.mrf.mxu0
      %v2545 = vadd.f32 0.0, %v2544
      %2546 = vmatmul.f32.gmra.mxu0 %v2402
      %v2547 = vpop.f32.mrf.mxu0
      %v2548 = vadd.f32 0.0, %v2547
      %2549 = vmatmul.f32.gmra.mxu0 %v2405
      %v2550 = vpop.f32.mrf.mxu0
      %v2551 = vadd.f32 0.0, %v2550
      %2552 = vmatmul.f32.gmra.mxu0 %v2408
      %v2553 = vpop.f32.mrf.mxu0
      %v2554 = vadd.f32 0.0, %v2553
      %2555 = vmatmul.f32.gmra.mxu0 %v2411
      %v2556 = vpop.f32.mrf.mxu0
      %v2557 = vadd.f32 0.0, %v2556
      %2558 = vmatmul.f32.gmra.mxu0 %v2414
      %v2559 = vpop.f32.mrf.mxu0
      %v2560 = vadd.f32 0.0, %v2559
      %2561 = vmatmul.f32.gmra.mxu0 %v2417
      %v2562 = vpop.f32.mrf.mxu0
      %v2563 = vadd.f32 0.0, %v2562
      %2564 = vmatmul.f32.gmra.mxu0 %v2420
      %v2565 = vpop.f32.mrf.mxu0
      %v2566 = vadd.f32 0.0, %v2565
      %2567 = vmatmul.f32.gmra.mxu0 %v2423
      %v2568 = vpop.f32.mrf.mxu0
      %v2569 = vadd.f32 0.0, %v2568
      %2570 = vmatmul.f32.gmra.mxu0 %v2426
      %v2571 = vpop.f32.mrf.mxu0
      %v2572 = vadd.f32 0.0, %v2571
      %2573 = vmatmul.f32.gmra.mxu0 %v2429
      %v2574 = vpop.f32.mrf.mxu0
      %v2575 = vadd.f32 0.0, %v2574
      %2576 = vdwg.mxu0
      %2577 = vmatpush.msra.mxu0 0.0
      %2578 = vmatpush.msra.mxu0 0.0
      %2579 = vmatpush.msra.mxu0 0.0
      %2580 = vmatpush.msra.mxu0 0.0
      %2581 = vmatpush.msra.mxu0 0.0
      %2582 = vmatpush.msra.mxu0 0.0
      %2583 = vmatpush.msra.mxu0 0.0
      %2584 = vmatpush.msra.mxu0 0.0
      %2585 = vmatpush.msra.mxu0 0.0
      %2586 = vmatpush.msra.mxu0 0.0
      %2587 = vmatpush.msra.mxu0 0.0
      %2588 = vmatpush.msra.mxu0 0.0
      %2589 = vmatpush.msra.mxu0 0.0
      %2590 = vmatpush.msra.mxu0 0.0
      %2591 = vmatpush.msra.mxu0 0.0
      %2592 = vmatpush.msra.mxu0 %v2433
      %2593 = vmatmul.f32.gmra.mxu0 %v2309
      %v2594 = vpop.f32.mrf.mxu0
      %v2595 = vadd.f32 0.0, %v2594
      %2596 = vmatmul.f32.gmra.mxu0 %v2312
      %v2597 = vpop.f32.mrf.mxu0
      %v2598 = vadd.f32 0.0, %v2597
      %2599 = vmatmul.f32.gmra.mxu0 %v2315
      %v2600 = vpop.f32.mrf.mxu0
      %v2601 = vadd.f32 0.0, %v2600
      %2602 = vmatmul.f32.gmra.mxu0 %v2318
      %v2603 = vpop.f32.mrf.mxu0
      %v2604 = vadd.f32 0.0, %v2603
      %2605 = vmatmul.f32.gmra.mxu0 %v2321
      %v2606 = vpop.f32.mrf.mxu0
      %v2607 = vadd.f32 0.0, %v2606
      %2608 = vmatmul.f32.gmra.mxu0 %v2324
      %v2609 = vpop.f32.mrf.mxu0
      %v2610 = vadd.f32 0.0, %v2609
      %2611 = vmatmul.f32.gmra.mxu0 %v2327
      %v2612 = vpop.f32.mrf.mxu0
      %v2613 = vadd.f32 0.0, %v2612
      %2614 = vmatmul.f32.gmra.mxu0 %v2330
      %v2615 = vpop.f32.mrf.mxu0
      %v2616 = vadd.f32 0.0, %v2615
      %2617 = vmatmul.f32.gmra.mxu0 %v2333
      %v2618 = vpop.f32.mrf.mxu0
      %v2619 = vadd.f32 0.0, %v2618
      %2620 = vmatmul.f32.gmra.mxu0 %v2336
      %v2621 = vpop.f32.mrf.mxu0
      %v2622 = vadd.f32 0.0, %v2621
      %2623 = vmatmul.f32.gmra.mxu0 %v2339
      %v2624 = vpop.f32.mrf.mxu0
      %v2625 = vadd.f32 0.0, %v2624
      %2626 = vmatmul.f32.gmra.mxu0 %v2342
      %v2627 = vpop.f32.mrf.mxu0
      %v2628 = vadd.f32 0.0, %v2627
      %2629 = vmatmul.f32.gmra.mxu0 %v2345
      %v2630 = vpop.f32.mrf.mxu0
      %v2631 = vadd.f32 0.0, %v2630
      %2632 = vmatmul.f32.gmra.mxu0 %v2348
      %v2633 = vpop.f32.mrf.mxu0
      %v2634 = vadd.f32 0.0, %v2633
      %2635 = vmatmul.f32.gmra.mxu0 %v2351
      %v2636 = vpop.f32.mrf.mxu0
      %v2637 = vadd.f32 0.0, %v2636
      %2638 = vmatmul.f32.gmra.mxu0 %v2354
      %v2639 = vpop.f32.mrf.mxu0
      %v2640 = vadd.f32 0.0, %v2639
      %2641 = vmatmul.f32.gmra.mxu0 %v2357
      %v2642 = vpop.f32.mrf.mxu0
      %v2643 = vadd.f32 0.0, %v2642
      %2644 = vmatmul.f32.gmra.mxu0 %v2360
      %v2645 = vpop.f32.mrf.mxu0
      %v2646 = vadd.f32 0.0, %v2645
      %2647 = vmatmul.f32.gmra.mxu0 %v2363
      %v2648 = vpop.f32.mrf.mxu0
      %v2649 = vadd.f32 0.0, %v2648
      %2650 = vmatmul.f32.gmra.mxu0 %v2366
      %v2651 = vpop.f32.mrf.mxu0
      %v2652 = vadd.f32 0.0, %v2651
      %2653 = vmatmul.f32.gmra.mxu0 %v2369
      %v2654 = vpop.f32.mrf.mxu0
      %v2655 = vadd.f32 0.0, %v2654
      %2656 = vmatmul.f32.gmra.mxu0 %v2372
      %v2657 = vpop.f32.mrf.mxu0
      %v2658 = vadd.f32 0.0, %v2657
      %2659 = vmatmul.f32.gmra.mxu0 %v2375
      %v2660 = vpop.f32.mrf.mxu0
      %v2661 = vadd.f32 0.0, %v2660
      %2662 = vmatmul.f32.gmra.mxu0 %v2378
      %v2663 = vpop.f32.mrf.mxu0
      %v2664 = vadd.f32 0.0, %v2663
      %2665 = vmatmul.f32.gmra.mxu0 %v2381
      %v2666 = vpop.f32.mrf.mxu0
      %v2667 = vadd.f32 0.0, %v2666
      %2668 = vmatmul.f32.gmra.mxu0 %v2384
      %v2669 = vpop.f32.mrf.mxu0
      %v2670 = vadd.f32 0.0, %v2669
      %2671 = vmatmul.f32.gmra.mxu0 %v2387
      %v2672 = vpop.f32.mrf.mxu0
      %v2673 = vadd.f32 0.0, %v2672
      %2674 = vmatmul.f32.gmra.mxu0 %v2390
      %v2675 = vpop.f32.mrf.mxu0
      %v2676 = vadd.f32 0.0, %v2675
      %2677 = vmatmul.f32.gmra.mxu0 %v2393
      %v2678 = vpop.f32.mrf.mxu0
      %v2679 = vadd.f32 0.0, %v2678
      %2680 = vmatmul.f32.gmra.mxu0 %v2396
      %v2681 = vpop.f32.mrf.mxu0
      %v2682 = vadd.f32 0.0, %v2681
      %2683 = vmatmul.f32.gmra.mxu0 %v2399
      %v2684 = vpop.f32.mrf.mxu0
      %v2685 = vadd.f32 0.0, %v2684
      %2686 = vmatmul.f32.gmra.mxu0 %v2402
      %v2687 = vpop.f32.mrf.mxu0
      %v2688 = vadd.f32 0.0, %v2687
      %2689 = vmatmul.f32.gmra.mxu0 %v2405
      %v2690 = vpop.f32.mrf.mxu0
      %v2691 = vadd.f32 0.0, %v2690
      %2692 = vmatmul.f32.gmra.mxu0 %v2408
      %v2693 = vpop.f32.mrf.mxu0
      %v2694 = vadd.f32 0.0, %v2693
      %2695 = vmatmul.f32.gmra.mxu0 %v2411
      %v2696 = vpop.f32.mrf.mxu0
      %v2697 = vadd.f32 0.0, %v2696
      %2698 = vmatmul.f32.gmra.mxu0 %v2414
      %v2699 = vpop.f32.mrf.mxu0
      %v2700 = vadd.f32 0.0, %v2699
      %2701 = vmatmul.f32.gmra.mxu0 %v2417
      %v2702 = vpop.f32.mrf.mxu0
      %v2703 = vadd.f32 0.0, %v2702
      %2704 = vmatmul.f32.gmra.mxu0 %v2420
      %v2705 = vpop.f32.mrf.mxu0
      %v2706 = vadd.f32 0.0, %v2705
      %2707 = vmatmul.f32.gmra.mxu0 %v2423
      %v2708 = vpop.f32.mrf.mxu0
      %v2709 = vadd.f32 0.0, %v2708
      %2710 = vmatmul.f32.gmra.mxu0 %v2426
      %v2711 = vpop.f32.mrf.mxu0
      %v2712 = vadd.f32 0.0, %v2711
      %2713 = vmatmul.f32.gmra.mxu0 %v2429
      %v2714 = vpop.f32.mrf.mxu0
      %v2715 = vadd.f32 0.0, %v2714
      %2716 = vdwg.mxu0
      %2717 = vmatpush.msra.mxu0 0.0
      %2718 = vmatpush.msra.mxu0 0.0
      %2719 = vmatpush.msra.mxu0 0.0
      %2720 = vmatpush.msra.mxu0 0.0
      %2721 = vmatpush.msra.mxu0 0.0
      %2722 = vmatpush.msra.mxu0 0.0
      %2723 = vmatpush.msra.mxu0 0.0
      %2724 = vmatpush.msra.mxu0 0.0
      %2725 = vmatpush.msra.mxu0 0.0
      %2726 = vmatpush.msra.mxu0 0.0
      %2727 = vmatpush.msra.mxu0 0.0
      %2728 = vmatpush.msra.mxu0 0.0
      %2729 = vmatpush.msra.mxu0 0.0
      %2730 = vmatpush.msra.mxu0 0.0
      %2731 = vmatpush.msra.mxu0 0.0
      %2732 = vmatpush.msra.mxu0 %v2435
      %2733 = vmatmul.f32.gmra.mxu0 %v2309
      %v2734 = vpop.f32.mrf.mxu0
      %v2735 = vadd.f32 0.0, %v2734
      %2736 = vmatmul.f32.gmra.mxu0 %v2312
      %v2737 = vpop.f32.mrf.mxu0
      %v2738 = vadd.f32 0.0, %v2737
      %2739 = vmatmul.f32.gmra.mxu0 %v2315
      %v2740 = vpop.f32.mrf.mxu0
      %v2741 = vadd.f32 0.0, %v2740
      %2742 = vmatmul.f32.gmra.mxu0 %v2318
      %v2743 = vpop.f32.mrf.mxu0
      %v2744 = vadd.f32 0.0, %v2743
      %2745 = vmatmul.f32.gmra.mxu0 %v2321
      %v2746 = vpop.f32.mrf.mxu0
      %v2747 = vadd.f32 0.0, %v2746
      %2748 = vmatmul.f32.gmra.mxu0 %v2324
      %v2749 = vpop.f32.mrf.mxu0
      %v2750 = vadd.f32 0.0, %v2749
      %2751 = vmatmul.f32.gmra.mxu0 %v2327
      %v2752 = vpop.f32.mrf.mxu0
      %v2753 = vadd.f32 0.0, %v2752
      %2754 = vmatmul.f32.gmra.mxu0 %v2330
      %v2755 = vpop.f32.mrf.mxu0
      %v2756 = vadd.f32 0.0, %v2755
      %2757 = vmatmul.f32.gmra.mxu0 %v2333
      %v2758 = vpop.f32.mrf.mxu0
      %v2759 = vadd.f32 0.0, %v2758
      %2760 = vmatmul.f32.gmra.mxu0 %v2336
      %v2761 = vpop.f32.mrf.mxu0
      %v2762 = vadd.f32 0.0, %v2761
      %2763 = vmatmul.f32.gmra.mxu0 %v2339
      %v2764 = vpop.f32.mrf.mxu0
      %v2765 = vadd.f32 0.0, %v2764
      %2766 = vmatmul.f32.gmra.mxu0 %v2342
      %v2767 = vpop.f32.mrf.mxu0
      %v2768 = vadd.f32 0.0, %v2767
      %2769 = vmatmul.f32.gmra.mxu0 %v2345
      %v2770 = vpop.f32.mrf.mxu0
      %v2771 = vadd.f32 0.0, %v2770
      %2772 = vmatmul.f32.gmra.mxu0 %v2348
      %v2773 = vpop.f32.mrf.mxu0
      %v2774 = vadd.f32 0.0, %v2773
      %2775 = vmatmul.f32.gmra.mxu0 %v2351
      %v2776 = vpop.f32.mrf.mxu0
      %v2777 = vadd.f32 0.0, %v2776
      %2778 = vmatmul.f32.gmra.mxu0 %v2354
      %v2779 = vpop.f32.mrf.mxu0
      %v2780 = vadd.f32 0.0, %v2779
      %2781 = vmatmul.f32.gmra.mxu0 %v2357
      %v2782 = vpop.f32.mrf.mxu0
      %v2783 = vadd.f32 0.0, %v2782
      %2784 = vmatmul.f32.gmra.mxu0 %v2360
      %v2785 = vpop.f32.mrf.mxu0
      %v2786 = vadd.f32 0.0, %v2785
      %2787 = vmatmul.f32.gmra.mxu0 %v2363
      %v2788 = vpop.f32.mrf.mxu0
      %v2789 = vadd.f32 0.0, %v2788
      %2790 = vmatmul.f32.gmra.mxu0 %v2366
      %v2791 = vpop.f32.mrf.mxu0
      %v2792 = vadd.f32 0.0, %v2791
      %2793 = vmatmul.f32.gmra.mxu0 %v2369
      %v2794 = vpop.f32.mrf.mxu0
      %v2795 = vadd.f32 0.0, %v2794
      %2796 = vmatmul.f32.gmra.mxu0 %v2372
      %v2797 = vpop.f32.mrf.mxu0
      %v2798 = vadd.f32 0.0, %v2797
      %2799 = vmatmul.f32.gmra.mxu0 %v2375
      %v2800 = vpop.f32.mrf.mxu0
      %v2801 = vadd.f32 0.0, %v2800
      %2802 = vmatmul.f32.gmra.mxu0 %v2378
      %v2803 = vpop.f32.mrf.mxu0
      %v2804 = vadd.f32 0.0, %v2803
      %2805 = vmatmul.f32.gmra.mxu0 %v2381
      %v2806 = vpop.f32.mrf.mxu0
      %v2807 = vadd.f32 0.0, %v2806
      %2808 = vmatmul.f32.gmra.mxu0 %v2384
      %v2809 = vpop.f32.mrf.mxu0
      %v2810 = vadd.f32 0.0, %v2809
      %2811 = vmatmul.f32.gmra.mxu0 %v2387
      %v2812 = vpop.f32.mrf.mxu0
      %v2813 = vadd.f32 0.0, %v2812
      %2814 = vmatmul.f32.gmra.mxu0 %v2390
      %v2815 = vpop.f32.mrf.mxu0
      %v2816 = vadd.f32 0.0, %v2815
      %2817 = vmatmul.f32.gmra.mxu0 %v2393
      %v2818 = vpop.f32.mrf.mxu0
      %v2819 = vadd.f32 0.0, %v2818
      %2820 = vmatmul.f32.gmra.mxu0 %v2396
      %v2821 = vpop.f32.mrf.mxu0
      %v2822 = vadd.f32 0.0, %v2821
      %2823 = vmatmul.f32.gmra.mxu0 %v2399
      %v2824 = vpop.f32.mrf.mxu0
      %v2825 = vadd.f32 0.0, %v2824
      %2826 = vmatmul.f32.gmra.mxu0 %v2402
      %v2827 = vpop.f32.mrf.mxu0
      %v2828 = vadd.f32 0.0, %v2827
      %2829 = vmatmul.f32.gmra.mxu0 %v2405
      %v2830 = vpop.f32.mrf.mxu0
      %v2831 = vadd.f32 0.0, %v2830
      %2832 = vmatmul.f32.gmra.mxu0 %v2408
      %v2833 = vpop.f32.mrf.mxu0
      %v2834 = vadd.f32 0.0, %v2833
      %2835 = vmatmul.f32.gmra.mxu0 %v2411
      %v2836 = vpop.f32.mrf.mxu0
      %v2837 = vadd.f32 0.0, %v2836
      %2838 = vmatmul.f32.gmra.mxu0 %v2414
      %v2839 = vpop.f32.mrf.mxu0
      %v2840 = vadd.f32 0.0, %v2839
      %2841 = vmatmul.f32.gmra.mxu0 %v2417
      %v2842 = vpop.f32.mrf.mxu0
      %v2843 = vadd.f32 0.0, %v2842
      %2844 = vmatmul.f32.gmra.mxu0 %v2420
      %v2845 = vpop.f32.mrf.mxu0
      %v2846 = vadd.f32 0.0, %v2845
      %2847 = vmatmul.f32.gmra.mxu0 %v2423
      %v2848 = vpop.f32.mrf.mxu0
      %v2849 = vadd.f32 0.0, %v2848
      %2850 = vmatmul.f32.gmra.mxu0 %v2426
      %v2851 = vpop.f32.mrf.mxu0
      %v2852 = vadd.f32 0.0, %v2851
      %2853 = vmatmul.f32.gmra.mxu0 %v2429
      %v2854 = vpop.f32.mrf.mxu0
      %v2855 = vadd.f32 0.0, %v2854
      %2856 = vdwg.mxu0
      %v2857 = vmul.f32 %v2455, 0.5
      %v2858 = vmul.f32 %v2595, 0.5
      %v2859 = vmul.f32 %v2735, 0.5
      %v2860 = vmul.f32 %v2458, 0.5
      %v2861 = vmul.f32 %v2598, 0.5
      %v2862 = vmul.f32 %v2738, 0.5
      %v2863 = vmul.f32 %v2461, 0.5
      %v2864 = vmul.f32 %v2601, 0.5
      %v2865 = vmul.f32 %v2741, 0.5
      %v2866 = vmul.f32 %v2464, 0.5
      %v2867 = vmul.f32 %v2604, 0.5
      %v2868 = vmul.f32 %v2744, 0.5
      %v2869 = vmul.f32 %v2467, 0.5
      %v2870 = vmul.f32 %v2607, 0.5
      %v2871 = vmul.f32 %v2747, 0.5
      %v2872 = vmul.f32 %v2470, 0.5
      %v2873 = vmul.f32 %v2610, 0.5
      %v2874 = vmul.f32 %v2750, 0.5
      %v2875 = vmul.f32 %v2473, 0.5
      %v2876 = vmul.f32 %v2613, 0.5
      %v2877 = vmul.f32 %v2753, 0.5
      %v2878 = vmul.f32 %v2476, 0.5
      %v2879 = vmul.f32 %v2616, 0.5
      %v2880 = vmul.f32 %v2756, 0.5
      %v2881 = vmul.f32 %v2479, 0.5
      %v2882 = vmul.f32 %v2619, 0.5
      %v2883 = vmul.f32 %v2759, 0.5
      %v2884 = vmul.f32 %v2482, 0.5
      %v2885 = vmul.f32 %v2622, 0.5
      %v2886 = vmul.f32 %v2762, 0.5
      %v2887 = vmul.f32 %v2485, 0.5
      %v2888 = vmul.f32 %v2625, 0.5
      %v2889 = vmul.f32 %v2765, 0.5
      %v2890 = vmul.f32 %v2488, 0.5
      %v2891 = vmul.f32 %v2628, 0.5
      %v2892 = vmul.f32 %v2768, 0.5
      %v2893 = vmul.f32 %v2491, 0.5
      %v2894 = vmul.f32 %v2631, 0.5
      %v2895 = vmul.f32 %v2771, 0.5
      %v2896 = vmul.f32 %v2494, 0.5
      %v2897 = vmul.f32 %v2634, 0.5
      %v2898 = vmul.f32 %v2774, 0.5
      %v2899 = vmul.f32 %v2497, 0.5
      %v2900 = vmul.f32 %v2637, 0.5
      %v2901 = vmul.f32 %v2777, 0.5
      %v2902 = vmul.f32 %v2500, 0.5
      %v2903 = vmul.f32 %v2640, 0.5
      %v2904 = vmul.f32 %v2780, 0.5
      %v2905 = vmul.f32 %v2503, 0.5
      %v2906 = vmul.f32 %v2643, 0.5
      %v2907 = vmul.f32 %v2783, 0.5
      %v2908 = vmul.f32 %v2506, 0.5
      %v2909 = vmul.f32 %v2646, 0.5
      %v2910 = vmul.f32 %v2786, 0.5
      %v2911 = vmul.f32 %v2509, 0.5
      %v2912 = vmul.f32 %v2649, 0.5
      %v2913 = vmul.f32 %v2789, 0.5
      %v2914 = vmul.f32 %v2512, 0.5
      %v2915 = vmul.f32 %v2652, 0.5
      %v2916 = vmul.f32 %v2792, 0.5
      %v2917 = vmul.f32 %v2515, 0.5
      %v2918 = vmul.f32 %v2655, 0.5
      %v2919 = vmul.f32 %v2795, 0.5
      %v2920 = vmul.f32 %v2518, 0.5
      %v2921 = vmul.f32 %v2658, 0.5
      %v2922 = vmul.f32 %v2798, 0.5
      %v2923 = vmul.f32 %v2521, 0.5
      %v2924 = vmul.f32 %v2661, 0.5
      %v2925 = vmul.f32 %v2801, 0.5
      %v2926 = vmul.f32 %v2524, 0.5
      %v2927 = vmul.f32 %v2664, 0.5
      %v2928 = vmul.f32 %v2804, 0.5
      %v2929 = vmul.f32 %v2527, 0.5
      %v2930 = vmul.f32 %v2667, 0.5
      %v2931 = vmul.f32 %v2807, 0.5
      %v2932 = vmul.f32 %v2530, 0.5
      %v2933 = vmul.f32 %v2670, 0.5
      %v2934 = vmul.f32 %v2810, 0.5
      %v2935 = vmul.f32 %v2533, 0.5
      %v2936 = vmul.f32 %v2673, 0.5
      %v2937 = vmul.f32 %v2813, 0.5
      %v2938 = vmul.f32 %v2536, 0.5
      %v2939 = vmul.f32 %v2676, 0.5
      %v2940 = vmul.f32 %v2816, 0.5
      %v2941 = vmul.f32 %v2539, 0.5
      %v2942 = vmul.f32 %v2679, 0.5
      %v2943 = vmul.f32 %v2819, 0.5
      %v2944 = vmul.f32 %v2542, 0.5
      %v2945 = vmul.f32 %v2682, 0.5
      %v2946 = vmul.f32 %v2822, 0.5
      %v2947 = vmul.f32 %v2545, 0.5
      %v2948 = vmul.f32 %v2685, 0.5
      %v2949 = vmul.f32 %v2825, 0.5
      %v2950 = vmul.f32 %v2548, 0.5
      %v2951 = vmul.f32 %v2688, 0.5
      %v2952 = vmul.f32 %v2828, 0.5
      %v2953 = vmul.f32 %v2551, 0.5
      %v2954 = vmul.f32 %v2691, 0.5
      %v2955 = vmul.f32 %v2831, 0.5
      %v2956 = vmul.f32 %v2554, 0.5
      %v2957 = vmul.f32 %v2694, 0.5
      %v2958 = vmul.f32 %v2834, 0.5
      %v2959 = vmul.f32 %v2557, 0.5
      %v2960 = vmul.f32 %v2697, 0.5
      %v2961 = vmul.f32 %v2837, 0.5
      %v2962 = vmul.f32 %v2560, 0.5
      %v2963 = vmul.f32 %v2700, 0.5
      %v2964 = vmul.f32 %v2840, 0.5
      %v2965 = vmul.f32 %v2563, 0.5
      %v2966 = vmul.f32 %v2703, 0.5
      %v2967 = vmul.f32 %v2843, 0.5
      %v2968 = vmul.f32 %v2566, 0.5
      %v2969 = vmul.f32 %v2706, 0.5
      %v2970 = vmul.f32 %v2846, 0.5
      %v2971 = vmul.f32 %v2569, 0.5
      %v2972 = vmul.f32 %v2709, 0.5
      %v2973 = vmul.f32 %v2849, 0.5
      %v2974 = vmul.f32 %v2572, 0.5
      %v2975 = vmul.f32 %v2712, 0.5
      %v2976 = vmul.f32 %v2852, 0.5
      %v2977 = vmul.f32 %v2575, 0.5
      %v2978 = vmul.f32 %v2715, 0.5
      %v2979 = vmul.f32 %v2855, 0.5
      %v2981 = vperm.slane %v2205, 0
      %v2982 = vperm.slane %v2205, 1
      %v2983 = vperm.slane %v2205, 2
      %v2987 = vadd.f32 %v2857, %v2981
      %v2988 = vadd.f32 %v2858, %v2982
      %v2989 = vadd.f32 %v2859, %v2983
      %v2990 = vadd.f32 %v2860, %v2981
      %v2991 = vadd.f32 %v2861, %v2982
      %v2992 = vadd.f32 %v2862, %v2983
      %v2993 = vadd.f32 %v2863, %v2981
      %v2994 = vadd.f32 %v2864, %v2982
      %v2995 = vadd.f32 %v2865, %v2983
      %v2996 = vadd.f32 %v2866, %v2981
      %v2997 = vadd.f32 %v2867, %v2982
      %v2998 = vadd.f32 %v2868, %v2983
      %v2999 = vadd.f32 %v2869, %v2981
      %v3000 = vadd.f32 %v2870, %v2982
      %v3001 = vadd.f32 %v2871, %v2983
      %v3002 = vadd.f32 %v2872, %v2981
      %v3003 = vadd.f32 %v2873, %v2982
      %v3004 = vadd.f32 %v2874, %v2983
      %v3005 = vadd.f32 %v2875, %v2981
      %v3006 = vadd.f32 %v2876, %v2982
      %v3007 = vadd.f32 %v2877, %v2983
      %v3008 = vadd.f32 %v2878, %v2981
      %v3009 = vadd.f32 %v2879, %v2982
      %v3010 = vadd.f32 %v2880, %v2983
      %v3011 = vadd.f32 %v2881, %v2981
      %v3012 = vadd.f32 %v2882, %v2982
      %v3013 = vadd.f32 %v2883, %v2983
      %v3014 = vadd.f32 %v2884, %v2981
      %v3015 = vadd.f32 %v2885, %v2982
      %v3016 = vadd.f32 %v2886, %v2983
      %v3017 = vadd.f32 %v2887, %v2981
      %v3018 = vadd.f32 %v2888, %v2982
      %v3019 = vadd.f32 %v2889, %v2983
      %v3020 = vadd.f32 %v2890, %v2981
      %v3021 = vadd.f32 %v2891, %v2982
      %v3022 = vadd.f32 %v2892, %v2983
      %v3023 = vadd.f32 %v2893, %v2981
      %v3024 = vadd.f32 %v2894, %v2982
      %v3025 = vadd.f32 %v2895, %v2983
      %v3026 = vadd.f32 %v2896, %v2981
      %v3027 = vadd.f32 %v2897, %v2982
      %v3028 = vadd.f32 %v2898, %v2983
      %v3029 = vadd.f32 %v2899, %v2981
      %v3030 = vadd.f32 %v2900, %v2982
      %v3031 = vadd.f32 %v2901, %v2983
      %v3032 = vadd.f32 %v2902, %v2981
      %v3033 = vadd.f32 %v2903, %v2982
      %v3034 = vadd.f32 %v2904, %v2983
      %v3035 = vadd.f32 %v2905, %v2981
      %v3036 = vadd.f32 %v2906, %v2982
      %v3037 = vadd.f32 %v2907, %v2983
      %v3038 = vadd.f32 %v2908, %v2981
      %v3039 = vadd.f32 %v2909, %v2982
      %v3040 = vadd.f32 %v2910, %v2983
      %v3041 = vadd.f32 %v2911, %v2981
      %v3042 = vadd.f32 %v2912, %v2982
      %v3043 = vadd.f32 %v2913, %v2983
      %v3044 = vadd.f32 %v2914, %v2981
      %v3045 = vadd.f32 %v2915, %v2982
      %v3046 = vadd.f32 %v2916, %v2983
      %v3047 = vadd.f32 %v2917, %v2981
      %v3048 = vadd.f32 %v2918, %v2982
      %v3049 = vadd.f32 %v2919, %v2983
      %v3050 = vadd.f32 %v2920, %v2981
      %v3051 = vadd.f32 %v2921, %v2982
      %v3052 = vadd.f32 %v2922, %v2983
      %v3053 = vadd.f32 %v2923, %v2981
      %v3054 = vadd.f32 %v2924, %v2982
      %v3055 = vadd.f32 %v2925, %v2983
      %v3056 = vadd.f32 %v2926, %v2981
      %v3057 = vadd.f32 %v2927, %v2982
      %v3058 = vadd.f32 %v2928, %v2983
      %v3059 = vadd.f32 %v2929, %v2981
      %v3060 = vadd.f32 %v2930, %v2982
      %v3061 = vadd.f32 %v2931, %v2983
      %v3062 = vadd.f32 %v2932, %v2981
      %v3063 = vadd.f32 %v2933, %v2982
      %v3064 = vadd.f32 %v2934, %v2983
      %v3065 = vadd.f32 %v2935, %v2981
      %v3066 = vadd.f32 %v2936, %v2982
      %v3067 = vadd.f32 %v2937, %v2983
      %v3068 = vadd.f32 %v2938, %v2981
      %v3069 = vadd.f32 %v2939, %v2982
      %v3070 = vadd.f32 %v2940, %v2983
      %v3071 = vadd.f32 %v2941, %v2981
      %v3072 = vadd.f32 %v2942, %v2982
      %v3073 = vadd.f32 %v2943, %v2983
      %v3074 = vadd.f32 %v2944, %v2981
      %v3075 = vadd.f32 %v2945, %v2982
      %v3076 = vadd.f32 %v2946, %v2983
      %v3077 = vadd.f32 %v2947, %v2981
      %v3078 = vadd.f32 %v2948, %v2982
      %v3079 = vadd.f32 %v2949, %v2983
      %v3080 = vadd.f32 %v2950, %v2981
      %v3081 = vadd.f32 %v2951, %v2982
      %v3082 = vadd.f32 %v2952, %v2983
      %v3083 = vadd.f32 %v2953, %v2981
      %v3084 = vadd.f32 %v2954, %v2982
      %v3085 = vadd.f32 %v2955, %v2983
      %v3086 = vadd.f32 %v2956, %v2981
      %v3087 = vadd.f32 %v2957, %v2982
      %v3088 = vadd.f32 %v2958, %v2983
      %v3089 = vadd.f32 %v2959, %v2981
      %v3090 = vadd.f32 %v2960, %v2982
      %v3091 = vadd.f32 %v2961, %v2983
      %v3092 = vadd.f32 %v2962, %v2981
      %v3093 = vadd.f32 %v2963, %v2982
      %v3094 = vadd.f32 %v2964, %v2983
      %v3095 = vadd.f32 %v2965, %v2981
      %v3096 = vadd.f32 %v2966, %v2982
      %v3097 = vadd.f32 %v2967, %v2983
      %v3098 = vadd.f32 %v2968, %v2981
      %v3099 = vadd.f32 %v2969, %v2982
      %v3100 = vadd.f32 %v2970, %v2983
      %v3101 = vadd.f32 %v2971, %v2981
      %v3102 = vadd.f32 %v2972, %v2982
      %v3103 = vadd.f32 %v2973, %v2983
      %v3104 = vadd.f32 %v2974, %v2981
      %v3105 = vadd.f32 %v2975, %v2982
      %v3106 = vadd.f32 %v2976, %v2983
      %v3107 = vadd.f32 %v2977, %v2981
      %v3108 = vadd.f32 %v2978, %v2982
      %v3109 = vadd.f32 %v2979, %v2983
      %v3110 = vmax.f32 %v2987, %v2988
      %vm3111 = vcmask 556032
      %v3112 = vsel %vm3111, %v2989, -inf
      %v3113 = vmax.f32 %v3110, %v3112
      %3114 = vmax.xlane.f32.xlu0 %v3113
      %v3115 = vpop.xlane.xlu0 %3114
      %v3116 = vmax.f32 %v2990, %v2991
      %v3117 = vsel %vm3111, %v2992, -inf
      %v3118 = vmax.f32 %v3116, %v3117
      %3119 = vmax.xlane.f32.xlu0 %v3118
      %v3120 = vpop.xlane.xlu0 %3119
      %v3121 = vmax.f32 %v2993, %v2994
      %v3122 = vsel %vm3111, %v2995, -inf
      %v3123 = vmax.f32 %v3121, %v3122
      %3124 = vmax.xlane.f32.xlu0 %v3123
      %v3125 = vpop.xlane.xlu0 %3124
      %v3126 = vmax.f32 %v2996, %v2997
      %v3127 = vsel %vm3111, %v2998, -inf
      %v3128 = vmax.f32 %v3126, %v3127
      %3129 = vmax.xlane.f32.xlu0 %v3128
      %v3130 = vpop.xlane.xlu0 %3129
      %v3131 = vmax.f32 %v2999, %v3000
      %v3132 = vsel %vm3111, %v3001, -inf
      %v3133 = vmax.f32 %v3131, %v3132
      %3134 = vmax.xlane.f32.xlu0 %v3133
      %v3135 = vpop.xlane.xlu0 %3134
      %v3136 = vmax.f32 %v3002, %v3003
      %v3137 = vsel %vm3111, %v3004, -inf
      %v3138 = vmax.f32 %v3136, %v3137
      %3139 = vmax.xlane.f32.xlu0 %v3138
      %v3140 = vpop.xlane.xlu0 %3139
      %v3141 = vmax.f32 %v3005, %v3006
      %v3142 = vsel %vm3111, %v3007, -inf
      %v3143 = vmax.f32 %v3141, %v3142
      %3144 = vmax.xlane.f32.xlu0 %v3143
      %v3145 = vpop.xlane.xlu0 %3144
      %v3146 = vmax.f32 %v3008, %v3009
      %v3147 = vsel %vm3111, %v3010, -inf
      %v3148 = vmax.f32 %v3146, %v3147
      %3149 = vmax.xlane.f32.xlu0 %v3148
      %v3150 = vpop.xlane.xlu0 %3149
      %v3151 = vmax.f32 %v3011, %v3012
      %v3152 = vsel %vm3111, %v3013, -inf
      %v3153 = vmax.f32 %v3151, %v3152
      %3154 = vmax.xlane.f32.xlu0 %v3153
      %v3155 = vpop.xlane.xlu0 %3154
      %v3156 = vmax.f32 %v3014, %v3015
      %v3157 = vsel %vm3111, %v3016, -inf
      %v3158 = vmax.f32 %v3156, %v3157
      %3159 = vmax.xlane.f32.xlu0 %v3158
      %v3160 = vpop.xlane.xlu0 %3159
      %v3161 = vmax.f32 %v3017, %v3018
      %v3162 = vsel %vm3111, %v3019, -inf
      %v3163 = vmax.f32 %v3161, %v3162
      %3164 = vmax.xlane.f32.xlu0 %v3163
      %v3165 = vpop.xlane.xlu0 %3164
      %v3166 = vmax.f32 %v3020, %v3021
      %v3167 = vsel %vm3111, %v3022, -inf
      %v3168 = vmax.f32 %v3166, %v3167
      %3169 = vmax.xlane.f32.xlu0 %v3168
      %v3170 = vpop.xlane.xlu0 %3169
      %v3171 = vmax.f32 %v3023, %v3024
      %v3172 = vsel %vm3111, %v3025, -inf
      %v3173 = vmax.f32 %v3171, %v3172
      %3174 = vmax.xlane.f32.xlu0 %v3173
      %v3175 = vpop.xlane.xlu0 %3174
      %v3176 = vmax.f32 %v3026, %v3027
      %v3177 = vsel %vm3111, %v3028, -inf
      %v3178 = vmax.f32 %v3176, %v3177
      %3179 = vmax.xlane.f32.xlu0 %v3178
      %v3180 = vpop.xlane.xlu0 %3179
      %v3181 = vmax.f32 %v3029, %v3030
      %v3182 = vsel %vm3111, %v3031, -inf
      %v3183 = vmax.f32 %v3181, %v3182
      %3184 = vmax.xlane.f32.xlu0 %v3183
      %v3185 = vpop.xlane.xlu0 %3184
      %v3186 = vmax.f32 %v3032, %v3033
      %v3187 = vsel %vm3111, %v3034, -inf
      %v3188 = vmax.f32 %v3186, %v3187
      %3189 = vmax.xlane.f32.xlu0 %v3188
      %v3190 = vpop.xlane.xlu0 %3189
      %v3191 = vmax.f32 %v3035, %v3036
      %v3192 = vsel %vm3111, %v3037, -inf
      %v3193 = vmax.f32 %v3191, %v3192
      %3194 = vmax.xlane.f32.xlu0 %v3193
      %v3195 = vpop.xlane.xlu0 %3194
      %v3196 = vmax.f32 %v3038, %v3039
      %v3197 = vsel %vm3111, %v3040, -inf
      %v3198 = vmax.f32 %v3196, %v3197
      %3199 = vmax.xlane.f32.xlu0 %v3198
      %v3200 = vpop.xlane.xlu0 %3199
      %v3201 = vmax.f32 %v3041, %v3042
      %v3202 = vsel %vm3111, %v3043, -inf
      %v3203 = vmax.f32 %v3201, %v3202
      %3204 = vmax.xlane.f32.xlu0 %v3203
      %v3205 = vpop.xlane.xlu0 %3204
      %v3206 = vmax.f32 %v3044, %v3045
      %v3207 = vsel %vm3111, %v3046, -inf
      %v3208 = vmax.f32 %v3206, %v3207
      %3209 = vmax.xlane.f32.xlu0 %v3208
      %v3210 = vpop.xlane.xlu0 %3209
      %v3211 = vmax.f32 %v3047, %v3048
      %v3212 = vsel %vm3111, %v3049, -inf
      %v3213 = vmax.f32 %v3211, %v3212
      %3214 = vmax.xlane.f32.xlu0 %v3213
      %v3215 = vpop.xlane.xlu0 %3214
      %v3216 = vmax.f32 %v3050, %v3051
      %v3217 = vsel %vm3111, %v3052, -inf
      %v3218 = vmax.f32 %v3216, %v3217
      %3219 = vmax.xlane.f32.xlu0 %v3218
      %v3220 = vpop.xlane.xlu0 %3219
      %v3221 = vmax.f32 %v3053, %v3054
      %v3222 = vsel %vm3111, %v3055, -inf
      %v3223 = vmax.f32 %v3221, %v3222
      %3224 = vmax.xlane.f32.xlu0 %v3223
      %v3225 = vpop.xlane.xlu0 %3224
      %v3226 = vmax.f32 %v3056, %v3057
      %v3227 = vsel %vm3111, %v3058, -inf
      %v3228 = vmax.f32 %v3226, %v3227
      %3229 = vmax.xlane.f32.xlu0 %v3228
      %v3230 = vpop.xlane.xlu0 %3229
      %v3231 = vmax.f32 %v3059, %v3060
      %v3232 = vsel %vm3111, %v3061, -inf
      %v3233 = vmax.f32 %v3231, %v3232
      %3234 = vmax.xlane.f32.xlu0 %v3233
      %v3235 = vpop.xlane.xlu0 %3234
      %v3236 = vmax.f32 %v3062, %v3063
      %v3237 = vsel %vm3111, %v3064, -inf
      %v3238 = vmax.f32 %v3236, %v3237
      %3239 = vmax.xlane.f32.xlu0 %v3238
      %v3240 = vpop.xlane.xlu0 %3239
      %v3241 = vmax.f32 %v3065, %v3066
      %v3242 = vsel %vm3111, %v3067, -inf
      %v3243 = vmax.f32 %v3241, %v3242
      %3244 = vmax.xlane.f32.xlu0 %v3243
      %v3245 = vpop.xlane.xlu0 %3244
      %v3246 = vmax.f32 %v3068, %v3069
      %v3247 = vsel %vm3111, %v3070, -inf
      %v3248 = vmax.f32 %v3246, %v3247
      %3249 = vmax.xlane.f32.xlu0 %v3248
      %v3250 = vpop.xlane.xlu0 %3249
      %v3251 = vmax.f32 %v3071, %v3072
      %v3252 = vsel %vm3111, %v3073, -inf
      %v3253 = vmax.f32 %v3251, %v3252
      %3254 = vmax.xlane.f32.xlu0 %v3253
      %v3255 = vpop.xlane.xlu0 %3254
      %v3256 = vmax.f32 %v3074, %v3075
      %v3257 = vsel %vm3111, %v3076, -inf
      %v3258 = vmax.f32 %v3256, %v3257
      %3259 = vmax.xlane.f32.xlu0 %v3258
      %v3260 = vpop.xlane.xlu0 %3259
      %v3261 = vmax.f32 %v3077, %v3078
      %v3262 = vsel %vm3111, %v3079, -inf
      %v3263 = vmax.f32 %v3261, %v3262
      %3264 = vmax.xlane.f32.xlu0 %v3263
      %v3265 = vpop.xlane.xlu0 %3264
      %v3266 = vmax.f32 %v3080, %v3081
      %v3267 = vsel %vm3111, %v3082, -inf
      %v3268 = vmax.f32 %v3266, %v3267
      %3269 = vmax.xlane.f32.xlu0 %v3268
      %v3270 = vpop.xlane.xlu0 %3269
      %v3271 = vmax.f32 %v3083, %v3084
      %v3272 = vsel %vm3111, %v3085, -inf
      %v3273 = vmax.f32 %v3271, %v3272
      %3274 = vmax.xlane.f32.xlu0 %v3273
      %v3275 = vpop.xlane.xlu0 %3274
      %v3276 = vmax.f32 %v3086, %v3087
      %v3277 = vsel %vm3111, %v3088, -inf
      %v3278 = vmax.f32 %v3276, %v3277
      %3279 = vmax.xlane.f32.xlu0 %v3278
      %v3280 = vpop.xlane.xlu0 %3279
      %v3281 = vmax.f32 %v3089, %v3090
      %v3282 = vsel %vm3111, %v3091, -inf
      %v3283 = vmax.f32 %v3281, %v3282
      %3284 = vmax.xlane.f32.xlu0 %v3283
      %v3285 = vpop.xlane.xlu0 %3284
      %v3286 = vmax.f32 %v3092, %v3093
      %v3287 = vsel %vm3111, %v3094, -inf
      %v3288 = vmax.f32 %v3286, %v3287
      %3289 = vmax.xlane.f32.xlu0 %v3288
      %v3290 = vpop.xlane.xlu0 %3289
      %v3291 = vmax.f32 %v3095, %v3096
      %v3292 = vsel %vm3111, %v3097, -inf
      %v3293 = vmax.f32 %v3291, %v3292
      %3294 = vmax.xlane.f32.xlu0 %v3293
      %v3295 = vpop.xlane.xlu0 %3294
      %v3296 = vmax.f32 %v3098, %v3099
      %v3297 = vsel %vm3111, %v3100, -inf
      %v3298 = vmax.f32 %v3296, %v3297
      %3299 = vmax.xlane.f32.xlu0 %v3298
      %v3300 = vpop.xlane.xlu0 %3299
      %v3301 = vmax.f32 %v3101, %v3102
      %v3302 = vsel %vm3111, %v3103, -inf
      %v3303 = vmax.f32 %v3301, %v3302
      %3304 = vmax.xlane.f32.xlu0 %v3303
      %v3305 = vpop.xlane.xlu0 %3304
      %v3306 = vmax.f32 %v3104, %v3105
      %v3307 = vsel %vm3111, %v3106, -inf
      %v3308 = vmax.f32 %v3306, %v3307
      %3309 = vmax.xlane.f32.xlu0 %v3308
      %v3310 = vpop.xlane.xlu0 %3309
      %v3311 = vsel %vm745, %v3107, -inf
      %v3312 = vsel %vm745, %v3108, -inf
      %v3313 = vmax.f32 %v3311, %v3312
      %v3314 = vsel %vm1968, %v3109, -inf
      %v3315 = vmax.f32 %v3313, %v3314
      %3316 = vmax.xlane.f32.xlu0 %v3315
      %v3317 = vpop.xlane.xlu0 %3316
      %v3318 = vsub.f32 %v2987, %v3115
      %v3319 = vsub.f32 %v2988, %v3115
      %v3320 = vsub.f32 %v2989, %v3115
      %v3321 = vsub.f32 %v2990, %v3120
      %v3322 = vsub.f32 %v2991, %v3120
      %v3323 = vsub.f32 %v2992, %v3120
      %v3324 = vsub.f32 %v2993, %v3125
      %v3325 = vsub.f32 %v2994, %v3125
      %v3326 = vsub.f32 %v2995, %v3125
      %v3327 = vsub.f32 %v2996, %v3130
      %v3328 = vsub.f32 %v2997, %v3130
      %v3329 = vsub.f32 %v2998, %v3130
      %v3330 = vsub.f32 %v2999, %v3135
      %v3331 = vsub.f32 %v3000, %v3135
      %v3332 = vsub.f32 %v3001, %v3135
      %v3333 = vsub.f32 %v3002, %v3140
      %v3334 = vsub.f32 %v3003, %v3140
      %v3335 = vsub.f32 %v3004, %v3140
      %v3336 = vsub.f32 %v3005, %v3145
      %v3337 = vsub.f32 %v3006, %v3145
      %v3338 = vsub.f32 %v3007, %v3145
      %v3339 = vsub.f32 %v3008, %v3150
      %v3340 = vsub.f32 %v3009, %v3150
      %v3341 = vsub.f32 %v3010, %v3150
      %v3342 = vsub.f32 %v3011, %v3155
      %v3343 = vsub.f32 %v3012, %v3155
      %v3344 = vsub.f32 %v3013, %v3155
      %v3345 = vsub.f32 %v3014, %v3160
      %v3346 = vsub.f32 %v3015, %v3160
      %v3347 = vsub.f32 %v3016, %v3160
      %v3348 = vsub.f32 %v3017, %v3165
      %v3349 = vsub.f32 %v3018, %v3165
      %v3350 = vsub.f32 %v3019, %v3165
      %v3351 = vsub.f32 %v3020, %v3170
      %v3352 = vsub.f32 %v3021, %v3170
      %v3353 = vsub.f32 %v3022, %v3170
      %v3354 = vsub.f32 %v3023, %v3175
      %v3355 = vsub.f32 %v3024, %v3175
      %v3356 = vsub.f32 %v3025, %v3175
      %v3357 = vsub.f32 %v3026, %v3180
      %v3358 = vsub.f32 %v3027, %v3180
      %v3359 = vsub.f32 %v3028, %v3180
      %v3360 = vsub.f32 %v3029, %v3185
      %v3361 = vsub.f32 %v3030, %v3185
      %v3362 = vsub.f32 %v3031, %v3185
      %v3363 = vsub.f32 %v3032, %v3190
      %v3364 = vsub.f32 %v3033, %v3190
      %v3365 = vsub.f32 %v3034, %v3190
      %v3366 = vsub.f32 %v3035, %v3195
      %v3367 = vsub.f32 %v3036, %v3195
      %v3368 = vsub.f32 %v3037, %v3195
      %v3369 = vsub.f32 %v3038, %v3200
      %v3370 = vsub.f32 %v3039, %v3200
      %v3371 = vsub.f32 %v3040, %v3200
      %v3372 = vsub.f32 %v3041, %v3205
      %v3373 = vsub.f32 %v3042, %v3205
      %v3374 = vsub.f32 %v3043, %v3205
      %v3375 = vsub.f32 %v3044, %v3210
      %v3376 = vsub.f32 %v3045, %v3210
      %v3377 = vsub.f32 %v3046, %v3210
      %v3378 = vsub.f32 %v3047, %v3215
      %v3379 = vsub.f32 %v3048, %v3215
      %v3380 = vsub.f32 %v3049, %v3215
      %v3381 = vsub.f32 %v3050, %v3220
      %v3382 = vsub.f32 %v3051, %v3220
      %v3383 = vsub.f32 %v3052, %v3220
      %v3384 = vsub.f32 %v3053, %v3225
      %v3385 = vsub.f32 %v3054, %v3225
      %v3386 = vsub.f32 %v3055, %v3225
      %v3387 = vsub.f32 %v3056, %v3230
      %v3388 = vsub.f32 %v3057, %v3230
      %v3389 = vsub.f32 %v3058, %v3230
      %v3390 = vsub.f32 %v3059, %v3235
      %v3391 = vsub.f32 %v3060, %v3235
      %v3392 = vsub.f32 %v3061, %v3235
      %v3393 = vsub.f32 %v3062, %v3240
      %v3394 = vsub.f32 %v3063, %v3240
      %v3395 = vsub.f32 %v3064, %v3240
      %v3396 = vsub.f32 %v3065, %v3245
      %v3397 = vsub.f32 %v3066, %v3245
      %v3398 = vsub.f32 %v3067, %v3245
      %v3399 = vsub.f32 %v3068, %v3250
      %v3400 = vsub.f32 %v3069, %v3250
      %v3401 = vsub.f32 %v3070, %v3250
      %v3402 = vsub.f32 %v3071, %v3255
      %v3403 = vsub.f32 %v3072, %v3255
      %v3404 = vsub.f32 %v3073, %v3255
      %v3405 = vsub.f32 %v3074, %v3260
      %v3406 = vsub.f32 %v3075, %v3260
      %v3407 = vsub.f32 %v3076, %v3260
      %v3408 = vsub.f32 %v3077, %v3265
      %v3409 = vsub.f32 %v3078, %v3265
      %v3410 = vsub.f32 %v3079, %v3265
      %v3411 = vsub.f32 %v3080, %v3270
      %v3412 = vsub.f32 %v3081, %v3270
      %v3413 = vsub.f32 %v3082, %v3270
      %v3414 = vsub.f32 %v3083, %v3275
      %v3415 = vsub.f32 %v3084, %v3275
      %v3416 = vsub.f32 %v3085, %v3275
      %v3417 = vsub.f32 %v3086, %v3280
      %v3418 = vsub.f32 %v3087, %v3280
      %v3419 = vsub.f32 %v3088, %v3280
      %v3420 = vsub.f32 %v3089, %v3285
      %v3421 = vsub.f32 %v3090, %v3285
      %v3422 = vsub.f32 %v3091, %v3285
      %v3423 = vsub.f32 %v3092, %v3290
      %v3424 = vsub.f32 %v3093, %v3290
      %v3425 = vsub.f32 %v3094, %v3290
      %v3426 = vsub.f32 %v3095, %v3295
      %v3427 = vsub.f32 %v3096, %v3295
      %v3428 = vsub.f32 %v3097, %v3295
      %v3429 = vsub.f32 %v3098, %v3300
      %v3430 = vsub.f32 %v3099, %v3300
      %v3431 = vsub.f32 %v3100, %v3300
      %v3432 = vsub.f32 %v3101, %v3305
      %v3433 = vsub.f32 %v3102, %v3305
      %v3434 = vsub.f32 %v3103, %v3305
      %v3435 = vsub.f32 %v3104, %v3310
      %v3436 = vsub.f32 %v3105, %v3310
      %v3437 = vsub.f32 %v3106, %v3310
      %v3438 = vsub.f32 %v3107, %v3317
      %v3439 = vsub.f32 %v3108, %v3317
      %v3440 = vsub.f32 %v3109, %v3317
      %v3441 = vmul.f32 %v3318, 1.442695
      %v3442 = vpow.pop %v3441
      %v3443 = vmul.f32 %v3319, 1.442695
      %v3444 = vpow.pop %v3443
      %v3445 = vmul.f32 %v3320, 1.442695
      %v3446 = vpow.pop %v3445
      %v3447 = vmul.f32 %v3321, 1.442695
      %v3448 = vpow.pop %v3447
      %v3449 = vmul.f32 %v3322, 1.442695
      %v3450 = vpow.pop %v3449
      %v3451 = vmul.f32 %v3323, 1.442695
      %v3452 = vpow.pop %v3451
      %v3453 = vmul.f32 %v3324, 1.442695
      %v3454 = vpow.pop %v3453
      %v3455 = vmul.f32 %v3325, 1.442695
      %v3456 = vpow.pop %v3455
      %v3457 = vmul.f32 %v3326, 1.442695
      %v3458 = vpow.pop %v3457
      %v3459 = vmul.f32 %v3327, 1.442695
      %v3460 = vpow.pop %v3459
      %v3461 = vmul.f32 %v3328, 1.442695
      %v3462 = vpow.pop %v3461
      %v3463 = vmul.f32 %v3329, 1.442695
      %v3464 = vpow.pop %v3463
      %v3465 = vmul.f32 %v3330, 1.442695
      %v3466 = vpow.pop %v3465
      %v3467 = vmul.f32 %v3331, 1.442695
      %v3468 = vpow.pop %v3467
      %v3469 = vmul.f32 %v3332, 1.442695
      %v3470 = vpow.pop %v3469
      %v3471 = vmul.f32 %v3333, 1.442695
      %v3472 = vpow.pop %v3471
      %v3473 = vmul.f32 %v3334, 1.442695
      %v3474 = vpow.pop %v3473
      %v3475 = vmul.f32 %v3335, 1.442695
      %v3476 = vpow.pop %v3475
      %v3477 = vmul.f32 %v3336, 1.442695
      %v3478 = vpow.pop %v3477
      %v3479 = vmul.f32 %v3337, 1.442695
      %v3480 = vpow.pop %v3479
      %v3481 = vmul.f32 %v3338, 1.442695
      %v3482 = vpow.pop %v3481
      %v3483 = vmul.f32 %v3339, 1.442695
      %v3484 = vpow.pop %v3483
      %v3485 = vmul.f32 %v3340, 1.442695
      %v3486 = vpow.pop %v3485
      %v3487 = vmul.f32 %v3341, 1.442695
      %v3488 = vpow.pop %v3487
      %v3489 = vmul.f32 %v3342, 1.442695
      %v3490 = vpow.pop %v3489
      %v3491 = vmul.f32 %v3343, 1.442695
      %v3492 = vpow.pop %v3491
      %v3493 = vmul.f32 %v3344, 1.442695
      %v3494 = vpow.pop %v3493
      %v3495 = vmul.f32 %v3345, 1.442695
      %v3496 = vpow.pop %v3495
      %v3497 = vmul.f32 %v3346, 1.442695
      %v3498 = vpow.pop %v3497
      %v3499 = vmul.f32 %v3347, 1.442695
      %v3500 = vpow.pop %v3499
      %v3501 = vmul.f32 %v3348, 1.442695
      %v3502 = vpow.pop %v3501
      %v3503 = vmul.f32 %v3349, 1.442695
      %v3504 = vpow.pop %v3503
      %v3505 = vmul.f32 %v3350, 1.442695
      %v3506 = vpow.pop %v3505
      %v3507 = vmul.f32 %v3351, 1.442695
      %v3508 = vpow.pop %v3507
      %v3509 = vmul.f32 %v3352, 1.442695
      %v3510 = vpow.pop %v3509
      %v3511 = vmul.f32 %v3353, 1.442695
      %v3512 = vpow.pop %v3511
      %v3513 = vmul.f32 %v3354, 1.442695
      %v3514 = vpow.pop %v3513
      %v3515 = vmul.f32 %v3355, 1.442695
      %v3516 = vpow.pop %v3515
      %v3517 = vmul.f32 %v3356, 1.442695
      %v3518 = vpow.pop %v3517
      %v3519 = vmul.f32 %v3357, 1.442695
      %v3520 = vpow.pop %v3519
      %v3521 = vmul.f32 %v3358, 1.442695
      %v3522 = vpow.pop %v3521
      %v3523 = vmul.f32 %v3359, 1.442695
      %v3524 = vpow.pop %v3523
      %v3525 = vmul.f32 %v3360, 1.442695
      %v3526 = vpow.pop %v3525
      %v3527 = vmul.f32 %v3361, 1.442695
      %v3528 = vpow.pop %v3527
      %v3529 = vmul.f32 %v3362, 1.442695
      %v3530 = vpow.pop %v3529
      %v3531 = vmul.f32 %v3363, 1.442695
      %v3532 = vpow.pop %v3531
      %v3533 = vmul.f32 %v3364, 1.442695
      %v3534 = vpow.pop %v3533
      %v3535 = vmul.f32 %v3365, 1.442695
      %v3536 = vpow.pop %v3535
      %v3537 = vmul.f32 %v3366, 1.442695
      %v3538 = vpow.pop %v3537
      %v3539 = vmul.f32 %v3367, 1.442695
      %v3540 = vpow.pop %v3539
      %v3541 = vmul.f32 %v3368, 1.442695
      %v3542 = vpow.pop %v3541
      %v3543 = vmul.f32 %v3369, 1.442695
      %v3544 = vpow.pop %v3543
      %v3545 = vmul.f32 %v3370, 1.442695
      %v3546 = vpow.pop %v3545
      %v3547 = vmul.f32 %v3371, 1.442695
      %v3548 = vpow.pop %v3547
      %v3549 = vmul.f32 %v3372, 1.442695
      %v3550 = vpow.pop %v3549
      %v3551 = vmul.f32 %v3373, 1.442695
      %v3552 = vpow.pop %v3551
      %v3553 = vmul.f32 %v3374, 1.442695
      %v3554 = vpow.pop %v3553
      %v3555 = vmul.f32 %v3375, 1.442695
      %v3556 = vpow.pop %v3555
      %v3557 = vmul.f32 %v3376, 1.442695
      %v3558 = vpow.pop %v3557
      %v3559 = vmul.f32 %v3377, 1.442695
      %v3560 = vpow.pop %v3559
      %v3561 = vmul.f32 %v3378, 1.442695
      %v3562 = vpow.pop %v3561
      %v3563 = vmul.f32 %v3379, 1.442695
      %v3564 = vpow.pop %v3563
      %v3565 = vmul.f32 %v3380, 1.442695
      %v3566 = vpow.pop %v3565
      %v3567 = vmul.f32 %v3381, 1.442695
      %v3568 = vpow.pop %v3567
      %v3569 = vmul.f32 %v3382, 1.442695
      %v3570 = vpow.pop %v3569
      %v3571 = vmul.f32 %v3383, 1.442695
      %v3572 = vpow.pop %v3571
      %v3573 = vmul.f32 %v3384, 1.442695
      %v3574 = vpow.pop %v3573
      %v3575 = vmul.f32 %v3385, 1.442695
      %v3576 = vpow.pop %v3575
      %v3577 = vmul.f32 %v3386, 1.442695
      %v3578 = vpow.pop %v3577
      %v3579 = vmul.f32 %v3387, 1.442695
      %v3580 = vpow.pop %v3579
      %v3581 = vmul.f32 %v3388, 1.442695
      %v3582 = vpow.pop %v3581
      %v3583 = vmul.f32 %v3389, 1.442695
      %v3584 = vpow.pop %v3583
      %v3585 = vmul.f32 %v3390, 1.442695
      %v3586 = vpow.pop %v3585
      %v3587 = vmul.f32 %v3391, 1.442695
      %v3588 = vpow.pop %v3587
      %v3589 = vmul.f32 %v3392, 1.442695
      %v3590 = vpow.pop %v3589
      %v3591 = vmul.f32 %v3393, 1.442695
      %v3592 = vpow.pop %v3591
      %v3593 = vmul.f32 %v3394, 1.442695
      %v3594 = vpow.pop %v3593
      %v3595 = vmul.f32 %v3395, 1.442695
      %v3596 = vpow.pop %v3595
      %v3597 = vmul.f32 %v3396, 1.442695
      %v3598 = vpow.pop %v3597
      %v3599 = vmul.f32 %v3397, 1.442695
      %v3600 = vpow.pop %v3599
      %v3601 = vmul.f32 %v3398, 1.442695
      %v3602 = vpow.pop %v3601
      %v3603 = vmul.f32 %v3399, 1.442695
      %v3604 = vpow.pop %v3603
      %v3605 = vmul.f32 %v3400, 1.442695
      %v3606 = vpow.pop %v3605
      %v3607 = vmul.f32 %v3401, 1.442695
      %v3608 = vpow.pop %v3607
      %v3609 = vmul.f32 %v3402, 1.442695
      %v3610 = vpow.pop %v3609
      %v3611 = vmul.f32 %v3403, 1.442695
      %v3612 = vpow.pop %v3611
      %v3613 = vmul.f32 %v3404, 1.442695
      %v3614 = vpow.pop %v3613
      %v3615 = vmul.f32 %v3405, 1.442695
      %v3616 = vpow.pop %v3615
      %v3617 = vmul.f32 %v3406, 1.442695
      %v3618 = vpow.pop %v3617
      %v3619 = vmul.f32 %v3407, 1.442695
      %v3620 = vpow.pop %v3619
      %v3621 = vmul.f32 %v3408, 1.442695
      %v3622 = vpow.pop %v3621
      %v3623 = vmul.f32 %v3409, 1.442695
      %v3624 = vpow.pop %v3623
      %v3625 = vmul.f32 %v3410, 1.442695
      %v3626 = vpow.pop %v3625
      %v3627 = vmul.f32 %v3411, 1.442695
      %v3628 = vpow.pop %v3627
      %v3629 = vmul.f32 %v3412, 1.442695
      %v3630 = vpow.pop %v3629
      %v3631 = vmul.f32 %v3413, 1.442695
      %v3632 = vpow.pop %v3631
      %v3633 = vmul.f32 %v3414, 1.442695
      %v3634 = vpow.pop %v3633
      %v3635 = vmul.f32 %v3415, 1.442695
      %v3636 = vpow.pop %v3635
      %v3637 = vmul.f32 %v3416, 1.442695
      %v3638 = vpow.pop %v3637
      %v3639 = vmul.f32 %v3417, 1.442695
      %v3640 = vpow.pop %v3639
      %v3641 = vmul.f32 %v3418, 1.442695
      %v3642 = vpow.pop %v3641
      %v3643 = vmul.f32 %v3419, 1.442695
      %v3644 = vpow.pop %v3643
      %v3645 = vmul.f32 %v3420, 1.442695
      %v3646 = vpow.pop %v3645
      %v3647 = vmul.f32 %v3421, 1.442695
      %v3648 = vpow.pop %v3647
      %v3649 = vmul.f32 %v3422, 1.442695
      %v3650 = vpow.pop %v3649
      %v3651 = vmul.f32 %v3423, 1.442695
      %v3652 = vpow.pop %v3651
      %v3653 = vmul.f32 %v3424, 1.442695
      %v3654 = vpow.pop %v3653
      %v3655 = vmul.f32 %v3425, 1.442695
      %v3656 = vpow.pop %v3655
      %v3657 = vmul.f32 %v3426, 1.442695
      %v3658 = vpow.pop %v3657
      %v3659 = vmul.f32 %v3427, 1.442695
      %v3660 = vpow.pop %v3659
      %v3661 = vmul.f32 %v3428, 1.442695
      %v3662 = vpow.pop %v3661
      %v3663 = vmul.f32 %v3429, 1.442695
      %v3664 = vpow.pop %v3663
      %v3665 = vmul.f32 %v3430, 1.442695
      %v3666 = vpow.pop %v3665
      %v3667 = vmul.f32 %v3431, 1.442695
      %v3668 = vpow.pop %v3667
      %v3669 = vmul.f32 %v3432, 1.442695
      %v3670 = vpow.pop %v3669
      %v3671 = vmul.f32 %v3433, 1.442695
      %v3672 = vpow.pop %v3671
      %v3673 = vmul.f32 %v3434, 1.442695
      %v3674 = vpow.pop %v3673
      %v3675 = vmul.f32 %v3435, 1.442695
      %v3676 = vpow.pop %v3675
      %v3677 = vmul.f32 %v3436, 1.442695
      %v3678 = vpow.pop %v3677
      %v3679 = vmul.f32 %v3437, 1.442695
      %v3680 = vpow.pop %v3679
      %v3681 = vmul.f32 %v3438, 1.442695
      %v3682 = vpow.pop %v3681
      %v3683 = vmul.f32 %v3439, 1.442695
      %v3684 = vpow.pop %v3683
      %v3685 = vmul.f32 %v3440, 1.442695
      %v3686 = vpow.pop %v3685
      %v3687 = vsel %vm745, %v2147, 1.0
      %v3688 = vsel %vm745, %v2173, 1.0
      %v3689 = vsel %vm745, %v2199, 1.0
      %v3691 = vsel %vm3111, %v3689, 0
      %v3694 = vsel %vm3111, %v3446, 0
      %v3697 = vsel %vm3111, %v3452, 0
      %v3700 = vsel %vm3111, %v3458, 0
      %v3703 = vsel %vm3111, %v3464, 0
      %v3706 = vsel %vm3111, %v3470, 0
      %v3709 = vsel %vm3111, %v3476, 0
      %v3712 = vsel %vm3111, %v3482, 0
      %v3715 = vsel %vm3111, %v3488, 0
      %v3718 = vsel %vm3111, %v3494, 0
      %v3721 = vsel %vm3111, %v3500, 0
      %v3724 = vsel %vm3111, %v3506, 0
      %v3727 = vsel %vm3111, %v3512, 0
      %v3730 = vsel %vm3111, %v3518, 0
      %v3733 = vsel %vm3111, %v3524, 0
      %v3736 = vsel %vm3111, %v3530, 0
      %v3739 = vsel %vm3111, %v3536, 0
      %v3742 = vsel %vm3111, %v3542, 0
      %v3745 = vsel %vm3111, %v3548, 0
      %v3748 = vsel %vm3111, %v3554, 0
      %v3751 = vsel %vm3111, %v3560, 0
      %v3754 = vsel %vm3111, %v3566, 0
      %v3757 = vsel %vm3111, %v3572, 0
      %v3760 = vsel %vm3111, %v3578, 0
      %v3763 = vsel %vm3111, %v3584, 0
      %v3766 = vsel %vm3111, %v3590, 0
      %v3769 = vsel %vm3111, %v3596, 0
      %v3772 = vsel %vm3111, %v3602, 0
      %v3775 = vsel %vm3111, %v3608, 0
      %v3778 = vsel %vm3111, %v3614, 0
      %v3781 = vsel %vm3111, %v3620, 0
      %v3784 = vsel %vm3111, %v3626, 0
      %v3787 = vsel %vm3111, %v3632, 0
      %v3790 = vsel %vm3111, %v3638, 0
      %v3793 = vsel %vm3111, %v3644, 0
      %v3796 = vsel %vm3111, %v3650, 0
      %v3799 = vsel %vm3111, %v3656, 0
      %v3802 = vsel %vm3111, %v3662, 0
      %v3805 = vsel %vm3111, %v3668, 0
      %v3808 = vsel %vm3111, %v3674, 0
      %v3811 = vsel %vm3111, %v3680, 0
      %v3814 = vsel %vm3111, %v3686, 0
      %3816 = vmatpush.xpose.msra.mxu0 %v3532
      %3817 = vmatpush.xpose.msra.mxu0 %v3526
      %3818 = vmatpush.xpose.msra.mxu0 %v3520
      %3819 = vmatpush.xpose.msra.mxu0 %v3514
      %3820 = vmatpush.xpose.msra.mxu0 %v3508
      %3821 = vmatpush.xpose.msra.mxu0 %v3502
      %3822 = vmatpush.xpose.msra.mxu0 %v3496
      %3823 = vmatpush.xpose.msra.mxu0 %v3490
      %3824 = vmatpush.xpose.msra.mxu0 %v3484
      %3825 = vmatpush.xpose.msra.mxu0 %v3478
      %3826 = vmatpush.xpose.msra.mxu0 %v3472
      %3827 = vmatpush.xpose.msra.mxu0 %v3466
      %3828 = vmatpush.xpose.msra.mxu0 %v3460
      %3829 = vmatpush.xpose.msra.mxu0 %v3454
      %3830 = vmatpush.xpose.msra.mxu0 %v3448
      %3831 = vmatpush.xpose.msra.mxu0 %v3442
      %3832 = vmatmul.f32.gmra.mxu0 %v3687
      %v3833 = vpop.f32.mrf.mxu0
      %v3834 = vadd.f32 0.0, %v3833
      %3835 = vdwg.mxu0
      %3836 = vmatpush.xpose.msra.mxu0 %v3534
      %3837 = vmatpush.xpose.msra.mxu0 %v3528
      %3838 = vmatpush.xpose.msra.mxu0 %v3522
      %3839 = vmatpush.xpose.msra.mxu0 %v3516
      %3840 = vmatpush.xpose.msra.mxu0 %v3510
      %3841 = vmatpush.xpose.msra.mxu0 %v3504
      %3842 = vmatpush.xpose.msra.mxu0 %v3498
      %3843 = vmatpush.xpose.msra.mxu0 %v3492
      %3844 = vmatpush.xpose.msra.mxu0 %v3486
      %3845 = vmatpush.xpose.msra.mxu0 %v3480
      %3846 = vmatpush.xpose.msra.mxu0 %v3474
      %3847 = vmatpush.xpose.msra.mxu0 %v3468
      %3848 = vmatpush.xpose.msra.mxu0 %v3462
      %3849 = vmatpush.xpose.msra.mxu0 %v3456
      %3850 = vmatpush.xpose.msra.mxu0 %v3450
      %3851 = vmatpush.xpose.msra.mxu0 %v3444
      %3852 = vmatmul.f32.gmra.mxu0 %v3688
      %v3853 = vpop.f32.mrf.mxu0
      %v3854 = vadd.f32 %v3834, %v3853
      %3855 = vdwg.mxu0
      %3856 = vmatpush.xpose.msra.mxu0 %v3739
      %3857 = vmatpush.xpose.msra.mxu0 %v3736
      %3858 = vmatpush.xpose.msra.mxu0 %v3733
      %3859 = vmatpush.xpose.msra.mxu0 %v3730
      %3860 = vmatpush.xpose.msra.mxu0 %v3727
      %3861 = vmatpush.xpose.msra.mxu0 %v3724
      %3862 = vmatpush.xpose.msra.mxu0 %v3721
      %3863 = vmatpush.xpose.msra.mxu0 %v3718
      %3864 = vmatpush.xpose.msra.mxu0 %v3715
      %3865 = vmatpush.xpose.msra.mxu0 %v3712
      %3866 = vmatpush.xpose.msra.mxu0 %v3709
      %3867 = vmatpush.xpose.msra.mxu0 %v3706
      %3868 = vmatpush.xpose.msra.mxu0 %v3703
      %3869 = vmatpush.xpose.msra.mxu0 %v3700
      %3870 = vmatpush.xpose.msra.mxu0 %v3697
      %3871 = vmatpush.xpose.msra.mxu0 %v3694
      %3872 = vmatmul.f32.gmra.mxu0 %v3691
      %v3873 = vpop.f32.mrf.mxu0
      %v3874 = vadd.f32 %v3854, %v3873
      %3875 = vdwg.mxu0
      %3876 = vmatpush.xpose.msra.mxu0 %v3628
      %3877 = vmatpush.xpose.msra.mxu0 %v3622
      %3878 = vmatpush.xpose.msra.mxu0 %v3616
      %3879 = vmatpush.xpose.msra.mxu0 %v3610
      %3880 = vmatpush.xpose.msra.mxu0 %v3604
      %3881 = vmatpush.xpose.msra.mxu0 %v3598
      %3882 = vmatpush.xpose.msra.mxu0 %v3592
      %3883 = vmatpush.xpose.msra.mxu0 %v3586
      %3884 = vmatpush.xpose.msra.mxu0 %v3580
      %3885 = vmatpush.xpose.msra.mxu0 %v3574
      %3886 = vmatpush.xpose.msra.mxu0 %v3568
      %3887 = vmatpush.xpose.msra.mxu0 %v3562
      %3888 = vmatpush.xpose.msra.mxu0 %v3556
      %3889 = vmatpush.xpose.msra.mxu0 %v3550
      %3890 = vmatpush.xpose.msra.mxu0 %v3544
      %3891 = vmatpush.xpose.msra.mxu0 %v3538
      %3892 = vmatmul.f32.gmra.mxu0 %v3687
      %v3893 = vpop.f32.mrf.mxu0
      %v3894 = vadd.f32 0.0, %v3893
      %3895 = vdwg.mxu0
      %3896 = vmatpush.xpose.msra.mxu0 %v3630
      %3897 = vmatpush.xpose.msra.mxu0 %v3624
      %3898 = vmatpush.xpose.msra.mxu0 %v3618
      %3899 = vmatpush.xpose.msra.mxu0 %v3612
      %3900 = vmatpush.xpose.msra.mxu0 %v3606
      %3901 = vmatpush.xpose.msra.mxu0 %v3600
      %3902 = vmatpush.xpose.msra.mxu0 %v3594
      %3903 = vmatpush.xpose.msra.mxu0 %v3588
      %3904 = vmatpush.xpose.msra.mxu0 %v3582
      %3905 = vmatpush.xpose.msra.mxu0 %v3576
      %3906 = vmatpush.xpose.msra.mxu0 %v3570
      %3907 = vmatpush.xpose.msra.mxu0 %v3564
      %3908 = vmatpush.xpose.msra.mxu0 %v3558
      %3909 = vmatpush.xpose.msra.mxu0 %v3552
      %3910 = vmatpush.xpose.msra.mxu0 %v3546
      %3911 = vmatpush.xpose.msra.mxu0 %v3540
      %3912 = vmatmul.f32.gmra.mxu0 %v3688
      %v3913 = vpop.f32.mrf.mxu0
      %v3914 = vadd.f32 %v3894, %v3913
      %3915 = vdwg.mxu0
      %3916 = vmatpush.xpose.msra.mxu0 %v3787
      %3917 = vmatpush.xpose.msra.mxu0 %v3784
      %3918 = vmatpush.xpose.msra.mxu0 %v3781
      %3919 = vmatpush.xpose.msra.mxu0 %v3778
      %3920 = vmatpush.xpose.msra.mxu0 %v3775
      %3921 = vmatpush.xpose.msra.mxu0 %v3772
      %3922 = vmatpush.xpose.msra.mxu0 %v3769
      %3923 = vmatpush.xpose.msra.mxu0 %v3766
      %3924 = vmatpush.xpose.msra.mxu0 %v3763
      %3925 = vmatpush.xpose.msra.mxu0 %v3760
      %3926 = vmatpush.xpose.msra.mxu0 %v3757
      %3927 = vmatpush.xpose.msra.mxu0 %v3754
      %3928 = vmatpush.xpose.msra.mxu0 %v3751
      %3929 = vmatpush.xpose.msra.mxu0 %v3748
      %3930 = vmatpush.xpose.msra.mxu0 %v3745
      %3931 = vmatpush.xpose.msra.mxu0 %v3742
      %3932 = vmatmul.f32.gmra.mxu0 %v3691
      %v3933 = vpop.f32.mrf.mxu0
      %v3934 = vadd.f32 %v3914, %v3933
      %3935 = vdwg.mxu0
      %3936 = vmatpush.xpose.msra.mxu0 0.0
      %3937 = vmatpush.xpose.msra.mxu0 0.0
      %3938 = vmatpush.xpose.msra.mxu0 0.0
      %3939 = vmatpush.xpose.msra.mxu0 0.0
      %3940 = vmatpush.xpose.msra.mxu0 0.0
      %3941 = vmatpush.xpose.msra.mxu0 0.0
      %3942 = vmatpush.xpose.msra.mxu0 0.0
      %3943 = vmatpush.xpose.msra.mxu0 %v3682
      %3944 = vmatpush.xpose.msra.mxu0 %v3676
      %3945 = vmatpush.xpose.msra.mxu0 %v3670
      %3946 = vmatpush.xpose.msra.mxu0 %v3664
      %3947 = vmatpush.xpose.msra.mxu0 %v3658
      %3948 = vmatpush.xpose.msra.mxu0 %v3652
      %3949 = vmatpush.xpose.msra.mxu0 %v3646
      %3950 = vmatpush.xpose.msra.mxu0 %v3640
      %3951 = vmatpush.xpose.msra.mxu0 %v3634
      %3952 = vmatmul.f32.gmra.mxu0 %v3687
      %v3953 = vpop.f32.mrf.mxu0
      %v3954 = vadd.f32 0.0, %v3953
      %3955 = vdwg.mxu0
      %3956 = vmatpush.xpose.msra.mxu0 0.0
      %3957 = vmatpush.xpose.msra.mxu0 0.0
      %3958 = vmatpush.xpose.msra.mxu0 0.0
      %3959 = vmatpush.xpose.msra.mxu0 0.0
      %3960 = vmatpush.xpose.msra.mxu0 0.0
      %3961 = vmatpush.xpose.msra.mxu0 0.0
      %3962 = vmatpush.xpose.msra.mxu0 0.0
      %3963 = vmatpush.xpose.msra.mxu0 %v3684
      %3964 = vmatpush.xpose.msra.mxu0 %v3678
      %3965 = vmatpush.xpose.msra.mxu0 %v3672
      %3966 = vmatpush.xpose.msra.mxu0 %v3666
      %3967 = vmatpush.xpose.msra.mxu0 %v3660
      %3968 = vmatpush.xpose.msra.mxu0 %v3654
      %3969 = vmatpush.xpose.msra.mxu0 %v3648
      %3970 = vmatpush.xpose.msra.mxu0 %v3642
      %3971 = vmatpush.xpose.msra.mxu0 %v3636
      %3972 = vmatmul.f32.gmra.mxu0 %v3688
      %v3973 = vpop.f32.mrf.mxu0
      %v3974 = vadd.f32 %v3954, %v3973
      %3975 = vdwg.mxu0
      %3976 = vmatpush.xpose.msra.mxu0 0.0
      %3977 = vmatpush.xpose.msra.mxu0 0.0
      %3978 = vmatpush.xpose.msra.mxu0 0.0
      %3979 = vmatpush.xpose.msra.mxu0 0.0
      %3980 = vmatpush.xpose.msra.mxu0 0.0
      %3981 = vmatpush.xpose.msra.mxu0 0.0
      %3982 = vmatpush.xpose.msra.mxu0 0.0
      %3983 = vmatpush.xpose.msra.mxu0 %v3814
      %3984 = vmatpush.xpose.msra.mxu0 %v3811
      %3985 = vmatpush.xpose.msra.mxu0 %v3808
      %3986 = vmatpush.xpose.msra.mxu0 %v3805
      %3987 = vmatpush.xpose.msra.mxu0 %v3802
      %3988 = vmatpush.xpose.msra.mxu0 %v3799
      %3989 = vmatpush.xpose.msra.mxu0 %v3796
      %3990 = vmatpush.xpose.msra.mxu0 %v3793
      %3991 = vmatpush.xpose.msra.mxu0 %v3790
      %3992 = vmatmul.f32.gmra.mxu0 %v3691
      %v3993 = vpop.f32.mrf.mxu0
      %v3994 = vadd.f32 %v3974, %v3993
      %3995 = vdwg.mxu0
      %v3996 = vrcp.pop %v3874
      %v3997 = vrcp.pop %v3934
      %v3998 = vrcp.pop %v3994
      %v3999 = vperm.slane %v3996, 4
      %v4000 = vperm.slane %v3997, 4
      %v4001 = vperm.slane %v3998, 4
      %v4002 = vmul.f32 %v3874, %v3999
      %v4003 = vmul.f32 %v3934, %v4000
      %v4004 = vmul.f32 %v3994, %v4001
      %v4008 = vrot.slane %v2147, 4
      %v4009 = vrot.slane %v2173, 4
      %v4010 = vrot.slane %v2199, 4
      %4014 = vxpose.xlu0.b32.start [1/16] %v4008, 128
      %4015 = vxpose.xlu0.b32.cont [2/16] 0.0, 128
      %4016 = vxpose.xlu0.b32.cont [3/16] 0.0, 128
      %4017 = vxpose.xlu0.b32.cont [4/16] 0.0, 128
      %4018 = vxpose.xlu0.b32.cont [5/16] 0.0, 128
      %4019 = vxpose.xlu0.b32.cont [6/16] 0.0, 128
      %4020 = vxpose.xlu0.b32.cont [7/16] 0.0, 128
      %4021 = vxpose.xlu0.b32.cont [8/16] 0.0, 128
      %4022 = vxpose.xlu0.b32.cont [9/16] 0.0, 128
      %4023 = vxpose.xlu0.b32.cont [10/16] 0.0, 128
      %4024 = vxpose.xlu0.b32.cont [11/16] 0.0, 128
      %4025 = vxpose.xlu0.b32.cont [12/16] 0.0, 128
      %4026 = vxpose.xlu0.b32.cont [13/16] 0.0, 128
      %4027 = vxpose.xlu0.b32.cont [14/16] 0.0, 128
      %4028 = vxpose.xlu0.b32.cont [15/16] 0.0, 128
      %4029 = vxpose.xlu0.b32.end [16/16] 0.0, 128
      %v4030 = vpop.trf.xlu0
      %v4031 = vpop.trf.xlu0
      %v4032 = vpop.trf.xlu0
      %v4033 = vpop.trf.xlu0
      %v4034 = vpop.trf.xlu0
      %v4035 = vpop.trf.xlu0
      %v4036 = vpop.trf.xlu0
      %v4037 = vpop.trf.xlu0
      %v4038 = vpop.trf.xlu0
      %v4039 = vpop.trf.xlu0
      %v4040 = vpop.trf.xlu0
      %v4041 = vpop.trf.xlu0
      %v4042 = vpop.trf.xlu0
      %v4043 = vpop.trf.xlu0
      %v4044 = vpop.trf.xlu0
      %v4045 = vpop.trf.xlu0
      %4046 = vxpose.xlu0.b32.start [1/16] %v4009, 128
      %4047 = vxpose.xlu0.b32.cont [2/16] 0.0, 128
      %4048 = vxpose.xlu0.b32.cont [3/16] 0.0, 128
      %4049 = vxpose.xlu0.b32.cont [4/16] 0.0, 128
      %4050 = vxpose.xlu0.b32.cont [5/16] 0.0, 128
      %4051 = vxpose.xlu0.b32.cont [6/16] 0.0, 128
      %4052 = vxpose.xlu0.b32.cont [7/16] 0.0, 128
      %4053 = vxpose.xlu0.b32.cont [8/16] 0.0, 128
      %4054 = vxpose.xlu0.b32.cont [9/16] 0.0, 128
      %4055 = vxpose.xlu0.b32.cont [10/16] 0.0, 128
      %4056 = vxpose.xlu0.b32.cont [11/16] 0.0, 128
      %4057 = vxpose.xlu0.b32.cont [12/16] 0.0, 128
      %4058 = vxpose.xlu0.b32.cont [13/16] 0.0, 128
      %4059 = vxpose.xlu0.b32.cont [14/16] 0.0, 128
      %4060 = vxpose.xlu0.b32.cont [15/16] 0.0, 128
      %4061 = vxpose.xlu0.b32.end [16/16] 0.0, 128
      %v4062 = vpop.trf.xlu0
      %v4063 = vpop.trf.xlu0
      %v4064 = vpop.trf.xlu0
      %v4065 = vpop.trf.xlu0
      %v4066 = vpop.trf.xlu0
      %v4067 = vpop.trf.xlu0
      %v4068 = vpop.trf.xlu0
      %v4069 = vpop.trf.xlu0
      %v4070 = vpop.trf.xlu0
      %v4071 = vpop.trf.xlu0
      %v4072 = vpop.trf.xlu0
      %v4073 = vpop.trf.xlu0
      %v4074 = vpop.trf.xlu0
      %v4075 = vpop.trf.xlu0
      %v4076 = vpop.trf.xlu0
      %v4077 = vpop.trf.xlu0
      %4078 = vxpose.xlu0.b32.start [1/16] %v4010, 128
      %4079 = vxpose.xlu0.b32.cont [2/16] 0.0, 128
      %4080 = vxpose.xlu0.b32.cont [3/16] 0.0, 128
      %4081 = vxpose.xlu0.b32.cont [4/16] 0.0, 128
      %4082 = vxpose.xlu0.b32.cont [5/16] 0.0, 128
      %4083 = vxpose.xlu0.b32.cont [6/16] 0.0, 128
      %4084 = vxpose.xlu0.b32.cont [7/16] 0.0, 128
      %4085 = vxpose.xlu0.b32.cont [8/16] 0.0, 128
      %4086 = vxpose.xlu0.b32.cont [9/16] 0.0, 128
      %4087 = vxpose.xlu0.b32.cont [10/16] 0.0, 128
      %4088 = vxpose.xlu0.b32.cont [11/16] 0.0, 128
      %4089 = vxpose.xlu0.b32.cont [12/16] 0.0, 128
      %4090 = vxpose.xlu0.b32.cont [13/16] 0.0, 128
      %4091 = vxpose.xlu0.b32.cont [14/16] 0.0, 128
      %4092 = vxpose.xlu0.b32.cont [15/16] 0.0, 128
      %4093 = vxpose.xlu0.b32.end [16/16] 0.0, 128
      %v4094 = vpop.trf.xlu0
      %v4095 = vpop.trf.xlu0
      %v4096 = vpop.trf.xlu0
      %v4097 = vpop.trf.xlu0
      %v4098 = vpop.trf.xlu0
      %v4099 = vpop.trf.xlu0
      %v4100 = vpop.trf.xlu0
      %v4101 = vpop.trf.xlu0
      %v4102 = vpop.trf.xlu0
      %v4103 = vpop.trf.xlu0
      %v4104 = vpop.trf.xlu0
      %v4105 = vpop.trf.xlu0
      %v4106 = vpop.trf.xlu0
      %v4107 = vpop.trf.xlu0
      %v4108 = vpop.trf.xlu0
      %v4109 = vpop.trf.xlu0
      %v4111 = vsel %vm915, %v4030, 0
      %v4114 = vsel %vm915, %v4031, 0
      %v4117 = vsel %vm915, %v4032, 0
      %v4120 = vsel %vm915, %v4033, 0
      %v4123 = vsel %vm915, %v4034, 0
      %v4126 = vsel %vm915, %v4035, 0
      %v4129 = vsel %vm915, %v4036, 0
      %v4132 = vsel %vm915, %v4037, 0
      %v4135 = vsel %vm915, %v4038, 0
      %v4138 = vsel %vm915, %v4039, 0
      %v4141 = vsel %vm915, %v4040, 0
      %v4144 = vsel %vm915, %v4041, 0
      %v4147 = vsel %vm915, %v4042, 0
      %v4150 = vsel %vm915, %v4043, 0
      %v4153 = vsel %vm915, %v4044, 0
      %v4156 = vsel %vm915, %v4045, 0
      %v4159 = vsel %vm915, %v4062, 0
      %v4162 = vsel %vm915, %v4063, 0
      %v4165 = vsel %vm915, %v4064, 0
      %v4168 = vsel %vm915, %v4065, 0
      %v4171 = vsel %vm915, %v4066, 0
      %v4174 = vsel %vm915, %v4067, 0
      %v4177 = vsel %vm915, %v4068, 0
      %v4180 = vsel %vm915, %v4069, 0
      %v4183 = vsel %vm915, %v4070, 0
      %v4186 = vsel %vm915, %v4071, 0
      %v4189 = vsel %vm915, %v4072, 0
      %v4192 = vsel %vm915, %v4073, 0
      %v4195 = vsel %vm915, %v4074, 0
      %v4198 = vsel %vm915, %v4075, 0
      %v4201 = vsel %vm915, %v4076, 0
      %v4204 = vsel %vm915, %v4077, 0
      %v4207 = vsel %vm915, %v4094, 0
      %v4210 = vsel %vm915, %v4095, 0
      %v4213 = vsel %vm915, %v4096, 0
      %v4216 = vsel %vm915, %v4097, 0
      %v4219 = vsel %vm915, %v4098, 0
      %v4222 = vsel %vm915, %v4099, 0
      %v4225 = vsel %vm915, %v4100, 0
      %v4228 = vsel %vm915, %v4101, 0
      %v4231 = vsel %vm915, %v4102, 0
      %v4234 = vsel %vm745, %v2150, 0
      %v4237 = vsel %vm745, %v2176, 0
      %v4240 = vsel %vm745, %v2202, 0
      %4242 = vmatpush.msra.mxu0 0.0
      %4243 = vmatpush.msra.mxu0 0.0
      %4244 = vmatpush.msra.mxu0 0.0
      %4245 = vmatpush.msra.mxu0 0.0
      %4246 = vmatpush.msra.mxu0 0.0
      %4247 = vmatpush.msra.mxu0 0.0
      %4248 = vmatpush.msra.mxu0 0.0
      %4249 = vmatpush.msra.mxu0 0.0
      %4250 = vmatpush.msra.mxu0 0.0
      %4251 = vmatpush.msra.mxu0 0.0
      %4252 = vmatpush.msra.mxu0 0.0
      %4253 = vmatpush.msra.mxu0 0.0
      %4254 = vmatpush.msra.mxu0 0.0
      %4255 = vmatpush.msra.mxu0 0.0
      %4256 = vmatpush.msra.mxu0 0.0
      %4257 = vmatpush.msra.mxu0 %v4234
      %4258 = vmatmul.f32.gmra.mxu0 %v4111
      %v4259 = vpop.f32.mrf.mxu0
      %v4260 = vadd.f32 0.0, %v4259
      %4261 = vmatmul.f32.gmra.mxu0 %v4114
      %v4262 = vpop.f32.mrf.mxu0
      %v4263 = vadd.f32 0.0, %v4262
      %4264 = vmatmul.f32.gmra.mxu0 %v4117
      %v4265 = vpop.f32.mrf.mxu0
      %v4266 = vadd.f32 0.0, %v4265
      %4267 = vmatmul.f32.gmra.mxu0 %v4120
      %v4268 = vpop.f32.mrf.mxu0
      %v4269 = vadd.f32 0.0, %v4268
      %4270 = vmatmul.f32.gmra.mxu0 %v4123
      %v4271 = vpop.f32.mrf.mxu0
      %v4272 = vadd.f32 0.0, %v4271
      %4273 = vmatmul.f32.gmra.mxu0 %v4126
      %v4274 = vpop.f32.mrf.mxu0
      %v4275 = vadd.f32 0.0, %v4274
      %4276 = vmatmul.f32.gmra.mxu0 %v4129
      %v4277 = vpop.f32.mrf.mxu0
      %v4278 = vadd.f32 0.0, %v4277
      %4279 = vmatmul.f32.gmra.mxu0 %v4132
      %v4280 = vpop.f32.mrf.mxu0
      %v4281 = vadd.f32 0.0, %v4280
      %4282 = vmatmul.f32.gmra.mxu0 %v4135
      %v4283 = vpop.f32.mrf.mxu0
      %v4284 = vadd.f32 0.0, %v4283
      %4285 = vmatmul.f32.gmra.mxu0 %v4138
      %v4286 = vpop.f32.mrf.mxu0
      %v4287 = vadd.f32 0.0, %v4286
      %4288 = vmatmul.f32.gmra.mxu0 %v4141
      %v4289 = vpop.f32.mrf.mxu0
      %v4290 = vadd.f32 0.0, %v4289
      %4291 = vmatmul.f32.gmra.mxu0 %v4144
      %v4292 = vpop.f32.mrf.mxu0
      %v4293 = vadd.f32 0.0, %v4292
      %4294 = vmatmul.f32.gmra.mxu0 %v4147
      %v4295 = vpop.f32.mrf.mxu0
      %v4296 = vadd.f32 0.0, %v4295
      %4297 = vmatmul.f32.gmra.mxu0 %v4150
      %v4298 = vpop.f32.mrf.mxu0
      %v4299 = vadd.f32 0.0, %v4298
      %4300 = vmatmul.f32.gmra.mxu0 %v4153
      %v4301 = vpop.f32.mrf.mxu0
      %v4302 = vadd.f32 0.0, %v4301
      %4303 = vmatmul.f32.gmra.mxu0 %v4156
      %v4304 = vpop.f32.mrf.mxu0
      %v4305 = vadd.f32 0.0, %v4304
      %4306 = vmatmul.f32.gmra.mxu0 %v4159
      %v4307 = vpop.f32.mrf.mxu0
      %v4308 = vadd.f32 0.0, %v4307
      %4309 = vmatmul.f32.gmra.mxu0 %v4162
      %v4310 = vpop.f32.mrf.mxu0
      %v4311 = vadd.f32 0.0, %v4310
      %4312 = vmatmul.f32.gmra.mxu0 %v4165
      %v4313 = vpop.f32.mrf.mxu0
      %v4314 = vadd.f32 0.0, %v4313
      %4315 = vmatmul.f32.gmra.mxu0 %v4168
      %v4316 = vpop.f32.mrf.mxu0
      %v4317 = vadd.f32 0.0, %v4316
      %4318 = vmatmul.f32.gmra.mxu0 %v4171
      %v4319 = vpop.f32.mrf.mxu0
      %v4320 = vadd.f32 0.0, %v4319
      %4321 = vmatmul.f32.gmra.mxu0 %v4174
      %v4322 = vpop.f32.mrf.mxu0
      %v4323 = vadd.f32 0.0, %v4322
      %4324 = vmatmul.f32.gmra.mxu0 %v4177
      %v4325 = vpop.f32.mrf.mxu0
      %v4326 = vadd.f32 0.0, %v4325
      %4327 = vmatmul.f32.gmra.mxu0 %v4180
      %v4328 = vpop.f32.mrf.mxu0
      %v4329 = vadd.f32 0.0, %v4328
      %4330 = vmatmul.f32.gmra.mxu0 %v4183
      %v4331 = vpop.f32.mrf.mxu0
      %v4332 = vadd.f32 0.0, %v4331
      %4333 = vmatmul.f32.gmra.mxu0 %v4186
      %v4334 = vpop.f32.mrf.mxu0
      %v4335 = vadd.f32 0.0, %v4334
      %4336 = vmatmul.f32.gmra.mxu0 %v4189
      %v4337 = vpop.f32.mrf.mxu0
      %v4338 = vadd.f32 0.0, %v4337
      %4339 = vmatmul.f32.gmra.mxu0 %v4192
      %v4340 = vpop.f32.mrf.mxu0
      %v4341 = vadd.f32 0.0, %v4340
      %4342 = vmatmul.f32.gmra.mxu0 %v4195
      %v4343 = vpop.f32.mrf.mxu0
      %v4344 = vadd.f32 0.0, %v4343
      %4345 = vmatmul.f32.gmra.mxu0 %v4198
      %v4346 = vpop.f32.mrf.mxu0
      %v4347 = vadd.f32 0.0, %v4346
      %4348 = vmatmul.f32.gmra.mxu0 %v4201
      %v4349 = vpop.f32.mrf.mxu0
      %v4350 = vadd.f32 0.0, %v4349
      %4351 = vmatmul.f32.gmra.mxu0 %v4204
      %v4352 = vpop.f32.mrf.mxu0
      %v4353 = vadd.f32 0.0, %v4352
      %4354 = vmatmul.f32.gmra.mxu0 %v4207
      %v4355 = vpop.f32.mrf.mxu0
      %v4356 = vadd.f32 0.0, %v4355
      %4357 = vmatmul.f32.gmra.mxu0 %v4210
      %v4358 = vpop.f32.mrf.mxu0
      %v4359 = vadd.f32 0.0, %v4358
      %4360 = vmatmul.f32.gmra.mxu0 %v4213
      %v4361 = vpop.f32.mrf.mxu0
      %v4362 = vadd.f32 0.0, %v4361
      %4363 = vmatmul.f32.gmra.mxu0 %v4216
      %v4364 = vpop.f32.mrf.mxu0
      %v4365 = vadd.f32 0.0, %v4364
      %4366 = vmatmul.f32.gmra.mxu0 %v4219
      %v4367 = vpop.f32.mrf.mxu0
      %v4368 = vadd.f32 0.0, %v4367
      %4369 = vmatmul.f32.gmra.mxu0 %v4222
      %v4370 = vpop.f32.mrf.mxu0
      %v4371 = vadd.f32 0.0, %v4370
      %4372 = vmatmul.f32.gmra.mxu0 %v4225
      %v4373 = vpop.f32.mrf.mxu0
      %v4374 = vadd.f32 0.0, %v4373
      %4375 = vmatmul.f32.gmra.mxu0 %v4228
      %v4376 = vpop.f32.mrf.mxu0
      %v4377 = vadd.f32 0.0, %v4376
      %4378 = vmatmul.f32.gmra.mxu0 %v4231
      %v4379 = vpop.f32.mrf.mxu0
      %v4380 = vadd.f32 0.0, %v4379
      %4381 = vdwg.mxu0
      %4382 = vmatpush.msra.mxu0 0.0
      %4383 = vmatpush.msra.mxu0 0.0
      %4384 = vmatpush.msra.mxu0 0.0
      %4385 = vmatpush.msra.mxu0 0.0
      %4386 = vmatpush.msra.mxu0 0.0
      %4387 = vmatpush.msra.mxu0 0.0
      %4388 = vmatpush.msra.mxu0 0.0
      %4389 = vmatpush.msra.mxu0 0.0
      %4390 = vmatpush.msra.mxu0 0.0
      %4391 = vmatpush.msra.mxu0 0.0
      %4392 = vmatpush.msra.mxu0 0.0
      %4393 = vmatpush.msra.mxu0 0.0
      %4394 = vmatpush.msra.mxu0 0.0
      %4395 = vmatpush.msra.mxu0 0.0
      %4396 = vmatpush.msra.mxu0 0.0
      %4397 = vmatpush.msra.mxu0 %v4237
      %4398 = vmatmul.f32.gmra.mxu0 %v4111
      %v4399 = vpop.f32.mrf.mxu0
      %v4400 = vadd.f32 0.0, %v4399
      %4401 = vmatmul.f32.gmra.mxu0 %v4114
      %v4402 = vpop.f32.mrf.mxu0
      %v4403 = vadd.f32 0.0, %v4402
      %4404 = vmatmul.f32.gmra.mxu0 %v4117
      %v4405 = vpop.f32.mrf.mxu0
      %v4406 = vadd.f32 0.0, %v4405
      %4407 = vmatmul.f32.gmra.mxu0 %v4120
      %v4408 = vpop.f32.mrf.mxu0
      %v4409 = vadd.f32 0.0, %v4408
      %4410 = vmatmul.f32.gmra.mxu0 %v4123
      %v4411 = vpop.f32.mrf.mxu0
      %v4412 = vadd.f32 0.0, %v4411
      %4413 = vmatmul.f32.gmra.mxu0 %v4126
      %v4414 = vpop.f32.mrf.mxu0
      %v4415 = vadd.f32 0.0, %v4414
      %4416 = vmatmul.f32.gmra.mxu0 %v4129
      %v4417 = vpop.f32.mrf.mxu0
      %v4418 = vadd.f32 0.0, %v4417
      %4419 = vmatmul.f32.gmra.mxu0 %v4132
      %v4420 = vpop.f32.mrf.mxu0
      %v4421 = vadd.f32 0.0, %v4420
      %4422 = vmatmul.f32.gmra.mxu0 %v4135
      %v4423 = vpop.f32.mrf.mxu0
      %v4424 = vadd.f32 0.0, %v4423
      %4425 = vmatmul.f32.gmra.mxu0 %v4138
      %v4426 = vpop.f32.mrf.mxu0
      %v4427 = vadd.f32 0.0, %v4426
      %4428 = vmatmul.f32.gmra.mxu0 %v4141
      %v4429 = vpop.f32.mrf.mxu0
      %v4430 = vadd.f32 0.0, %v4429
      %4431 = vmatmul.f32.gmra.mxu0 %v4144
      %v4432 = vpop.f32.mrf.mxu0
      %v4433 = vadd.f32 0.0, %v4432
      %4434 = vmatmul.f32.gmra.mxu0 %v4147
      %v4435 = vpop.f32.mrf.mxu0
      %v4436 = vadd.f32 0.0, %v4435
      %4437 = vmatmul.f32.gmra.mxu0 %v4150
      %v4438 = vpop.f32.mrf.mxu0
      %v4439 = vadd.f32 0.0, %v4438
      %4440 = vmatmul.f32.gmra.mxu0 %v4153
      %v4441 = vpop.f32.mrf.mxu0
      %v4442 = vadd.f32 0.0, %v4441
      %4443 = vmatmul.f32.gmra.mxu0 %v4156
      %v4444 = vpop.f32.mrf.mxu0
      %v4445 = vadd.f32 0.0, %v4444
      %4446 = vmatmul.f32.gmra.mxu0 %v4159
      %v4447 = vpop.f32.mrf.mxu0
      %v4448 = vadd.f32 0.0, %v4447
      %4449 = vmatmul.f32.gmra.mxu0 %v4162
      %v4450 = vpop.f32.mrf.mxu0
      %v4451 = vadd.f32 0.0, %v4450
      %4452 = vmatmul.f32.gmra.mxu0 %v4165
      %v4453 = vpop.f32.mrf.mxu0
      %v4454 = vadd.f32 0.0, %v4453
      %4455 = vmatmul.f32.gmra.mxu0 %v4168
      %v4456 = vpop.f32.mrf.mxu0
      %v4457 = vadd.f32 0.0, %v4456
      %4458 = vmatmul.f32.gmra.mxu0 %v4171
      %v4459 = vpop.f32.mrf.mxu0
      %v4460 = vadd.f32 0.0, %v4459
      %4461 = vmatmul.f32.gmra.mxu0 %v4174
      %v4462 = vpop.f32.mrf.mxu0
      %v4463 = vadd.f32 0.0, %v4462
      %4464 = vmatmul.f32.gmra.mxu0 %v4177
      %v4465 = vpop.f32.mrf.mxu0
      %v4466 = vadd.f32 0.0, %v4465
      %4467 = vmatmul.f32.gmra.mxu0 %v4180
      %v4468 = vpop.f32.mrf.mxu0
      %v4469 = vadd.f32 0.0, %v4468
      %4470 = vmatmul.f32.gmra.mxu0 %v4183
      %v4471 = vpop.f32.mrf.mxu0
      %v4472 = vadd.f32 0.0, %v4471
      %4473 = vmatmul.f32.gmra.mxu0 %v4186
      %v4474 = vpop.f32.mrf.mxu0
      %v4475 = vadd.f32 0.0, %v4474
      %4476 = vmatmul.f32.gmra.mxu0 %v4189
      %v4477 = vpop.f32.mrf.mxu0
      %v4478 = vadd.f32 0.0, %v4477
      %4479 = vmatmul.f32.gmra.mxu0 %v4192
      %v4480 = vpop.f32.mrf.mxu0
      %v4481 = vadd.f32 0.0, %v4480
      %4482 = vmatmul.f32.gmra.mxu0 %v4195
      %v4483 = vpop.f32.mrf.mxu0
      %v4484 = vadd.f32 0.0, %v4483
      %4485 = vmatmul.f32.gmra.mxu0 %v4198
      %v4486 = vpop.f32.mrf.mxu0
      %v4487 = vadd.f32 0.0, %v4486
      %4488 = vmatmul.f32.gmra.mxu0 %v4201
      %v4489 = vpop.f32.mrf.mxu0
      %v4490 = vadd.f32 0.0, %v4489
      %4491 = vmatmul.f32.gmra.mxu0 %v4204
      %v4492 = vpop.f32.mrf.mxu0
      %v4493 = vadd.f32 0.0, %v4492
      %4494 = vmatmul.f32.gmra.mxu0 %v4207
      %v4495 = vpop.f32.mrf.mxu0
      %v4496 = vadd.f32 0.0, %v4495
      %4497 = vmatmul.f32.gmra.mxu0 %v4210
      %v4498 = vpop.f32.mrf.mxu0
      %v4499 = vadd.f32 0.0, %v4498
      %4500 = vmatmul.f32.gmra.mxu0 %v4213
      %v4501 = vpop.f32.mrf.mxu0
      %v4502 = vadd.f32 0.0, %v4501
      %4503 = vmatmul.f32.gmra.mxu0 %v4216
      %v4504 = vpop.f32.mrf.mxu0
      %v4505 = vadd.f32 0.0, %v4504
      %4506 = vmatmul.f32.gmra.mxu0 %v4219
      %v4507 = vpop.f32.mrf.mxu0
      %v4508 = vadd.f32 0.0, %v4507
      %4509 = vmatmul.f32.gmra.mxu0 %v4222
      %v4510 = vpop.f32.mrf.mxu0
      %v4511 = vadd.f32 0.0, %v4510
      %4512 = vmatmul.f32.gmra.mxu0 %v4225
      %v4513 = vpop.f32.mrf.mxu0
      %v4514 = vadd.f32 0.0, %v4513
      %4515 = vmatmul.f32.gmra.mxu0 %v4228
      %v4516 = vpop.f32.mrf.mxu0
      %v4517 = vadd.f32 0.0, %v4516
      %4518 = vmatmul.f32.gmra.mxu0 %v4231
      %v4519 = vpop.f32.mrf.mxu0
      %v4520 = vadd.f32 0.0, %v4519
      %4521 = vdwg.mxu0
      %4522 = vmatpush.msra.mxu0 0.0
      %4523 = vmatpush.msra.mxu0 0.0
      %4524 = vmatpush.msra.mxu0 0.0
      %4525 = vmatpush.msra.mxu0 0.0
      %4526 = vmatpush.msra.mxu0 0.0
      %4527 = vmatpush.msra.mxu0 0.0
      %4528 = vmatpush.msra.mxu0 0.0
      %4529 = vmatpush.msra.mxu0 0.0
      %4530 = vmatpush.msra.mxu0 0.0
      %4531 = vmatpush.msra.mxu0 0.0
      %4532 = vmatpush.msra.mxu0 0.0
      %4533 = vmatpush.msra.mxu0 0.0
      %4534 = vmatpush.msra.mxu0 0.0
      %4535 = vmatpush.msra.mxu0 0.0
      %4536 = vmatpush.msra.mxu0 0.0
      %4537 = vmatpush.msra.mxu0 %v4240
      %4538 = vmatmul.f32.gmra.mxu0 %v4111
      %v4539 = vpop.f32.mrf.mxu0
      %v4540 = vadd.f32 0.0, %v4539
      %4541 = vmatmul.f32.gmra.mxu0 %v4114
      %v4542 = vpop.f32.mrf.mxu0
      %v4543 = vadd.f32 0.0, %v4542
      %4544 = vmatmul.f32.gmra.mxu0 %v4117
      %v4545 = vpop.f32.mrf.mxu0
      %v4546 = vadd.f32 0.0, %v4545
      %4547 = vmatmul.f32.gmra.mxu0 %v4120
      %v4548 = vpop.f32.mrf.mxu0
      %v4549 = vadd.f32 0.0, %v4548
      %4550 = vmatmul.f32.gmra.mxu0 %v4123
      %v4551 = vpop.f32.mrf.mxu0
      %v4552 = vadd.f32 0.0, %v4551
      %4553 = vmatmul.f32.gmra.mxu0 %v4126
      %v4554 = vpop.f32.mrf.mxu0
      %v4555 = vadd.f32 0.0, %v4554
      %4556 = vmatmul.f32.gmra.mxu0 %v4129
      %v4557 = vpop.f32.mrf.mxu0
      %v4558 = vadd.f32 0.0, %v4557
      %4559 = vmatmul.f32.gmra.mxu0 %v4132
      %v4560 = vpop.f32.mrf.mxu0
      %v4561 = vadd.f32 0.0, %v4560
      %4562 = vmatmul.f32.gmra.mxu0 %v4135
      %v4563 = vpop.f32.mrf.mxu0
      %v4564 = vadd.f32 0.0, %v4563
      %4565 = vmatmul.f32.gmra.mxu0 %v4138
      %v4566 = vpop.f32.mrf.mxu0
      %v4567 = vadd.f32 0.0, %v4566
      %4568 = vmatmul.f32.gmra.mxu0 %v4141
      %v4569 = vpop.f32.mrf.mxu0
      %v4570 = vadd.f32 0.0, %v4569
      %4571 = vmatmul.f32.gmra.mxu0 %v4144
      %v4572 = vpop.f32.mrf.mxu0
      %v4573 = vadd.f32 0.0, %v4572
      %4574 = vmatmul.f32.gmra.mxu0 %v4147
      %v4575 = vpop.f32.mrf.mxu0
      %v4576 = vadd.f32 0.0, %v4575
      %4577 = vmatmul.f32.gmra.mxu0 %v4150
      %v4578 = vpop.f32.mrf.mxu0
      %v4579 = vadd.f32 0.0, %v4578
      %4580 = vmatmul.f32.gmra.mxu0 %v4153
      %v4581 = vpop.f32.mrf.mxu0
      %v4582 = vadd.f32 0.0, %v4581
      %4583 = vmatmul.f32.gmra.mxu0 %v4156
      %v4584 = vpop.f32.mrf.mxu0
      %v4585 = vadd.f32 0.0, %v4584
      %4586 = vmatmul.f32.gmra.mxu0 %v4159
      %v4587 = vpop.f32.mrf.mxu0
      %v4588 = vadd.f32 0.0, %v4587
      %4589 = vmatmul.f32.gmra.mxu0 %v4162
      %v4590 = vpop.f32.mrf.mxu0
      %v4591 = vadd.f32 0.0, %v4590
      %4592 = vmatmul.f32.gmra.mxu0 %v4165
      %v4593 = vpop.f32.mrf.mxu0
      %v4594 = vadd.f32 0.0, %v4593
      %4595 = vmatmul.f32.gmra.mxu0 %v4168
      %v4596 = vpop.f32.mrf.mxu0
      %v4597 = vadd.f32 0.0, %v4596
      %4598 = vmatmul.f32.gmra.mxu0 %v4171
      %v4599 = vpop.f32.mrf.mxu0
      %v4600 = vadd.f32 0.0, %v4599
      %4601 = vmatmul.f32.gmra.mxu0 %v4174
      %v4602 = vpop.f32.mrf.mxu0
      %v4603 = vadd.f32 0.0, %v4602
      %4604 = vmatmul.f32.gmra.mxu0 %v4177
      %v4605 = vpop.f32.mrf.mxu0
      %v4606 = vadd.f32 0.0, %v4605
      %4607 = vmatmul.f32.gmra.mxu0 %v4180
      %v4608 = vpop.f32.mrf.mxu0
      %v4609 = vadd.f32 0.0, %v4608
      %4610 = vmatmul.f32.gmra.mxu0 %v4183
      %v4611 = vpop.f32.mrf.mxu0
      %v4612 = vadd.f32 0.0, %v4611
      %4613 = vmatmul.f32.gmra.mxu0 %v4186
      %v4614 = vpop.f32.mrf.mxu0
      %v4615 = vadd.f32 0.0, %v4614
      %4616 = vmatmul.f32.gmra.mxu0 %v4189
      %v4617 = vpop.f32.mrf.mxu0
      %v4618 = vadd.f32 0.0, %v4617
      %4619 = vmatmul.f32.gmra.mxu0 %v4192
      %v4620 = vpop.f32.mrf.mxu0
      %v4621 = vadd.f32 0.0, %v4620
      %4622 = vmatmul.f32.gmra.mxu0 %v4195
      %v4623 = vpop.f32.mrf.mxu0
      %v4624 = vadd.f32 0.0, %v4623
      %4625 = vmatmul.f32.gmra.mxu0 %v4198
      %v4626 = vpop.f32.mrf.mxu0
      %v4627 = vadd.f32 0.0, %v4626
      %4628 = vmatmul.f32.gmra.mxu0 %v4201
      %v4629 = vpop.f32.mrf.mxu0
      %v4630 = vadd.f32 0.0, %v4629
      %4631 = vmatmul.f32.gmra.mxu0 %v4204
      %v4632 = vpop.f32.mrf.mxu0
      %v4633 = vadd.f32 0.0, %v4632
      %4634 = vmatmul.f32.gmra.mxu0 %v4207
      %v4635 = vpop.f32.mrf.mxu0
      %v4636 = vadd.f32 0.0, %v4635
      %4637 = vmatmul.f32.gmra.mxu0 %v4210
      %v4638 = vpop.f32.mrf.mxu0
      %v4639 = vadd.f32 0.0, %v4638
      %4640 = vmatmul.f32.gmra.mxu0 %v4213
      %v4641 = vpop.f32.mrf.mxu0
      %v4642 = vadd.f32 0.0, %v4641
      %4643 = vmatmul.f32.gmra.mxu0 %v4216
      %v4644 = vpop.f32.mrf.mxu0
      %v4645 = vadd.f32 0.0, %v4644
      %4646 = vmatmul.f32.gmra.mxu0 %v4219
      %v4647 = vpop.f32.mrf.mxu0
      %v4648 = vadd.f32 0.0, %v4647
      %4649 = vmatmul.f32.gmra.mxu0 %v4222
      %v4650 = vpop.f32.mrf.mxu0
      %v4651 = vadd.f32 0.0, %v4650
      %4652 = vmatmul.f32.gmra.mxu0 %v4225
      %v4653 = vpop.f32.mrf.mxu0
      %v4654 = vadd.f32 0.0, %v4653
      %4655 = vmatmul.f32.gmra.mxu0 %v4228
      %v4656 = vpop.f32.mrf.mxu0
      %v4657 = vadd.f32 0.0, %v4656
      %4658 = vmatmul.f32.gmra.mxu0 %v4231
      %v4659 = vpop.f32.mrf.mxu0
      %v4660 = vadd.f32 0.0, %v4659
      %4661 = vdwg.mxu0
      %v4662 = vmul.f32 %v4260, 0.5
      %v4663 = vmul.f32 %v4400, 0.5
      %v4664 = vmul.f32 %v4540, 0.5
      %v4665 = vmul.f32 %v4263, 0.5
      %v4666 = vmul.f32 %v4403, 0.5
      %v4667 = vmul.f32 %v4543, 0.5
      %v4668 = vmul.f32 %v4266, 0.5
      %v4669 = vmul.f32 %v4406, 0.5
      %v4670 = vmul.f32 %v4546, 0.5
      %v4671 = vmul.f32 %v4269, 0.5
      %v4672 = vmul.f32 %v4409, 0.5
      %v4673 = vmul.f32 %v4549, 0.5
      %v4674 = vmul.f32 %v4272, 0.5
      %v4675 = vmul.f32 %v4412, 0.5
      %v4676 = vmul.f32 %v4552, 0.5
      %v4677 = vmul.f32 %v4275, 0.5
      %v4678 = vmul.f32 %v4415, 0.5
      %v4679 = vmul.f32 %v4555, 0.5
      %v4680 = vmul.f32 %v4278, 0.5
      %v4681 = vmul.f32 %v4418, 0.5
      %v4682 = vmul.f32 %v4558, 0.5
      %v4683 = vmul.f32 %v4281, 0.5
      %v4684 = vmul.f32 %v4421, 0.5
      %v4685 = vmul.f32 %v4561, 0.5
      %v4686 = vmul.f32 %v4284, 0.5
      %v4687 = vmul.f32 %v4424, 0.5
      %v4688 = vmul.f32 %v4564, 0.5
      %v4689 = vmul.f32 %v4287, 0.5
      %v4690 = vmul.f32 %v4427, 0.5
      %v4691 = vmul.f32 %v4567, 0.5
      %v4692 = vmul.f32 %v4290, 0.5
      %v4693 = vmul.f32 %v4430, 0.5
      %v4694 = vmul.f32 %v4570, 0.5
      %v4695 = vmul.f32 %v4293, 0.5
      %v4696 = vmul.f32 %v4433, 0.5
      %v4697 = vmul.f32 %v4573, 0.5
      %v4698 = vmul.f32 %v4296, 0.5
      %v4699 = vmul.f32 %v4436, 0.5
      %v4700 = vmul.f32 %v4576, 0.5
      %v4701 = vmul.f32 %v4299, 0.5
      %v4702 = vmul.f32 %v4439, 0.5
      %v4703 = vmul.f32 %v4579, 0.5
      %v4704 = vmul.f32 %v4302, 0.5
      %v4705 = vmul.f32 %v4442, 0.5
      %v4706 = vmul.f32 %v4582, 0.5
      %v4707 = vmul.f32 %v4305, 0.5
      %v4708 = vmul.f32 %v4445, 0.5
      %v4709 = vmul.f32 %v4585, 0.5
      %v4710 = vmul.f32 %v4308, 0.5
      %v4711 = vmul.f32 %v4448, 0.5
      %v4712 = vmul.f32 %v4588, 0.5
      %v4713 = vmul.f32 %v4311, 0.5
      %v4714 = vmul.f32 %v4451, 0.5
      %v4715 = vmul.f32 %v4591, 0.5
      %v4716 = vmul.f32 %v4314, 0.5
      %v4717 = vmul.f32 %v4454, 0.5
      %v4718 = vmul.f32 %v4594, 0.5
      %v4719 = vmul.f32 %v4317, 0.5
      %v4720 = vmul.f32 %v4457, 0.5
      %v4721 = vmul.f32 %v4597, 0.5
      %v4722 = vmul.f32 %v4320, 0.5
      %v4723 = vmul.f32 %v4460, 0.5
      %v4724 = vmul.f32 %v4600, 0.5
      %v4725 = vmul.f32 %v4323, 0.5
      %v4726 = vmul.f32 %v4463, 0.5
      %v4727 = vmul.f32 %v4603, 0.5
      %v4728 = vmul.f32 %v4326, 0.5
      %v4729 = vmul.f32 %v4466, 0.5
      %v4730 = vmul.f32 %v4606, 0.5
      %v4731 = vmul.f32 %v4329, 0.5
      %v4732 = vmul.f32 %v4469, 0.5
      %v4733 = vmul.f32 %v4609, 0.5
      %v4734 = vmul.f32 %v4332, 0.5
      %v4735 = vmul.f32 %v4472, 0.5
      %v4736 = vmul.f32 %v4612, 0.5
      %v4737 = vmul.f32 %v4335, 0.5
      %v4738 = vmul.f32 %v4475, 0.5
      %v4739 = vmul.f32 %v4615, 0.5
      %v4740 = vmul.f32 %v4338, 0.5
      %v4741 = vmul.f32 %v4478, 0.5
      %v4742 = vmul.f32 %v4618, 0.5
      %v4743 = vmul.f32 %v4341, 0.5
      %v4744 = vmul.f32 %v4481, 0.5
      %v4745 = vmul.f32 %v4621, 0.5
      %v4746 = vmul.f32 %v4344, 0.5
      %v4747 = vmul.f32 %v4484, 0.5
      %v4748 = vmul.f32 %v4624, 0.5
      %v4749 = vmul.f32 %v4347, 0.5
      %v4750 = vmul.f32 %v4487, 0.5
      %v4751 = vmul.f32 %v4627, 0.5
      %v4752 = vmul.f32 %v4350, 0.5
      %v4753 = vmul.f32 %v4490, 0.5
      %v4754 = vmul.f32 %v4630, 0.5
      %v4755 = vmul.f32 %v4353, 0.5
      %v4756 = vmul.f32 %v4493, 0.5
      %v4757 = vmul.f32 %v4633, 0.5
      %v4758 = vmul.f32 %v4356, 0.5
      %v4759 = vmul.f32 %v4496, 0.5
      %v4760 = vmul.f32 %v4636, 0.5
      %v4761 = vmul.f32 %v4359, 0.5
      %v4762 = vmul.f32 %v4499, 0.5
      %v4763 = vmul.f32 %v4639, 0.5
      %v4764 = vmul.f32 %v4362, 0.5
      %v4765 = vmul.f32 %v4502, 0.5
      %v4766 = vmul.f32 %v4642, 0.5
      %v4767 = vmul.f32 %v4365, 0.5
      %v4768 = vmul.f32 %v4505, 0.5
      %v4769 = vmul.f32 %v4645, 0.5
      %v4770 = vmul.f32 %v4368, 0.5
      %v4771 = vmul.f32 %v4508, 0.5
      %v4772 = vmul.f32 %v4648, 0.5
      %v4773 = vmul.f32 %v4371, 0.5
      %v4774 = vmul.f32 %v4511, 0.5
      %v4775 = vmul.f32 %v4651, 0.5
      %v4776 = vmul.f32 %v4374, 0.5
      %v4777 = vmul.f32 %v4514, 0.5
      %v4778 = vmul.f32 %v4654, 0.5
      %v4779 = vmul.f32 %v4377, 0.5
      %v4780 = vmul.f32 %v4517, 0.5
      %v4781 = vmul.f32 %v4657, 0.5
      %v4782 = vmul.f32 %v4380, 0.5
      %v4783 = vmul.f32 %v4520, 0.5
      %v4784 = vmul.f32 %v4660, 0.5
      %v4785 = vadd.f32 %v4662, %v2981
      %v4786 = vadd.f32 %v4663, %v2982
      %v4787 = vadd.f32 %v4664, %v2983
      %v4788 = vadd.f32 %v4665, %v2981
      %v4789 = vadd.f32 %v4666, %v2982
      %v4790 = vadd.f32 %v4667, %v2983
      %v4791 = vadd.f32 %v4668, %v2981
      %v4792 = vadd.f32 %v4669, %v2982
      %v4793 = vadd.f32 %v4670, %v2983
      %v4794 = vadd.f32 %v4671, %v2981
      %v4795 = vadd.f32 %v4672, %v2982
      %v4796 = vadd.f32 %v4673, %v2983
      %v4797 = vadd.f32 %v4674, %v2981
      %v4798 = vadd.f32 %v4675, %v2982
      %v4799 = vadd.f32 %v4676, %v2983
      %v4800 = vadd.f32 %v4677, %v2981
      %v4801 = vadd.f32 %v4678, %v2982
      %v4802 = vadd.f32 %v4679, %v2983
      %v4803 = vadd.f32 %v4680, %v2981
      %v4804 = vadd.f32 %v4681, %v2982
      %v4805 = vadd.f32 %v4682, %v2983
      %v4806 = vadd.f32 %v4683, %v2981
      %v4807 = vadd.f32 %v4684, %v2982
      %v4808 = vadd.f32 %v4685, %v2983
      %v4809 = vadd.f32 %v4686, %v2981
      %v4810 = vadd.f32 %v4687, %v2982
      %v4811 = vadd.f32 %v4688, %v2983
      %v4812 = vadd.f32 %v4689, %v2981
      %v4813 = vadd.f32 %v4690, %v2982
      %v4814 = vadd.f32 %v4691, %v2983
      %v4815 = vadd.f32 %v4692, %v2981
      %v4816 = vadd.f32 %v4693, %v2982
      %v4817 = vadd.f32 %v4694, %v2983
      %v4818 = vadd.f32 %v4695, %v2981
      %v4819 = vadd.f32 %v4696, %v2982
      %v4820 = vadd.f32 %v4697, %v2983
      %v4821 = vadd.f32 %v4698, %v2981
      %v4822 = vadd.f32 %v4699, %v2982
      %v4823 = vadd.f32 %v4700, %v2983
      %v4824 = vadd.f32 %v4701, %v2981
      %v4825 = vadd.f32 %v4702, %v2982
      %v4826 = vadd.f32 %v4703, %v2983
      %v4827 = vadd.f32 %v4704, %v2981
      %v4828 = vadd.f32 %v4705, %v2982
      %v4829 = vadd.f32 %v4706, %v2983
      %v4830 = vadd.f32 %v4707, %v2981
      %v4831 = vadd.f32 %v4708, %v2982
      %v4832 = vadd.f32 %v4709, %v2983
      %v4833 = vadd.f32 %v4710, %v2981
      %v4834 = vadd.f32 %v4711, %v2982
      %v4835 = vadd.f32 %v4712, %v2983
      %v4836 = vadd.f32 %v4713, %v2981
      %v4837 = vadd.f32 %v4714, %v2982
      %v4838 = vadd.f32 %v4715, %v2983
      %v4839 = vadd.f32 %v4716, %v2981
      %v4840 = vadd.f32 %v4717, %v2982
      %v4841 = vadd.f32 %v4718, %v2983
      %v4842 = vadd.f32 %v4719, %v2981
      %v4843 = vadd.f32 %v4720, %v2982
      %v4844 = vadd.f32 %v4721, %v2983
      %v4845 = vadd.f32 %v4722, %v2981
      %v4846 = vadd.f32 %v4723, %v2982
      %v4847 = vadd.f32 %v4724, %v2983
      %v4848 = vadd.f32 %v4725, %v2981
      %v4849 = vadd.f32 %v4726, %v2982
      %v4850 = vadd.f32 %v4727, %v2983
      %v4851 = vadd.f32 %v4728, %v2981
      %v4852 = vadd.f32 %v4729, %v2982
      %v4853 = vadd.f32 %v4730, %v2983
      %v4854 = vadd.f32 %v4731, %v2981
      %v4855 = vadd.f32 %v4732, %v2982
      %v4856 = vadd.f32 %v4733, %v2983
      %v4857 = vadd.f32 %v4734, %v2981
      %v4858 = vadd.f32 %v4735, %v2982
      %v4859 = vadd.f32 %v4736, %v2983
      %v4860 = vadd.f32 %v4737, %v2981
      %v4861 = vadd.f32 %v4738, %v2982
      %v4862 = vadd.f32 %v4739, %v2983
      %v4863 = vadd.f32 %v4740, %v2981
      %v4864 = vadd.f32 %v4741, %v2982
      %v4865 = vadd.f32 %v4742, %v2983
      %v4866 = vadd.f32 %v4743, %v2981
      %v4867 = vadd.f32 %v4744, %v2982
      %v4868 = vadd.f32 %v4745, %v2983
      %v4869 = vadd.f32 %v4746, %v2981
      %v4870 = vadd.f32 %v4747, %v2982
      %v4871 = vadd.f32 %v4748, %v2983
      %v4872 = vadd.f32 %v4749, %v2981
      %v4873 = vadd.f32 %v4750, %v2982
      %v4874 = vadd.f32 %v4751, %v2983
      %v4875 = vadd.f32 %v4752, %v2981
      %v4876 = vadd.f32 %v4753, %v2982
      %v4877 = vadd.f32 %v4754, %v2983
      %v4878 = vadd.f32 %v4755, %v2981
      %v4879 = vadd.f32 %v4756, %v2982
      %v4880 = vadd.f32 %v4757, %v2983
      %v4881 = vadd.f32 %v4758, %v2981
      %v4882 = vadd.f32 %v4759, %v2982
      %v4883 = vadd.f32 %v4760, %v2983
      %v4884 = vadd.f32 %v4761, %v2981
      %v4885 = vadd.f32 %v4762, %v2982
      %v4886 = vadd.f32 %v4763, %v2983
      %v4887 = vadd.f32 %v4764, %v2981
      %v4888 = vadd.f32 %v4765, %v2982
      %v4889 = vadd.f32 %v4766, %v2983
      %v4890 = vadd.f32 %v4767, %v2981
      %v4891 = vadd.f32 %v4768, %v2982
      %v4892 = vadd.f32 %v4769, %v2983
      %v4893 = vadd.f32 %v4770, %v2981
      %v4894 = vadd.f32 %v4771, %v2982
      %v4895 = vadd.f32 %v4772, %v2983
      %v4896 = vadd.f32 %v4773, %v2981
      %v4897 = vadd.f32 %v4774, %v2982
      %v4898 = vadd.f32 %v4775, %v2983
      %v4899 = vadd.f32 %v4776, %v2981
      %v4900 = vadd.f32 %v4777, %v2982
      %v4901 = vadd.f32 %v4778, %v2983
      %v4902 = vadd.f32 %v4779, %v2981
      %v4903 = vadd.f32 %v4780, %v2982
      %v4904 = vadd.f32 %v4781, %v2983
      %v4905 = vadd.f32 %v4782, %v2981
      %v4906 = vadd.f32 %v4783, %v2982
      %v4907 = vadd.f32 %v4784, %v2983
      %v4908 = vmax.f32 %v4785, %v4786
      %v4909 = vsel %vm3111, %v4787, -inf
      %v4910 = vmax.f32 %v4908, %v4909
      %4911 = vmax.xlane.f32.xlu0 %v4910
      %v4912 = vpop.xlane.xlu0 %4911
      %v4913 = vmax.f32 %v4788, %v4789
      %v4914 = vsel %vm3111, %v4790, -inf
      %v4915 = vmax.f32 %v4913, %v4914
      %4916 = vmax.xlane.f32.xlu0 %v4915
      %v4917 = vpop.xlane.xlu0 %4916
      %v4918 = vmax.f32 %v4791, %v4792
      %v4919 = vsel %vm3111, %v4793, -inf
      %v4920 = vmax.f32 %v4918, %v4919
      %4921 = vmax.xlane.f32.xlu0 %v4920
      %v4922 = vpop.xlane.xlu0 %4921
      %v4923 = vmax.f32 %v4794, %v4795
      %v4924 = vsel %vm3111, %v4796, -inf
      %v4925 = vmax.f32 %v4923, %v4924
      %4926 = vmax.xlane.f32.xlu0 %v4925
      %v4927 = vpop.xlane.xlu0 %4926
      %v4928 = vmax.f32 %v4797, %v4798
      %v4929 = vsel %vm3111, %v4799, -inf
      %v4930 = vmax.f32 %v4928, %v4929
      %4931 = vmax.xlane.f32.xlu0 %v4930
      %v4932 = vpop.xlane.xlu0 %4931
      %v4933 = vmax.f32 %v4800, %v4801
      %v4934 = vsel %vm3111, %v4802, -inf
      %v4935 = vmax.f32 %v4933, %v4934
      %4936 = vmax.xlane.f32.xlu0 %v4935
      %v4937 = vpop.xlane.xlu0 %4936
      %v4938 = vmax.f32 %v4803, %v4804
      %v4939 = vsel %vm3111, %v4805, -inf
      %v4940 = vmax.f32 %v4938, %v4939
      %4941 = vmax.xlane.f32.xlu0 %v4940
      %v4942 = vpop.xlane.xlu0 %4941
      %v4943 = vmax.f32 %v4806, %v4807
      %v4944 = vsel %vm3111, %v4808, -inf
      %v4945 = vmax.f32 %v4943, %v4944
      %4946 = vmax.xlane.f32.xlu0 %v4945
      %v4947 = vpop.xlane.xlu0 %4946
      %v4948 = vmax.f32 %v4809, %v4810
      %v4949 = vsel %vm3111, %v4811, -inf
      %v4950 = vmax.f32 %v4948, %v4949
      %4951 = vmax.xlane.f32.xlu0 %v4950
      %v4952 = vpop.xlane.xlu0 %4951
      %v4953 = vmax.f32 %v4812, %v4813
      %v4954 = vsel %vm3111, %v4814, -inf
      %v4955 = vmax.f32 %v4953, %v4954
      %4956 = vmax.xlane.f32.xlu0 %v4955
      %v4957 = vpop.xlane.xlu0 %4956
      %v4958 = vmax.f32 %v4815, %v4816
      %v4959 = vsel %vm3111, %v4817, -inf
      %v4960 = vmax.f32 %v4958, %v4959
      %4961 = vmax.xlane.f32.xlu0 %v4960
      %v4962 = vpop.xlane.xlu0 %4961
      %v4963 = vmax.f32 %v4818, %v4819
      %v4964 = vsel %vm3111, %v4820, -inf
      %v4965 = vmax.f32 %v4963, %v4964
      %4966 = vmax.xlane.f32.xlu0 %v4965
      %v4967 = vpop.xlane.xlu0 %4966
      %v4968 = vmax.f32 %v4821, %v4822
      %v4969 = vsel %vm3111, %v4823, -inf
      %v4970 = vmax.f32 %v4968, %v4969
      %4971 = vmax.xlane.f32.xlu0 %v4970
      %v4972 = vpop.xlane.xlu0 %4971
      %v4973 = vmax.f32 %v4824, %v4825
      %v4974 = vsel %vm3111, %v4826, -inf
      %v4975 = vmax.f32 %v4973, %v4974
      %4976 = vmax.xlane.f32.xlu0 %v4975
      %v4977 = vpop.xlane.xlu0 %4976
      %v4978 = vmax.f32 %v4827, %v4828
      %v4979 = vsel %vm3111, %v4829, -inf
      %v4980 = vmax.f32 %v4978, %v4979
      %4981 = vmax.xlane.f32.xlu0 %v4980
      %v4982 = vpop.xlane.xlu0 %4981
      %v4983 = vmax.f32 %v4830, %v4831
      %v4984 = vsel %vm3111, %v4832, -inf
      %v4985 = vmax.f32 %v4983, %v4984
      %4986 = vmax.xlane.f32.xlu0 %v4985
      %v4987 = vpop.xlane.xlu0 %4986
      %v4988 = vmax.f32 %v4833, %v4834
      %v4989 = vsel %vm3111, %v4835, -inf
      %v4990 = vmax.f32 %v4988, %v4989
      %4991 = vmax.xlane.f32.xlu0 %v4990
      %v4992 = vpop.xlane.xlu0 %4991
      %v4993 = vmax.f32 %v4836, %v4837
      %v4994 = vsel %vm3111, %v4838, -inf
      %v4995 = vmax.f32 %v4993, %v4994
      %4996 = vmax.xlane.f32.xlu0 %v4995
      %v4997 = vpop.xlane.xlu0 %4996
      %v4998 = vmax.f32 %v4839, %v4840
      %v4999 = vsel %vm3111, %v4841, -inf
      %v5000 = vmax.f32 %v4998, %v4999
      %5001 = vmax.xlane.f32.xlu0 %v5000
      %v5002 = vpop.xlane.xlu0 %5001
      %v5003 = vmax.f32 %v4842, %v4843
      %v5004 = vsel %vm3111, %v4844, -inf
      %v5005 = vmax.f32 %v5003, %v5004
      %5006 = vmax.xlane.f32.xlu0 %v5005
      %v5007 = vpop.xlane.xlu0 %5006
      %v5008 = vmax.f32 %v4845, %v4846
      %v5009 = vsel %vm3111, %v4847, -inf
      %v5010 = vmax.f32 %v5008, %v5009
      %5011 = vmax.xlane.f32.xlu0 %v5010
      %v5012 = vpop.xlane.xlu0 %5011
      %v5013 = vmax.f32 %v4848, %v4849
      %v5014 = vsel %vm3111, %v4850, -inf
      %v5015 = vmax.f32 %v5013, %v5014
      %5016 = vmax.xlane.f32.xlu0 %v5015
      %v5017 = vpop.xlane.xlu0 %5016
      %v5018 = vmax.f32 %v4851, %v4852
      %v5019 = vsel %vm3111, %v4853, -inf
      %v5020 = vmax.f32 %v5018, %v5019
      %5021 = vmax.xlane.f32.xlu0 %v5020
      %v5022 = vpop.xlane.xlu0 %5021
      %v5023 = vmax.f32 %v4854, %v4855
      %v5024 = vsel %vm3111, %v4856, -inf
      %v5025 = vmax.f32 %v5023, %v5024
      %5026 = vmax.xlane.f32.xlu0 %v5025
      %v5027 = vpop.xlane.xlu0 %5026
      %v5028 = vmax.f32 %v4857, %v4858
      %v5029 = vsel %vm3111, %v4859, -inf
      %v5030 = vmax.f32 %v5028, %v5029
      %5031 = vmax.xlane.f32.xlu0 %v5030
      %v5032 = vpop.xlane.xlu0 %5031
      %v5033 = vmax.f32 %v4860, %v4861
      %v5034 = vsel %vm3111, %v4862, -inf
      %v5035 = vmax.f32 %v5033, %v5034
      %5036 = vmax.xlane.f32.xlu0 %v5035
      %v5037 = vpop.xlane.xlu0 %5036
      %v5038 = vmax.f32 %v4863, %v4864
      %v5039 = vsel %vm3111, %v4865, -inf
      %v5040 = vmax.f32 %v5038, %v5039
      %5041 = vmax.xlane.f32.xlu0 %v5040
      %v5042 = vpop.xlane.xlu0 %5041
      %v5043 = vmax.f32 %v4866, %v4867
      %v5044 = vsel %vm3111, %v4868, -inf
      %v5045 = vmax.f32 %v5043, %v5044
      %5046 = vmax.xlane.f32.xlu0 %v5045
      %v5047 = vpop.xlane.xlu0 %5046
      %v5048 = vmax.f32 %v4869, %v4870
      %v5049 = vsel %vm3111, %v4871, -inf
      %v5050 = vmax.f32 %v5048, %v5049
      %5051 = vmax.xlane.f32.xlu0 %v5050
      %v5052 = vpop.xlane.xlu0 %5051
      %v5053 = vmax.f32 %v4872, %v4873
      %v5054 = vsel %vm3111, %v4874, -inf
      %v5055 = vmax.f32 %v5053, %v5054
      %5056 = vmax.xlane.f32.xlu0 %v5055
      %v5057 = vpop.xlane.xlu0 %5056
      %v5058 = vmax.f32 %v4875, %v4876
      %v5059 = vsel %vm3111, %v4877, -inf
      %v5060 = vmax.f32 %v5058, %v5059
      %5061 = vmax.xlane.f32.xlu0 %v5060
      %v5062 = vpop.xlane.xlu0 %5061
      %v5063 = vmax.f32 %v4878, %v4879
      %v5064 = vsel %vm3111, %v4880, -inf
      %v5065 = vmax.f32 %v5063, %v5064
      %5066 = vmax.xlane.f32.xlu0 %v5065
      %v5067 = vpop.xlane.xlu0 %5066
      %v5068 = vmax.f32 %v4881, %v4882
      %v5069 = vsel %vm3111, %v4883, -inf
      %v5070 = vmax.f32 %v5068, %v5069
      %5071 = vmax.xlane.f32.xlu0 %v5070
      %v5072 = vpop.xlane.xlu0 %5071
      %v5073 = vmax.f32 %v4884, %v4885
      %v5074 = vsel %vm3111, %v4886, -inf
      %v5075 = vmax.f32 %v5073, %v5074
      %5076 = vmax.xlane.f32.xlu0 %v5075
      %v5077 = vpop.xlane.xlu0 %5076
      %v5078 = vmax.f32 %v4887, %v4888
      %v5079 = vsel %vm3111, %v4889, -inf
      %v5080 = vmax.f32 %v5078, %v5079
      %5081 = vmax.xlane.f32.xlu0 %v5080
      %v5082 = vpop.xlane.xlu0 %5081
      %v5083 = vmax.f32 %v4890, %v4891
      %v5084 = vsel %vm3111, %v4892, -inf
      %v5085 = vmax.f32 %v5083, %v5084
      %5086 = vmax.xlane.f32.xlu0 %v5085
      %v5087 = vpop.xlane.xlu0 %5086
      %v5088 = vmax.f32 %v4893, %v4894
      %v5089 = vsel %vm3111, %v4895, -inf
      %v5090 = vmax.f32 %v5088, %v5089
      %5091 = vmax.xlane.f32.xlu0 %v5090
      %v5092 = vpop.xlane.xlu0 %5091
      %v5093 = vmax.f32 %v4896, %v4897
      %v5094 = vsel %vm3111, %v4898, -inf
      %v5095 = vmax.f32 %v5093, %v5094
      %5096 = vmax.xlane.f32.xlu0 %v5095
      %v5097 = vpop.xlane.xlu0 %5096
      %v5098 = vmax.f32 %v4899, %v4900
      %v5099 = vsel %vm3111, %v4901, -inf
      %v5100 = vmax.f32 %v5098, %v5099
      %5101 = vmax.xlane.f32.xlu0 %v5100
      %v5102 = vpop.xlane.xlu0 %5101
      %v5103 = vmax.f32 %v4902, %v4903
      %v5104 = vsel %vm3111, %v4904, -inf
      %v5105 = vmax.f32 %v5103, %v5104
      %5106 = vmax.xlane.f32.xlu0 %v5105
      %v5107 = vpop.xlane.xlu0 %5106
      %v5108 = vsel %vm745, %v4905, -inf
      %v5109 = vsel %vm745, %v4906, -inf
      %v5110 = vmax.f32 %v5108, %v5109
      %v5111 = vsel %vm1968, %v4907, -inf
      %v5112 = vmax.f32 %v5110, %v5111
      %5113 = vmax.xlane.f32.xlu0 %v5112
      %v5114 = vpop.xlane.xlu0 %5113
      %v5115 = vsub.f32 %v4785, %v4912
      %v5116 = vsub.f32 %v4786, %v4912
      %v5117 = vsub.f32 %v4787, %v4912
      %v5118 = vsub.f32 %v4788, %v4917
      %v5119 = vsub.f32 %v4789, %v4917
      %v5120 = vsub.f32 %v4790, %v4917
      %v5121 = vsub.f32 %v4791, %v4922
      %v5122 = vsub.f32 %v4792, %v4922
      %v5123 = vsub.f32 %v4793, %v4922
      %v5124 = vsub.f32 %v4794, %v4927
      %v5125 = vsub.f32 %v4795, %v4927
      %v5126 = vsub.f32 %v4796, %v4927
      %v5127 = vsub.f32 %v4797, %v4932
      %v5128 = vsub.f32 %v4798, %v4932
      %v5129 = vsub.f32 %v4799, %v4932
      %v5130 = vsub.f32 %v4800, %v4937
      %v5131 = vsub.f32 %v4801, %v4937
      %v5132 = vsub.f32 %v4802, %v4937
      %v5133 = vsub.f32 %v4803, %v4942
      %v5134 = vsub.f32 %v4804, %v4942
      %v5135 = vsub.f32 %v4805, %v4942
      %v5136 = vsub.f32 %v4806, %v4947
      %v5137 = vsub.f32 %v4807, %v4947
      %v5138 = vsub.f32 %v4808, %v4947
      %v5139 = vsub.f32 %v4809, %v4952
      %v5140 = vsub.f32 %v4810, %v4952
      %v5141 = vsub.f32 %v4811, %v4952
      %v5142 = vsub.f32 %v4812, %v4957
      %v5143 = vsub.f32 %v4813, %v4957
      %v5144 = vsub.f32 %v4814, %v4957
      %v5145 = vsub.f32 %v4815, %v4962
      %v5146 = vsub.f32 %v4816, %v4962
      %v5147 = vsub.f32 %v4817, %v4962
      %v5148 = vsub.f32 %v4818, %v4967
      %v5149 = vsub.f32 %v4819, %v4967
      %v5150 = vsub.f32 %v4820, %v4967
      %v5151 = vsub.f32 %v4821, %v4972
      %v5152 = vsub.f32 %v4822, %v4972
      %v5153 = vsub.f32 %v4823, %v4972
      %v5154 = vsub.f32 %v4824, %v4977
      %v5155 = vsub.f32 %v4825, %v4977
      %v5156 = vsub.f32 %v4826, %v4977
      %v5157 = vsub.f32 %v4827, %v4982
      %v5158 = vsub.f32 %v4828, %v4982
      %v5159 = vsub.f32 %v4829, %v4982
      %v5160 = vsub.f32 %v4830, %v4987
      %v5161 = vsub.f32 %v4831, %v4987
      %v5162 = vsub.f32 %v4832, %v4987
      %v5163 = vsub.f32 %v4833, %v4992
      %v5164 = vsub.f32 %v4834, %v4992
      %v5165 = vsub.f32 %v4835, %v4992
      %v5166 = vsub.f32 %v4836, %v4997
      %v5167 = vsub.f32 %v4837, %v4997
      %v5168 = vsub.f32 %v4838, %v4997
      %v5169 = vsub.f32 %v4839, %v5002
      %v5170 = vsub.f32 %v4840, %v5002
      %v5171 = vsub.f32 %v4841, %v5002
      %v5172 = vsub.f32 %v4842, %v5007
      %v5173 = vsub.f32 %v4843, %v5007
      %v5174 = vsub.f32 %v4844, %v5007
      %v5175 = vsub.f32 %v4845, %v5012
      %v5176 = vsub.f32 %v4846, %v5012
      %v5177 = vsub.f32 %v4847, %v5012
      %v5178 = vsub.f32 %v4848, %v5017
      %v5179 = vsub.f32 %v4849, %v5017
      %v5180 = vsub.f32 %v4850, %v5017
      %v5181 = vsub.f32 %v4851, %v5022
      %v5182 = vsub.f32 %v4852, %v5022
      %v5183 = vsub.f32 %v4853, %v5022
      %v5184 = vsub.f32 %v4854, %v5027
      %v5185 = vsub.f32 %v4855, %v5027
      %v5186 = vsub.f32 %v4856, %v5027
      %v5187 = vsub.f32 %v4857, %v5032
      %v5188 = vsub.f32 %v4858, %v5032
      %v5189 = vsub.f32 %v4859, %v5032
      %v5190 = vsub.f32 %v4860, %v5037
      %v5191 = vsub.f32 %v4861, %v5037
      %v5192 = vsub.f32 %v4862, %v5037
      %v5193 = vsub.f32 %v4863, %v5042
      %v5194 = vsub.f32 %v4864, %v5042
      %v5195 = vsub.f32 %v4865, %v5042
      %v5196 = vsub.f32 %v4866, %v5047
      %v5197 = vsub.f32 %v4867, %v5047
      %v5198 = vsub.f32 %v4868, %v5047
      %v5199 = vsub.f32 %v4869, %v5052
      %v5200 = vsub.f32 %v4870, %v5052
      %v5201 = vsub.f32 %v4871, %v5052
      %v5202 = vsub.f32 %v4872, %v5057
      %v5203 = vsub.f32 %v4873, %v5057
      %v5204 = vsub.f32 %v4874, %v5057
      %v5205 = vsub.f32 %v4875, %v5062
      %v5206 = vsub.f32 %v4876, %v5062
      %v5207 = vsub.f32 %v4877, %v5062
      %v5208 = vsub.f32 %v4878, %v5067
      %v5209 = vsub.f32 %v4879, %v5067
      %v5210 = vsub.f32 %v4880, %v5067
      %v5211 = vsub.f32 %v4881, %v5072
      %v5212 = vsub.f32 %v4882, %v5072
      %v5213 = vsub.f32 %v4883, %v5072
      %v5214 = vsub.f32 %v4884, %v5077
      %v5215 = vsub.f32 %v4885, %v5077
      %v5216 = vsub.f32 %v4886, %v5077
      %v5217 = vsub.f32 %v4887, %v5082
      %v5218 = vsub.f32 %v4888, %v5082
      %v5219 = vsub.f32 %v4889, %v5082
      %v5220 = vsub.f32 %v4890, %v5087
      %v5221 = vsub.f32 %v4891, %v5087
      %v5222 = vsub.f32 %v4892, %v5087
      %v5223 = vsub.f32 %v4893, %v5092
      %v5224 = vsub.f32 %v4894, %v5092
      %v5225 = vsub.f32 %v4895, %v5092
      %v5226 = vsub.f32 %v4896, %v5097
      %v5227 = vsub.f32 %v4897, %v5097
      %v5228 = vsub.f32 %v4898, %v5097
      %v5229 = vsub.f32 %v4899, %v5102
      %v5230 = vsub.f32 %v4900, %v5102
      %v5231 = vsub.f32 %v4901, %v5102
      %v5232 = vsub.f32 %v4902, %v5107
      %v5233 = vsub.f32 %v4903, %v5107
      %v5234 = vsub.f32 %v4904, %v5107
      %v5235 = vsub.f32 %v4905, %v5114
      %v5236 = vsub.f32 %v4906, %v5114
      %v5237 = vsub.f32 %v4907, %v5114
      %v5238 = vmul.f32 %v5115, 1.442695
      %v5239 = vpow.pop %v5238
      %v5240 = vmul.f32 %v5116, 1.442695
      %v5241 = vpow.pop %v5240
      %v5242 = vmul.f32 %v5117, 1.442695
      %v5243 = vpow.pop %v5242
      %v5244 = vmul.f32 %v5118, 1.442695
      %v5245 = vpow.pop %v5244
      %v5246 = vmul.f32 %v5119, 1.442695
      %v5247 = vpow.pop %v5246
      %v5248 = vmul.f32 %v5120, 1.442695
      %v5249 = vpow.pop %v5248
      %v5250 = vmul.f32 %v5121, 1.442695
      %v5251 = vpow.pop %v5250
      %v5252 = vmul.f32 %v5122, 1.442695
      %v5253 = vpow.pop %v5252
      %v5254 = vmul.f32 %v5123, 1.442695
      %v5255 = vpow.pop %v5254
      %v5256 = vmul.f32 %v5124, 1.442695
      %v5257 = vpow.pop %v5256
      %v5258 = vmul.f32 %v5125, 1.442695
      %v5259 = vpow.pop %v5258
      %v5260 = vmul.f32 %v5126, 1.442695
      %v5261 = vpow.pop %v5260
      %v5262 = vmul.f32 %v5127, 1.442695
      %v5263 = vpow.pop %v5262
      %v5264 = vmul.f32 %v5128, 1.442695
      %v5265 = vpow.pop %v5264
      %v5266 = vmul.f32 %v5129, 1.442695
      %v5267 = vpow.pop %v5266
      %v5268 = vmul.f32 %v5130, 1.442695
      %v5269 = vpow.pop %v5268
      %v5270 = vmul.f32 %v5131, 1.442695
      %v5271 = vpow.pop %v5270
      %v5272 = vmul.f32 %v5132, 1.442695
      %v5273 = vpow.pop %v5272
      %v5274 = vmul.f32 %v5133, 1.442695
      %v5275 = vpow.pop %v5274
      %v5276 = vmul.f32 %v5134, 1.442695
      %v5277 = vpow.pop %v5276
      %v5278 = vmul.f32 %v5135, 1.442695
      %v5279 = vpow.pop %v5278
      %v5280 = vmul.f32 %v5136, 1.442695
      %v5281 = vpow.pop %v5280
      %v5282 = vmul.f32 %v5137, 1.442695
      %v5283 = vpow.pop %v5282
      %v5284 = vmul.f32 %v5138, 1.442695
      %v5285 = vpow.pop %v5284
      %v5286 = vmul.f32 %v5139, 1.442695
      %v5287 = vpow.pop %v5286
      %v5288 = vmul.f32 %v5140, 1.442695
      %v5289 = vpow.pop %v5288
      %v5290 = vmul.f32 %v5141, 1.442695
      %v5291 = vpow.pop %v5290
      %v5292 = vmul.f32 %v5142, 1.442695
      %v5293 = vpow.pop %v5292
      %v5294 = vmul.f32 %v5143, 1.442695
      %v5295 = vpow.pop %v5294
      %v5296 = vmul.f32 %v5144, 1.442695
      %v5297 = vpow.pop %v5296
      %v5298 = vmul.f32 %v5145, 1.442695
      %v5299 = vpow.pop %v5298
      %v5300 = vmul.f32 %v5146, 1.442695
      %v5301 = vpow.pop %v5300
      %v5302 = vmul.f32 %v5147, 1.442695
      %v5303 = vpow.pop %v5302
      %v5304 = vmul.f32 %v5148, 1.442695
      %v5305 = vpow.pop %v5304
      %v5306 = vmul.f32 %v5149, 1.442695
      %v5307 = vpow.pop %v5306
      %v5308 = vmul.f32 %v5150, 1.442695
      %v5309 = vpow.pop %v5308
      %v5310 = vmul.f32 %v5151, 1.442695
      %v5311 = vpow.pop %v5310
      %v5312 = vmul.f32 %v5152, 1.442695
      %v5313 = vpow.pop %v5312
      %v5314 = vmul.f32 %v5153, 1.442695
      %v5315 = vpow.pop %v5314
      %v5316 = vmul.f32 %v5154, 1.442695
      %v5317 = vpow.pop %v5316
      %v5318 = vmul.f32 %v5155, 1.442695
      %v5319 = vpow.pop %v5318
      %v5320 = vmul.f32 %v5156, 1.442695
      %v5321 = vpow.pop %v5320
      %v5322 = vmul.f32 %v5157, 1.442695
      %v5323 = vpow.pop %v5322
      %v5324 = vmul.f32 %v5158, 1.442695
      %v5325 = vpow.pop %v5324
      %v5326 = vmul.f32 %v5159, 1.442695
      %v5327 = vpow.pop %v5326
      %v5328 = vmul.f32 %v5160, 1.442695
      %v5329 = vpow.pop %v5328
      %v5330 = vmul.f32 %v5161, 1.442695
      %v5331 = vpow.pop %v5330
      %v5332 = vmul.f32 %v5162, 1.442695
      %v5333 = vpow.pop %v5332
      %v5334 = vmul.f32 %v5163, 1.442695
      %v5335 = vpow.pop %v5334
      %v5336 = vmul.f32 %v5164, 1.442695
      %v5337 = vpow.pop %v5336
      %v5338 = vmul.f32 %v5165, 1.442695
      %v5339 = vpow.pop %v5338
      %v5340 = vmul.f32 %v5166, 1.442695
      %v5341 = vpow.pop %v5340
      %v5342 = vmul.f32 %v5167, 1.442695
      %v5343 = vpow.pop %v5342
      %v5344 = vmul.f32 %v5168, 1.442695
      %v5345 = vpow.pop %v5344
      %v5346 = vmul.f32 %v5169, 1.442695
      %v5347 = vpow.pop %v5346
      %v5348 = vmul.f32 %v5170, 1.442695
      %v5349 = vpow.pop %v5348
      %v5350 = vmul.f32 %v5171, 1.442695
      %v5351 = vpow.pop %v5350
      %v5352 = vmul.f32 %v5172, 1.442695
      %v5353 = vpow.pop %v5352
      %v5354 = vmul.f32 %v5173, 1.442695
      %v5355 = vpow.pop %v5354
      %v5356 = vmul.f32 %v5174, 1.442695
      %v5357 = vpow.pop %v5356
      %v5358 = vmul.f32 %v5175, 1.442695
      %v5359 = vpow.pop %v5358
      %v5360 = vmul.f32 %v5176, 1.442695
      %v5361 = vpow.pop %v5360
      %v5362 = vmul.f32 %v5177, 1.442695
      %v5363 = vpow.pop %v5362
      %v5364 = vmul.f32 %v5178, 1.442695
      %v5365 = vpow.pop %v5364
      %v5366 = vmul.f32 %v5179, 1.442695
      %v5367 = vpow.pop %v5366
      %v5368 = vmul.f32 %v5180, 1.442695
      %v5369 = vpow.pop %v5368
      %v5370 = vmul.f32 %v5181, 1.442695
      %v5371 = vpow.pop %v5370
      %v5372 = vmul.f32 %v5182, 1.442695
      %v5373 = vpow.pop %v5372
      %v5374 = vmul.f32 %v5183, 1.442695
      %v5375 = vpow.pop %v5374
      %v5376 = vmul.f32 %v5184, 1.442695
      %v5377 = vpow.pop %v5376
      %v5378 = vmul.f32 %v5185, 1.442695
      %v5379 = vpow.pop %v5378
      %v5380 = vmul.f32 %v5186, 1.442695
      %v5381 = vpow.pop %v5380
      %v5382 = vmul.f32 %v5187, 1.442695
      %v5383 = vpow.pop %v5382
      %v5384 = vmul.f32 %v5188, 1.442695
      %v5385 = vpow.pop %v5384
      %v5386 = vmul.f32 %v5189, 1.442695
      %v5387 = vpow.pop %v5386
      %v5388 = vmul.f32 %v5190, 1.442695
      %v5389 = vpow.pop %v5388
      %v5390 = vmul.f32 %v5191, 1.442695
      %v5391 = vpow.pop %v5390
      %v5392 = vmul.f32 %v5192, 1.442695
      %v5393 = vpow.pop %v5392
      %v5394 = vmul.f32 %v5193, 1.442695
      %v5395 = vpow.pop %v5394
      %v5396 = vmul.f32 %v5194, 1.442695
      %v5397 = vpow.pop %v5396
      %v5398 = vmul.f32 %v5195, 1.442695
      %v5399 = vpow.pop %v5398
      %v5400 = vmul.f32 %v5196, 1.442695
      %v5401 = vpow.pop %v5400
      %v5402 = vmul.f32 %v5197, 1.442695
      %v5403 = vpow.pop %v5402
      %v5404 = vmul.f32 %v5198, 1.442695
      %v5405 = vpow.pop %v5404
      %v5406 = vmul.f32 %v5199, 1.442695
      %v5407 = vpow.pop %v5406
      %v5408 = vmul.f32 %v5200, 1.442695
      %v5409 = vpow.pop %v5408
      %v5410 = vmul.f32 %v5201, 1.442695
      %v5411 = vpow.pop %v5410
      %v5412 = vmul.f32 %v5202, 1.442695
      %v5413 = vpow.pop %v5412
      %v5414 = vmul.f32 %v5203, 1.442695
      %v5415 = vpow.pop %v5414
      %v5416 = vmul.f32 %v5204, 1.442695
      %v5417 = vpow.pop %v5416
      %v5418 = vmul.f32 %v5205, 1.442695
      %v5419 = vpow.pop %v5418
      %v5420 = vmul.f32 %v5206, 1.442695
      %v5421 = vpow.pop %v5420
      %v5422 = vmul.f32 %v5207, 1.442695
      %v5423 = vpow.pop %v5422
      %v5424 = vmul.f32 %v5208, 1.442695
      %v5425 = vpow.pop %v5424
      %v5426 = vmul.f32 %v5209, 1.442695
      %v5427 = vpow.pop %v5426
      %v5428 = vmul.f32 %v5210, 1.442695
      %v5429 = vpow.pop %v5428
      %v5430 = vmul.f32 %v5211, 1.442695
      %v5431 = vpow.pop %v5430
      %v5432 = vmul.f32 %v5212, 1.442695
      %v5433 = vpow.pop %v5432
      %v5434 = vmul.f32 %v5213, 1.442695
      %v5435 = vpow.pop %v5434
      %v5436 = vmul.f32 %v5214, 1.442695
      %v5437 = vpow.pop %v5436
      %v5438 = vmul.f32 %v5215, 1.442695
      %v5439 = vpow.pop %v5438
      %v5440 = vmul.f32 %v5216, 1.442695
      %v5441 = vpow.pop %v5440
      %v5442 = vmul.f32 %v5217, 1.442695
      %v5443 = vpow.pop %v5442
      %v5444 = vmul.f32 %v5218, 1.442695
      %v5445 = vpow.pop %v5444
      %v5446 = vmul.f32 %v5219, 1.442695
      %v5447 = vpow.pop %v5446
      %v5448 = vmul.f32 %v5220, 1.442695
      %v5449 = vpow.pop %v5448
      %v5450 = vmul.f32 %v5221, 1.442695
      %v5451 = vpow.pop %v5450
      %v5452 = vmul.f32 %v5222, 1.442695
      %v5453 = vpow.pop %v5452
      %v5454 = vmul.f32 %v5223, 1.442695
      %v5455 = vpow.pop %v5454
      %v5456 = vmul.f32 %v5224, 1.442695
      %v5457 = vpow.pop %v5456
      %v5458 = vmul.f32 %v5225, 1.442695
      %v5459 = vpow.pop %v5458
      %v5460 = vmul.f32 %v5226, 1.442695
      %v5461 = vpow.pop %v5460
      %v5462 = vmul.f32 %v5227, 1.442695
      %v5463 = vpow.pop %v5462
      %v5464 = vmul.f32 %v5228, 1.442695
      %v5465 = vpow.pop %v5464
      %v5466 = vmul.f32 %v5229, 1.442695
      %v5467 = vpow.pop %v5466
      %v5468 = vmul.f32 %v5230, 1.442695
      %v5469 = vpow.pop %v5468
      %v5470 = vmul.f32 %v5231, 1.442695
      %v5471 = vpow.pop %v5470
      %v5472 = vmul.f32 %v5232, 1.442695
      %v5473 = vpow.pop %v5472
      %v5474 = vmul.f32 %v5233, 1.442695
      %v5475 = vpow.pop %v5474
      %v5476 = vmul.f32 %v5234, 1.442695
      %v5477 = vpow.pop %v5476
      %v5478 = vmul.f32 %v5235, 1.442695
      %v5479 = vpow.pop %v5478
      %v5480 = vmul.f32 %v5236, 1.442695
      %v5481 = vpow.pop %v5480
      %v5482 = vmul.f32 %v5237, 1.442695
      %v5483 = vpow.pop %v5482
      %v5484 = vrot.slane %v2150, 4
      %v5485 = vrot.slane %v2176, 4
      %v5486 = vrot.slane %v2202, 4
      %v5490 = vsel %vm745, %v5484, 1.0
      %v5491 = vsel %vm745, %v5485, 1.0
      %v5492 = vsel %vm745, %v5486, 1.0
      %v5494 = vsel %vm3111, %v5492, 0
      %v5497 = vsel %vm3111, %v5243, 0
      %v5500 = vsel %vm3111, %v5249, 0
      %v5503 = vsel %vm3111, %v5255, 0
      %v5506 = vsel %vm3111, %v5261, 0
      %v5509 = vsel %vm3111, %v5267, 0
      %v5512 = vsel %vm3111, %v5273, 0
      %v5515 = vsel %vm3111, %v5279, 0
      %v5518 = vsel %vm3111, %v5285, 0
      %v5521 = vsel %vm3111, %v5291, 0
      %v5524 = vsel %vm3111, %v5297, 0
      %v5527 = vsel %vm3111, %v5303, 0
      %v5530 = vsel %vm3111, %v5309, 0
      %v5533 = vsel %vm3111, %v5315, 0
      %v5536 = vsel %vm3111, %v5321, 0
      %v5539 = vsel %vm3111, %v5327, 0
      %v5542 = vsel %vm3111, %v5333, 0
      %v5545 = vsel %vm3111, %v5339, 0
      %v5548 = vsel %vm3111, %v5345, 0
      %v5551 = vsel %vm3111, %v5351, 0
      %v5554 = vsel %vm3111, %v5357, 0
      %v5557 = vsel %vm3111, %v5363, 0
      %v5560 = vsel %vm3111, %v5369, 0
      %v5563 = vsel %vm3111, %v5375, 0
      %v5566 = vsel %vm3111, %v5381, 0
      %v5569 = vsel %vm3111, %v5387, 0
      %v5572 = vsel %vm3111, %v5393, 0
      %v5575 = vsel %vm3111, %v5399, 0
      %v5578 = vsel %vm3111, %v5405, 0
      %v5581 = vsel %vm3111, %v5411, 0
      %v5584 = vsel %vm3111, %v5417, 0
      %v5587 = vsel %vm3111, %v5423, 0
      %v5590 = vsel %vm3111, %v5429, 0
      %v5593 = vsel %vm3111, %v5435, 0
      %v5596 = vsel %vm3111, %v5441, 0
      %v5599 = vsel %vm3111, %v5447, 0
      %v5602 = vsel %vm3111, %v5453, 0
      %v5605 = vsel %vm3111, %v5459, 0
      %v5608 = vsel %vm3111, %v5465, 0
      %v5611 = vsel %vm3111, %v5471, 0
      %v5614 = vsel %vm3111, %v5477, 0
      %v5617 = vsel %vm3111, %v5483, 0
      %5619 = vmatpush.xpose.msra.mxu0 %v5329
      %5620 = vmatpush.xpose.msra.mxu0 %v5323
      %5621 = vmatpush.xpose.msra.mxu0 %v5317
      %5622 = vmatpush.xpose.msra.mxu0 %v5311
      %5623 = vmatpush.xpose.msra.mxu0 %v5305
      %5624 = vmatpush.xpose.msra.mxu0 %v5299
      %5625 = vmatpush.xpose.msra.mxu0 %v5293
      %5626 = vmatpush.xpose.msra.mxu0 %v5287
      %5627 = vmatpush.xpose.msra.mxu0 %v5281
      %5628 = vmatpush.xpose.msra.mxu0 %v5275
      %5629 = vmatpush.xpose.msra.mxu0 %v5269
      %5630 = vmatpush.xpose.msra.mxu0 %v5263
      %5631 = vmatpush.xpose.msra.mxu0 %v5257
      %5632 = vmatpush.xpose.msra.mxu0 %v5251
      %5633 = vmatpush.xpose.msra.mxu0 %v5245
      %5634 = vmatpush.xpose.msra.mxu0 %v5239
      %5635 = vmatmul.f32.gmra.mxu0 %v5490
      %v5636 = vpop.f32.mrf.mxu0
      %v5637 = vadd.f32 0.0, %v5636
      %5638 = vdwg.mxu0
      %5639 = vmatpush.xpose.msra.mxu0 %v5331
      %5640 = vmatpush.xpose.msra.mxu0 %v5325
      %5641 = vmatpush.xpose.msra.mxu0 %v5319
      %5642 = vmatpush.xpose.msra.mxu0 %v5313
      %5643 = vmatpush.xpose.msra.mxu0 %v5307
      %5644 = vmatpush.xpose.msra.mxu0 %v5301
      %5645 = vmatpush.xpose.msra.mxu0 %v5295
      %5646 = vmatpush.xpose.msra.mxu0 %v5289
      %5647 = vmatpush.xpose.msra.mxu0 %v5283
      %5648 = vmatpush.xpose.msra.mxu0 %v5277
      %5649 = vmatpush.xpose.msra.mxu0 %v5271
      %5650 = vmatpush.xpose.msra.mxu0 %v5265
      %5651 = vmatpush.xpose.msra.mxu0 %v5259
      %5652 = vmatpush.xpose.msra.mxu0 %v5253
      %5653 = vmatpush.xpose.msra.mxu0 %v5247
      %5654 = vmatpush.xpose.msra.mxu0 %v5241
      %5655 = vmatmul.f32.gmra.mxu0 %v5491
      %v5656 = vpop.f32.mrf.mxu0
      %v5657 = vadd.f32 %v5637, %v5656
      %5658 = vdwg.mxu0
      %5659 = vmatpush.xpose.msra.mxu0 %v5542
      %5660 = vmatpush.xpose.msra.mxu0 %v5539
      %5661 = vmatpush.xpose.msra.mxu0 %v5536
      %5662 = vmatpush.xpose.msra.mxu0 %v5533
      %5663 = vmatpush.xpose.msra.mxu0 %v5530
      %5664 = vmatpush.xpose.msra.mxu0 %v5527
      %5665 = vmatpush.xpose.msra.mxu0 %v5524
      %5666 = vmatpush.xpose.msra.mxu0 %v5521
      %5667 = vmatpush.xpose.msra.mxu0 %v5518
      %5668 = vmatpush.xpose.msra.mxu0 %v5515
      %5669 = vmatpush.xpose.msra.mxu0 %v5512
      %5670 = vmatpush.xpose.msra.mxu0 %v5509
      %5671 = vmatpush.xpose.msra.mxu0 %v5506
      %5672 = vmatpush.xpose.msra.mxu0 %v5503
      %5673 = vmatpush.xpose.msra.mxu0 %v5500
      %5674 = vmatpush.xpose.msra.mxu0 %v5497
      %5675 = vmatmul.f32.gmra.mxu0 %v5494
      %v5676 = vpop.f32.mrf.mxu0
      %v5677 = vadd.f32 %v5657, %v5676
      %5678 = vdwg.mxu0
      %5679 = vmatpush.xpose.msra.mxu0 %v5425
      %5680 = vmatpush.xpose.msra.mxu0 %v5419
      %5681 = vmatpush.xpose.msra.mxu0 %v5413
      %5682 = vmatpush.xpose.msra.mxu0 %v5407
      %5683 = vmatpush.xpose.msra.mxu0 %v5401
      %5684 = vmatpush.xpose.msra.mxu0 %v5395
      %5685 = vmatpush.xpose.msra.mxu0 %v5389
      %5686 = vmatpush.xpose.msra.mxu0 %v5383
      %5687 = vmatpush.xpose.msra.mxu0 %v5377
      %5688 = vmatpush.xpose.msra.mxu0 %v5371
      %5689 = vmatpush.xpose.msra.mxu0 %v5365
      %5690 = vmatpush.xpose.msra.mxu0 %v5359
      %5691 = vmatpush.xpose.msra.mxu0 %v5353
      %5692 = vmatpush.xpose.msra.mxu0 %v5347
      %5693 = vmatpush.xpose.msra.mxu0 %v5341
      %5694 = vmatpush.xpose.msra.mxu0 %v5335
      %5695 = vmatmul.f32.gmra.mxu0 %v5490
      %v5696 = vpop.f32.mrf.mxu0
      %v5697 = vadd.f32 0.0, %v5696
      %5698 = vdwg.mxu0
      %5699 = vmatpush.xpose.msra.mxu0 %v5427
      %5700 = vmatpush.xpose.msra.mxu0 %v5421
      %5701 = vmatpush.xpose.msra.mxu0 %v5415
      %5702 = vmatpush.xpose.msra.mxu0 %v5409
      %5703 = vmatpush.xpose.msra.mxu0 %v5403
      %5704 = vmatpush.xpose.msra.mxu0 %v5397
      %5705 = vmatpush.xpose.msra.mxu0 %v5391
      %5706 = vmatpush.xpose.msra.mxu0 %v5385
      %5707 = vmatpush.xpose.msra.mxu0 %v5379
      %5708 = vmatpush.xpose.msra.mxu0 %v5373
      %5709 = vmatpush.xpose.msra.mxu0 %v5367
      %5710 = vmatpush.xpose.msra.mxu0 %v5361
      %5711 = vmatpush.xpose.msra.mxu0 %v5355
      %5712 = vmatpush.xpose.msra.mxu0 %v5349
      %5713 = vmatpush.xpose.msra.mxu0 %v5343
      %5714 = vmatpush.xpose.msra.mxu0 %v5337
      %5715 = vmatmul.f32.gmra.mxu0 %v5491
      %v5716 = vpop.f32.mrf.mxu0
      %v5717 = vadd.f32 %v5697, %v5716
      %5718 = vdwg.mxu0
      %5719 = vmatpush.xpose.msra.mxu0 %v5590
      %5720 = vmatpush.xpose.msra.mxu0 %v5587
      %5721 = vmatpush.xpose.msra.mxu0 %v5584
      %5722 = vmatpush.xpose.msra.mxu0 %v5581
      %5723 = vmatpush.xpose.msra.mxu0 %v5578
      %5724 = vmatpush.xpose.msra.mxu0 %v5575
      %5725 = vmatpush.xpose.msra.mxu0 %v5572
      %5726 = vmatpush.xpose.msra.mxu0 %v5569
      %5727 = vmatpush.xpose.msra.mxu0 %v5566
      %5728 = vmatpush.xpose.msra.mxu0 %v5563
      %5729 = vmatpush.xpose.msra.mxu0 %v5560
      %5730 = vmatpush.xpose.msra.mxu0 %v5557
      %5731 = vmatpush.xpose.msra.mxu0 %v5554
      %5732 = vmatpush.xpose.msra.mxu0 %v5551
      %5733 = vmatpush.xpose.msra.mxu0 %v5548
      %5734 = vmatpush.xpose.msra.mxu0 %v5545
      %5735 = vmatmul.f32.gmra.mxu0 %v5494
      %v5736 = vpop.f32.mrf.mxu0
      %v5737 = vadd.f32 %v5717, %v5736
      %5738 = vdwg.mxu0
      %5739 = vmatpush.xpose.msra.mxu0 0.0
      %5740 = vmatpush.xpose.msra.mxu0 0.0
      %5741 = vmatpush.xpose.msra.mxu0 0.0
      %5742 = vmatpush.xpose.msra.mxu0 0.0
      %5743 = vmatpush.xpose.msra.mxu0 0.0
      %5744 = vmatpush.xpose.msra.mxu0 0.0
      %5745 = vmatpush.xpose.msra.mxu0 0.0
      %5746 = vmatpush.xpose.msra.mxu0 %v5479
      %5747 = vmatpush.xpose.msra.mxu0 %v5473
      %5748 = vmatpush.xpose.msra.mxu0 %v5467
      %5749 = vmatpush.xpose.msra.mxu0 %v5461
      %5750 = vmatpush.xpose.msra.mxu0 %v5455
      %5751 = vmatpush.xpose.msra.mxu0 %v5449
      %5752 = vmatpush.xpose.msra.mxu0 %v5443
      %5753 = vmatpush.xpose.msra.mxu0 %v5437
      %5754 = vmatpush.xpose.msra.mxu0 %v5431
      %5755 = vmatmul.f32.gmra.mxu0 %v5490
      %v5756 = vpop.f32.mrf.mxu0
      %v5757 = vadd.f32 0.0, %v5756
      %5758 = vdwg.mxu0
      %5759 = vmatpush.xpose.msra.mxu0 0.0
      %5760 = vmatpush.xpose.msra.mxu0 0.0
      %5761 = vmatpush.xpose.msra.mxu0 0.0
      %5762 = vmatpush.xpose.msra.mxu0 0.0
      %5763 = vmatpush.xpose.msra.mxu0 0.0
      %5764 = vmatpush.xpose.msra.mxu0 0.0
      %5765 = vmatpush.xpose.msra.mxu0 0.0
      %5766 = vmatpush.xpose.msra.mxu0 %v5481
      %5767 = vmatpush.xpose.msra.mxu0 %v5475
      %5768 = vmatpush.xpose.msra.mxu0 %v5469
      %5769 = vmatpush.xpose.msra.mxu0 %v5463
      %5770 = vmatpush.xpose.msra.mxu0 %v5457
      %5771 = vmatpush.xpose.msra.mxu0 %v5451
      %5772 = vmatpush.xpose.msra.mxu0 %v5445
      %5773 = vmatpush.xpose.msra.mxu0 %v5439
      %5774 = vmatpush.xpose.msra.mxu0 %v5433
      %5775 = vmatmul.f32.gmra.mxu0 %v5491
      %v5776 = vpop.f32.mrf.mxu0
      %v5777 = vadd.f32 %v5757, %v5776
      %5778 = vdwg.mxu0
      %5779 = vmatpush.xpose.msra.mxu0 0.0
      %5780 = vmatpush.xpose.msra.mxu0 0.0
      %5781 = vmatpush.xpose.msra.mxu0 0.0
      %5782 = vmatpush.xpose.msra.mxu0 0.0
      %5783 = vmatpush.xpose.msra.mxu0 0.0
      %5784 = vmatpush.xpose.msra.mxu0 0.0
      %5785 = vmatpush.xpose.msra.mxu0 0.0
      %5786 = vmatpush.xpose.msra.mxu0 %v5617
      %5787 = vmatpush.xpose.msra.mxu0 %v5614
      %5788 = vmatpush.xpose.msra.mxu0 %v5611
      %5789 = vmatpush.xpose.msra.mxu0 %v5608
      %5790 = vmatpush.xpose.msra.mxu0 %v5605
      %5791 = vmatpush.xpose.msra.mxu0 %v5602
      %5792 = vmatpush.xpose.msra.mxu0 %v5599
      %5793 = vmatpush.xpose.msra.mxu0 %v5596
      %5794 = vmatpush.xpose.msra.mxu0 %v5593
      %5795 = vmatmul.f32.gmra.mxu0 %v5494
      %v5796 = vpop.f32.mrf.mxu0
      %v5797 = vadd.f32 %v5777, %v5796
      %5798 = vdwg.mxu0
      %v5799 = vrcp.pop %v5677
      %v5800 = vrcp.pop %v5737
      %v5801 = vrcp.pop %v5797
      %v5802 = vperm.slane %v5799, 4
      %v5803 = vperm.slane %v5800, 4
      %v5804 = vperm.slane %v5801, 4
      %v5805 = vmul.f32 %v5677, %v5802
      %v5806 = vmul.f32 %v5737, %v5803
      %v5807 = vmul.f32 %v5797, %v5804
      %v5811 = vrot.slane %v5805, 4
      %v5812 = vrot.slane %v5806, 4
      %v5813 = vrot.slane %v5807, 4
      %v5817 = vsel %vm745, %v4002, %v5811
      %v5818 = vsel %vm745, %v4003, %v5812
      %v5819 = vsel %vm745, %v4004, %v5813
      %v5820 = vld [vmem:[%s21] sm:$0xff]
      %v5821 = vld [vmem:[%s22] sm:$0xff]
      %5823 = vset.pattern.permute.xlu0 0
      %5824 = vperm.xlu0 %5823, %v5821
      %v5825 = vpop.permute.xlu0 %5824
      %v5828 = vsel %vm1554, %v5820, 0
      %5830 = vmatpush.msra.mxu0 0.0
      %5831 = vmatpush.msra.mxu0 0.0
      %5832 = vmatpush.msra.mxu0 0.0
      %5833 = vmatpush.msra.mxu0 0.0
      %5834 = vmatpush.msra.mxu0 0.0
      %5835 = vmatpush.msra.mxu0 0.0
      %5836 = vmatpush.msra.mxu0 0.0
      %5837 = vmatpush.msra.mxu0 0.0
      %5838 = vmatpush.msra.mxu0 0.0
      %5839 = vmatpush.msra.mxu0 0.0
      %5840 = vmatpush.msra.mxu0 0.0
      %5841 = vmatpush.msra.mxu0 0.0
      %5842 = vmatpush.msra.mxu0 0.0
      %5843 = vmatpush.msra.mxu0 0.0
      %5844 = vmatpush.msra.mxu0 0.0
      %5845 = vmatpush.msra.mxu0 %v5817
      %5846 = vmatmul.f32.gmra.mxu0 %v5828
      %v5847 = vpop.f32.mrf.mxu0
      %v5848 = vadd.f32 %v5825, %v5847
      %5849 = vdwg.mxu0
      %5850 = vmatpush.msra.mxu0 0.0
      %5851 = vmatpush.msra.mxu0 0.0
      %5852 = vmatpush.msra.mxu0 0.0
      %5853 = vmatpush.msra.mxu0 0.0
      %5854 = vmatpush.msra.mxu0 0.0
      %5855 = vmatpush.msra.mxu0 0.0
      %5856 = vmatpush.msra.mxu0 0.0
      %5857 = vmatpush.msra.mxu0 0.0
      %5858 = vmatpush.msra.mxu0 0.0
      %5859 = vmatpush.msra.mxu0 0.0
      %5860 = vmatpush.msra.mxu0 0.0
      %5861 = vmatpush.msra.mxu0 0.0
      %5862 = vmatpush.msra.mxu0 0.0
      %5863 = vmatpush.msra.mxu0 0.0
      %5864 = vmatpush.msra.mxu0 0.0
      %5865 = vmatpush.msra.mxu0 %v5818
      %5866 = vmatmul.f32.gmra.mxu0 %v5828
      %v5867 = vpop.f32.mrf.mxu0
      %v5868 = vadd.f32 %v5825, %v5867
      %5869 = vdwg.mxu0
      %5870 = vmatpush.msra.mxu0 0.0
      %5871 = vmatpush.msra.mxu0 0.0
      %5872 = vmatpush.msra.mxu0 0.0
      %5873 = vmatpush.msra.mxu0 0.0
      %5874 = vmatpush.msra.mxu0 0.0
      %5875 = vmatpush.msra.mxu0 0.0
      %5876 = vmatpush.msra.mxu0 0.0
      %5877 = vmatpush.msra.mxu0 0.0
      %5878 = vmatpush.msra.mxu0 0.0
      %5879 = vmatpush.msra.mxu0 0.0
      %5880 = vmatpush.msra.mxu0 0.0
      %5881 = vmatpush.msra.mxu0 0.0
      %5882 = vmatpush.msra.mxu0 0.0
      %5883 = vmatpush.msra.mxu0 0.0
      %5884 = vmatpush.msra.mxu0 0.0
      %5885 = vmatpush.msra.mxu0 %v5819
      %5886 = vmatmul.f32.gmra.mxu0 %v5828
      %v5887 = vpop.f32.mrf.mxu0
      %v5888 = vadd.f32 %v5825, %v5887
      %5889 = vdwg.mxu0
      %v5890 = vadd.f32 %v5848, %v1950
      %v5891 = vadd.f32 %v5868, %v1951
      %v5892 = vadd.f32 %v5888, %v1952
      %5893 = vst [vmem:[%s730] sm:$0xff] %v5890
      %5894 = vst [vmem:[%s730 + $0x8] sm:$0xff] %v5891
      %5895 = vst.msk [vmem:[%s730 + $0x10] sm:$0xff] %vm3111, %v5892
      %p5896 = scmp.lt.s32.totalorder %s34, 1
      %s5897 = scalar_select %p5896, %s34, 1
      %s5898 = smul.addr %s5897, 3
      %s5899 = smul.addr %s5898, 8
      %s5900 = scalar_lea.vmem %s23, %s5899
      // Predicated region
      $region113: #{unet_block_forward.1} parent=111 // pred_check
        %p5901 = pneg %p545
      $region114: #{unet_block_forward.1} parent=111 // pred_check_branch
        %5903 = sbr.rel (%p5901) target = $region116
      $region115: #{unet_block_forward.1} parent=111 // pred_region
        _
      $region116: #{unet_block_forward.1} parent=111 // pred_fallthru
        _
    $region112: #{unet_block_forward.1} parent=5 // pred_fallthru
      _
    %p5904 = scmp.le.s32.totalorder 2, %s29
    // Predicated region
    $region117: #{unet_block_forward.1} parent=5 // pred_check
      %p5905 = pneg %p5904
    $region118: #{unet_block_forward.1} parent=5 // pred_check_branch
      %5907 = sbr.rel (%p5905) target = $region120
    $region119: #{unet_block_forward.1} parent=5 // pred_region
      %s5908 = ssub.s32 %s29, 2
      // Predicated region
      $region121: #{unet_block_forward.1} parent=119 // pred_check
        %p5909 = pneg %p551
      $region122: #{unet_block_forward.1} parent=119 // pred_check_branch
        %5911 = sbr.rel (%p5909) target = $region124
      $region123: #{unet_block_forward.1} parent=119 // pred_region
        %p5912 = scmp.lt.s32.totalorder %s35, 1
        %s5913 = scalar_select %p5912, %s35, 1
        %s5914 = smul.addr %s5913, 3
        %s5915 = smul.addr %s5914, 8
        %s5916 = scalar_lea.vmem %s23, %s5915
      $region124: #{unet_block_forward.1} parent=119 // pred_fallthru
        _
    $region120: #{unet_block_forward.1} parent=5 // pred_fallthru
      _
  $region6: #{unet_block_forward.1} parent=0 // loop_footer
    %s33 = sadd.s32 1, %s29
  $region7: #{unet_block_forward.1} parent=0 // loop_footer_branch
    %28 = sbr.rel target = $region3
  $region8: #{unet_block_forward.1} parent=0 // loop_exit
    _

</llo_original>
